<compile_context>
chip_gen: v6e
topology: v6e:2x2x1
jax: 0.10.0
libtpu: 0.0.40
codegen_flags: <defaults>
</compile_context>

<pallas_src>
import jax
import jax.numpy as jnp
from jax.experimental import pallas as pl
from jax.experimental.pallas import tpu as pltpu

EPS = 1e-3
_HIGHEST = jax.lax.Precision.HIGHEST


def _fused_kernel(x37_ref, w1_ref, b1_ref, x34_ref, w2_ref, gamma_ref, beta_ref,
                  out_ref):
    # --- SE branch (conv2d12 + Hardsigmoid) on VPU/XLU, not MXU ---------------
    # s[0, j] = sum_c x37[c, 0] * w1[c, j] + b1[0, j]
    s = jnp.sum(x37_ref[...] * w1_ref[...], axis=0, keepdims=True) + b1_ref[...]
    # Hardsigmoid: relu6(x + 3) / 6 == clip(x/6 + 0.5, 0, 1)
    scale = jnp.clip(s * (1.0 / 6.0) + 0.5, 0.0, 1.0)                    # [1, 72]

    # --- fold the SE scale into the second conv weight (Cout, Cin layout) -----
    w2s = w2_ref[...] * scale                                            # [40, 72]

    # --- conv2d13 (1x1, no bias), channels-first: [40,72] @ [72,HW] -----------
    y = jnp.dot(w2s, x34_ref[...],
                preferred_element_type=jnp.float32,
                precision=_HIGHEST)                                      # [40, HW]

    # --- BatchNorm2d(40), training mode: biased batch stats over N*H*W --------
    # Two-pass (shifted) variance, identical to the reference formulation.
    inv_n = 1.0 / y.shape[1]
    mean = jnp.sum(y, axis=1, keepdims=True) * inv_n                     # [40, 1]
    c = y - mean                                                         # [40, HW]
    var = jnp.sum(c * c, axis=1, keepdims=True) * inv_n                  # [40, 1]
    a = gamma_ref[...] * jax.lax.rsqrt(var + EPS)                        # [40, 1]
    out_ref[...] = c * a + beta_ref[...]                                 # [40, HW]


def fused_forward(x37, x34, w1, b1, w2, gamma, beta):
    """x37: [1,24,1,1], x34: [1,72,28,28] (NCHW).
    w1: [72,24,1,1] (conv2d12 weight), b1: [72], w2: [40,72,1,1] (conv2d13),
    gamma/beta: [40]. Returns [1,40,28,28]."""
    N, C_mid, H, W = x34.shape
    assert N == 1
    C_in = x37.shape[1]
    C_out = w2.shape[0]
    HW = H * W

    # Trace-time glue — free reshapes; the only transpose is on the tiny 72x24
    # weight.
    x34_cf = x34.reshape(C_mid, HW)                       # [72, 784]  (free)
    x37_col = x37.reshape(C_in, 1)                        # [24, 1]
    w1_mat = jnp.transpose(w1.reshape(C_mid, C_in))       # [24, 72]
    b1_row = b1.reshape(1, C_mid)                         # [1, 72]
    w2_mat = w2.reshape(C_out, C_mid)                     # [40, 72] (Cout, Cin)
    gamma_col = gamma.reshape(C_out, 1)                   # [40, 1]
    beta_col = beta.reshape(C_out, 1)                     # [40, 1]

    out_cf = pl.pallas_call(
        _fused_kernel,
        out_shape=jax.ShapeDtypeStruct((C_out, HW), jnp.float32),
        grid=(1,),
        in_specs=[
            pl.BlockSpec((C_in, 1), lambda i: (0, 0)),
            pl.BlockSpec((C_in, C_mid), lambda i: (0, 0)),
            pl.BlockSpec((1, C_mid), lambda i: (0, 0)),
            pl.BlockSpec((C_mid, HW), lambda i: (0, 0)),
            pl.BlockSpec((C_out, C_mid), lambda i: (0, 0)),
            pl.BlockSpec((C_out, 1), lambda i: (0, 0)),
            pl.BlockSpec((C_out, 1), lambda i: (0, 0)),
        ],
        out_specs=pl.BlockSpec((C_out, HW), lambda i: (0, 0)),
        compiler_params=pltpu.CompilerParams(
            dimension_semantics=("arbitrary",)),
    )(x37_col, w1_mat, b1_row, x34_cf, w2_mat, gamma_col, beta_col)

    # channels-first [40, 784] -> NCHW [1, 40, 28, 28]  (free reshape)
    return out_cf.reshape(1, C_out, H, W)


def _reference(x37, x34, w1, b1, w2, gamma, beta):
    # Pure-JAX reference (same math, NCHW semantics, two-pass variance),
    # with matmul precision pinned to match the kernel.
    w1m = w1.reshape(w1.shape[0], w1.shape[1])            # [72, 24]
    w2m = w2.reshape(w2.shape[0], w2.shape[1])            # [40, 72]
    s = jnp.einsum('nchw,oc->nohw', x37, w1m, precision=_HIGHEST) \
        + b1.reshape(1, -1, 1, 1)
    scale = jnp.clip(s / 6.0 + 0.5, 0.0, 1.0)
    x = scale * x34
    y = jnp.einsum('nchw,oc->nohw', x, w2m, precision=_HIGHEST)
    mean = jnp.mean(y, axis=(0, 2, 3), keepdims=True)
    var = jnp.mean((y - mean) ** 2, axis=(0, 2, 3), keepdims=True)
    return (y - mean) * jax.lax.rsqrt(var + EPS) * gamma.reshape(1, -1, 1, 1) \
        + beta.reshape(1, -1, 1, 1)


if __name__ == "__main__":
    key = jax.random.PRNGKey(0)
    k = jax.random.split(key, 7)

    # Shapes implied by the module (batch=1, 24->72->40 channels, 28x28 spatial).
    x34 = jax.random.normal(k[0], (1, 72, 28, 28), jnp.float32)
    x37 = jax.random.normal(k[1], (1, 24, 1, 1), jnp.float32)

    # Parameters in PyTorch conv layouts (Cout, Cin, 1, 1).
    w1 = jax.random.normal(k[2], (72, 24, 1, 1), jnp.float32) * 0.1  # conv2d12 weight
    b1 = jax.random.normal(k[3], (72,), jnp.float32) * 0.1           # conv2d12 bias
    w2 = jax.random.normal(k[4], (40, 72, 1, 1), jnp.float32) * 0.1  # conv2d13 weight
    gamma = 1.0 + 0.1 * jax.random.normal(k[5], (40,), jnp.float32)  # BN weight
    beta = 0.1 * jax.random.normal(k[6], (40,), jnp.float32)         # BN bias

    out = jax.block_until_ready(
        fused_forward(x37, x34, w1, b1, w2, gamma, beta))

    ref = jax.block_until_ready(
        _reference(x37, x34, w1, b1, w2, gamma, beta))
    assert out.shape == (1, 40, 28, 28)
    assert jnp.allclose(out, ref, atol=1e-4, rtol=1e-4)

    print("KERNEL_OK")
</pallas_src>

<mosaic_0001>
module attributes {stable_mosaic.version = 11 : i64} {
  func.func @_fused_kernel(%arg0: i32, %arg1: memref<24x1xf32, #tpu.memory_space<vmem>>, %arg2: memref<24x72xf32, #tpu.memory_space<vmem>>, %arg3: memref<1x72xf32, #tpu.memory_space<vmem>>, %arg4: memref<72x784xf32, #tpu.memory_space<vmem>>, %arg5: memref<40x72xf32, #tpu.memory_space<vmem>>, %arg6: memref<40x1xf32, #tpu.memory_space<vmem>>, %arg7: memref<40x1xf32, #tpu.memory_space<vmem>>, %arg8: memref<40x784xf32, #tpu.memory_space<vmem>>) attributes {dimension_semantics = [#tpu.dimension_semantics<arbitrary>], iteration_bounds = array<i64: 1>, scalar_prefetch = 0 : i64, scratch_operands = 0 : i64, tpu.core_type = #tpu.core_type<tc>, window_params = [{pipeline_mode = #tpu.pipeline_mode<synchronous>, transform_indices = @transform_0, window_bounds = array<i64: 24, 1>}, {pipeline_mode = #tpu.pipeline_mode<synchronous>, transform_indices = @transform_1, window_bounds = array<i64: 24, 72>}, {pipeline_mode = #tpu.pipeline_mode<synchronous>, transform_indices = @transform_2, window_bounds = array<i64: 1, 72>}, {pipeline_mode = #tpu.pipeline_mode<synchronous>, transform_indices = @transform_3, window_bounds = array<i64: 72, 784>}, {pipeline_mode = #tpu.pipeline_mode<synchronous>, transform_indices = @transform_4, window_bounds = array<i64: 40, 72>}, {pipeline_mode = #tpu.pipeline_mode<synchronous>, transform_indices = @transform_5, window_bounds = array<i64: 40, 1>}, {pipeline_mode = #tpu.pipeline_mode<synchronous>, transform_indices = @transform_6, window_bounds = array<i64: 40, 1>}, {pipeline_mode = #tpu.pipeline_mode<synchronous>, transform_indices = @transform_7, window_bounds = array<i64: 40, 784>}]} {
    %c0 = arith.constant 0 : index
    %c0_0 = arith.constant 0 : index
    %0 = vector.load %arg1[%c0, %c0_0] : memref<24x1xf32, #tpu.memory_space<vmem>>, vector<24x1xf32>
    %c0_1 = arith.constant 0 : index
    %c0_2 = arith.constant 0 : index
    %1 = vector.load %arg2[%c0_1, %c0_2] : memref<24x72xf32, #tpu.memory_space<vmem>>, vector<24x72xf32>
    %2 = vector.broadcast %0 : vector<24x1xf32> to vector<24x72xf32>
    %3 = arith.mulf %2, %1 : vector<24x72xf32>
    %cst = arith.constant dense<0.000000e+00> : vector<72xf32>
    %4 = vector.multi_reduction <add>, %3, %cst [0] : vector<24x72xf32> to vector<72xf32>
    %5 = vector.shape_cast %4 : vector<72xf32> to vector<1x72xf32>
    %c0_3 = arith.constant 0 : index
    %c0_4 = arith.constant 0 : index
    %6 = vector.load %arg3[%c0_3, %c0_4] : memref<1x72xf32, #tpu.memory_space<vmem>>, vector<1x72xf32>
    %7 = arith.addf %5, %6 : vector<1x72xf32>
    %cst_5 = arith.constant 0.166666672 : f32
    %8 = vector.broadcast %cst_5 : f32 to vector<1x72xf32>
    %9 = arith.mulf %7, %8 : vector<1x72xf32>
    %cst_6 = arith.constant 5.000000e-01 : f32
    %10 = vector.broadcast %cst_6 : f32 to vector<1x72xf32>
    %11 = arith.addf %9, %10 : vector<1x72xf32>
    %cst_7 = arith.constant 0.000000e+00 : f32
    %cst_8 = arith.constant 1.000000e+00 : f32
    %12 = vector.broadcast %cst_7 : f32 to vector<1x72xf32>
    %13 = arith.maximumf %12, %11 : vector<1x72xf32>
    %14 = vector.broadcast %cst_8 : f32 to vector<1x72xf32>
    %15 = arith.minimumf %14, %13 : vector<1x72xf32>
    %c0_9 = arith.constant 0 : index
    %c0_10 = arith.constant 0 : index
    %16 = vector.load %arg5[%c0_9, %c0_10] : memref<40x72xf32, #tpu.memory_space<vmem>>, vector<40x72xf32>
    %17 = vector.broadcast %15 : vector<1x72xf32> to vector<40x72xf32>
    %18 = arith.mulf %16, %17 : vector<40x72xf32>
    %c0_11 = arith.constant 0 : index
    %c0_12 = arith.constant 0 : index
    %19 = vector.load %arg4[%c0_11, %c0_12] : memref<72x784xf32, #tpu.memory_space<vmem>>, vector<72x784xf32>
    %cst_13 = arith.constant dense<0.000000e+00> : vector<40x784xf32>
    %20 = tpu.matmul %18, %19, %cst_13 {dimension_numbers = #tpu.dot_dimension_numbers<[1], [0], [0], [1], [0, 0, 1, 1], [], []>, precision = #tpu.contract_precision<fp32>} : vector<40x72xf32>, vector<72x784xf32>, vector<40x784xf32> -> vector<40x784xf32>
    %cst_14 = arith.constant dense<0.000000e+00> : vector<40xf32>
    %21 = vector.multi_reduction <add>, %20, %cst_14 [1] : vector<40x784xf32> to vector<40xf32>
    %22 = vector.shape_cast %21 : vector<40xf32> to vector<40x1xf32>
    %cst_15 = arith.constant 0.00127551018 : f32
    %23 = vector.broadcast %cst_15 : f32 to vector<40x1xf32>
    %24 = arith.mulf %22, %23 : vector<40x1xf32>
    %25 = vector.broadcast %24 : vector<40x1xf32> to vector<40x784xf32>
    %26 = arith.subf %20, %25 : vector<40x784xf32>
    %27 = arith.mulf %26, %26 : vector<40x784xf32>
    %cst_16 = arith.constant dense<0.000000e+00> : vector<40xf32>
    %28 = vector.multi_reduction <add>, %27, %cst_16 [1] : vector<40x784xf32> to vector<40xf32>
    %29 = vector.shape_cast %28 : vector<40xf32> to vector<40x1xf32>
    %cst_17 = arith.constant 0.00127551018 : f32
    %30 = vector.broadcast %cst_17 : f32 to vector<40x1xf32>
    %31 = arith.mulf %29, %30 : vector<40x1xf32>
    %c0_18 = arith.constant 0 : index
    %c0_19 = arith.constant 0 : index
    %32 = vector.load %arg6[%c0_18, %c0_19] : memref<40x1xf32, #tpu.memory_space<vmem>>, vector<40x1xf32>
    %cst_20 = arith.constant 1.000000e-03 : f32
    %33 = vector.broadcast %cst_20 : f32 to vector<40x1xf32>
    %34 = arith.addf %31, %33 : vector<40x1xf32>
    %35 = math.rsqrt %34 : vector<40x1xf32>
    %36 = arith.mulf %32, %35 : vector<40x1xf32>
    %37 = vector.broadcast %36 : vector<40x1xf32> to vector<40x784xf32>
    %38 = arith.mulf %26, %37 : vector<40x784xf32>
    %c0_21 = arith.constant 0 : index
    %c0_22 = arith.constant 0 : index
    %39 = vector.load %arg7[%c0_21, %c0_22] : memref<40x1xf32, #tpu.memory_space<vmem>>, vector<40x1xf32>
    %40 = vector.broadcast %39 : vector<40x1xf32> to vector<40x784xf32>
    %41 = arith.addf %38, %40 : vector<40x784xf32>
    %c0_23 = arith.constant 0 : index
    %c0_24 = arith.constant 0 : index
    %42 = vector.load %arg8[%c0_23, %c0_24] : memref<40x784xf32, #tpu.memory_space<vmem>>, vector<40x784xf32>
    tpu.vector_store %arg8[%c0_23, %c0_24], %41 {strides = array<i32>} : memref<40x784xf32, #tpu.memory_space<vmem>>, vector<40x784xf32>,
    return
  }
  func.func @transform_0(%arg0: i32) -> (i32, i32) {
    %c0_i32 = arith.constant 0 : i32
    %c0_i32_0 = arith.constant 0 : i32
    %c0_i32_1 = arith.constant 0 : i32
    return %c0_i32, %c0_i32_0 : i32, i32
  }
  func.func @transform_1(%arg0: i32) -> (i32, i32) {
    %c0_i32 = arith.constant 0 : i32
    %c0_i32_0 = arith.constant 0 : i32
    %c0_i32_1 = arith.constant 0 : i32
    return %c0_i32, %c0_i32_0 : i32, i32
  }
  func.func @transform_2(%arg0: i32) -> (i32, i32) {
    %c0_i32 = arith.constant 0 : i32
    %c0_i32_0 = arith.constant 0 : i32
    %c0_i32_1 = arith.constant 0 : i32
    return %c0_i32, %c0_i32_0 : i32, i32
  }
  func.func @transform_3(%arg0: i32) -> (i32, i32) {
    %c0_i32 = arith.constant 0 : i32
    %c0_i32_0 = arith.constant 0 : i32
    %c0_i32_1 = arith.constant 0 : i32
    return %c0_i32, %c0_i32_0 : i32, i32
  }
  func.func @transform_4(%arg0: i32) -> (i32, i32) {
    %c0_i32 = arith.constant 0 : i32
    %c0_i32_0 = arith.constant 0 : i32
    %c0_i32_1 = arith.constant 0 : i32
    return %c0_i32, %c0_i32_0 : i32, i32
  }
  func.func @transform_5(%arg0: i32) -> (i32, i32) {
    %c0_i32 = arith.constant 0 : i32
    %c0_i32_0 = arith.constant 0 : i32
    %c0_i32_1 = arith.constant 0 : i32
    return %c0_i32, %c0_i32_0 : i32, i32
  }
  func.func @transform_6(%arg0: i32) -> (i32, i32) {
    %c0_i32 = arith.constant 0 : i32
    %c0_i32_0 = arith.constant 0 : i32
    %c0_i32_1 = arith.constant 0 : i32
    return %c0_i32, %c0_i32_0 : i32, i32
  }
  func.func @transform_7(%arg0: i32) -> (i32, i32) {
    %c0_i32 = arith.constant 0 : i32
    %c0_i32_0 = arith.constant 0 : i32
    %c0_i32_1 = arith.constant 0 : i32
    return %c0_i32, %c0_i32_0 : i32, i32
  }
}

</mosaic_0001>

<llo_original>
// kernel: tpu_custom_call.1
$region0: #{tpu_custom_call.1}
  #allocation0 [shape = 'u32[]', space=smem, size = 0x4, offset = 0x4, fixed_abs, tag = 'smem constant byte address 0x4 - core index']
  #allocation1 [shape = 'u32[144,128]{1,0:T(1,128)}', space=vmem, size = 0x12000, scoped, tag = 'internal scratch']
  %s0 = inlined_call_operand.vmem [shape: f32[24,1], index: 0, kind: input, shape index: {}]
  %s1 = inlined_call_operand.vmem [shape: f32[24,72], index: 1, kind: input, shape index: {}]
  %s2 = inlined_call_operand.vmem [shape: f32[1,72], index: 2, kind: input, shape index: {}]
  %s3 = inlined_call_operand.hbm [shape: f32[72,784], index: 3, kind: input, shape index: {}]
  %s4 = inlined_call_operand.vmem [shape: f32[40,72], index: 4, kind: input, shape index: {}]
  %s5 = inlined_call_operand.vmem [shape: f32[40,1], index: 5, kind: input, shape index: {}]
  %s6 = inlined_call_operand.vmem [shape: f32[40,1], index: 6, kind: input, shape index: {}]
  %s7 = inlined_call_operand.hbm [shape: f32[40,784], index: 7, kind: output, shape index: {}]
  %s8 = sld [smem:[#allocation0]]
  $region42: #{tpu_custom_call.1} parent=0
    _
  %s10 = ssub.s32 1, %s8
  %s11 = scalar_select 0, %s10, %s8
  $region1: #{tpu_custom_call.1} parent=0
    #allocation2 [shape = 'u8[258048]{0}', space=vmem, size = 0x3f000, scoped, tag = 'input window, operand 3, single buffered']
    #allocation3 [shape = 's32[1]{0}', space=sflag, size = 0x4, scoped, tag = 'scoped memory for tpu_custom_call.1']
    #allocation4 [shape = 's32[1]{0}', space=sflag, size = 0x4, scoped, tag = 'scoped memory for tpu_custom_call.1']
    #allocation5 [shape = 'u8[143360]{0}', space=vmem, size = 0x23000, scoped, tag = 'output window, operand 0, single buffered']
    %12 = vsyncpa [#allocation3], 0
    %13 = vsyncpa [#allocation4], 0
    // Predicated region
    $region2: #{tpu_custom_call.1} parent=1 // pred_check
      _
    $region3: #{tpu_custom_call.1} parent=1 // pred_check_branch
      %15 = sbr.rel (0) target = $region5
    $region4: #{tpu_custom_call.1} parent=1 // pred_region
      _
    $region5: #{tpu_custom_call.1} parent=1 // pred_fallthru
      _
    // Predicated region
    $region6: #{tpu_custom_call.1} parent=1 // pred_check
      _
    $region7: #{tpu_custom_call.1} parent=1 // pred_check_branch
      %17 = sbr.rel (0) target = $region9
    $region8: #{tpu_custom_call.1} parent=1 // pred_region
      _
    $region9: #{tpu_custom_call.1} parent=1 // pred_fallthru
      _
    // Predicated region
    $region10: #{tpu_custom_call.1} parent=1 // pred_check
      _
    $region11: #{tpu_custom_call.1} parent=1 // pred_check_branch
      %19 = sbr.rel (0) target = $region13
    $region12: #{tpu_custom_call.1} parent=1 // pred_region
      _
    $region13: #{tpu_custom_call.1} parent=1 // pred_fallthru
      _
    // Predicated region
    $region14: #{tpu_custom_call.1} parent=1 // pred_check
      _
    $region15: #{tpu_custom_call.1} parent=1 // pred_check_branch
      %21 = sbr.rel (0) target = $region17
    $region16: #{tpu_custom_call.1} parent=1 // pred_region
      %s23 = ssub.s32 8064, 8064
      %24 = vsyncadd [#allocation3], %s23
      %s25 = sshll.u32 [#allocation2], 4
      %s26 = int_to_ptr.vmem [resolvable:$true] %s25
      %31 = dma.hbm_to_vmem [thread:$0]  %s3, 8064, %s26, [#allocation3], 896, 896, 56
    $region17: #{tpu_custom_call.1} parent=1 // pred_fallthru
      _
    // Predicated region
    $region18: #{tpu_custom_call.1} parent=1 // pred_check
      _
    $region19: #{tpu_custom_call.1} parent=1 // pred_check_branch
      %33 = sbr.rel (0) target = $region21
    $region20: #{tpu_custom_call.1} parent=1 // pred_region
      _
    $region21: #{tpu_custom_call.1} parent=1 // pred_fallthru
      _
    // Predicated region
    $region22: #{tpu_custom_call.1} parent=1 // pred_check
      _
    $region23: #{tpu_custom_call.1} parent=1 // pred_check_branch
      %35 = sbr.rel (0) target = $region25
    $region24: #{tpu_custom_call.1} parent=1 // pred_region
      _
    $region25: #{tpu_custom_call.1} parent=1 // pred_fallthru
      _
    // Predicated region
    $region26: #{tpu_custom_call.1} parent=1 // pred_check
      _
    $region27: #{tpu_custom_call.1} parent=1 // pred_check_branch
      %37 = sbr.rel (0) target = $region29
    $region28: #{tpu_custom_call.1} parent=1 // pred_region
      _
    $region29: #{tpu_custom_call.1} parent=1 // pred_fallthru
      _
    // Predicated region
    $region30: #{tpu_custom_call.1} parent=1 // pred_check
      _
    $region31: #{tpu_custom_call.1} parent=1 // pred_check_branch
      %39 = sbr.rel (0) target = $region33
    $region32: #{tpu_custom_call.1} parent=1 // pred_region
      %40 = dma.done [#allocation3], 8064
    $region33: #{tpu_custom_call.1} parent=1 // pred_fallthru
      _
    %v41 = vld [vmem:[%s0] sm:$0xff]
    %v42 = vld [vmem:[%s0 + $0x8] sm:$0xff]
    %v43 = vld [vmem:[%s0 + $0x10] sm:$0xff]
    %v44 = vld [vmem:[%s1] sm:$0xff]
    %v45 = vld [vmem:[%s1 + $0x8] sm:$0xff]
    %v46 = vld [vmem:[%s1 + $0x10] sm:$0xff]
    %48 = vset.pattern.permute.xlu0 0
    %49 = vperm.xlu0 %48, %v41
    %v50 = vpop.permute.xlu0 %49
    %53 = vset.pattern.permute.xlu0 0
    %54 = vperm.xlu0 %53, %v42
    %v55 = vpop.permute.xlu0 %54
    %58 = vset.pattern.permute.xlu0 0
    %59 = vperm.xlu0 %58, %v43
    %v60 = vpop.permute.xlu0 %59
    %v62 = vmul.f32 %v50, %v44
    %v63 = vmul.f32 %v55, %v45
    %v64 = vmul.f32 %v60, %v46
    %vm65 = vcmask 588800
    %v66 = vsel %vm65, %v62, 0.0
    %v67 = vsel %vm65, %v63, 0.0
    %v68 = vadd.f32 %v66, %v67
    %v69 = vsel %vm65, %v64, 0.0
    %v70 = vadd.f32 %v68, %v69
    %v71 = vrot.slane %v70, 4
    %v72 = vadd.f32 %v70, %v71
    %v73 = vrot.slane %v72, 2
    %v74 = vadd.f32 %v72, %v73
    %v75 = vrot.slane %v74, 1
    %v76 = vadd.f32 %v74, %v75
    %v77 = vld [vmem:[%s2] sm:$0x1]
    %v78 = vadd.f32 %v76, %v77
    %v79 = vmul.f32 %v78, 0.16666667
    %v80 = vadd.f32 %v79, 0.5
    %v81 = vmax.f32 %v80, 0.0
    %v82 = vmin.f32 %v81, 1.0
    %v83 = vld [vmem:[%s4] sm:$0xff]
    %v84 = vld [vmem:[%s4 + $0x8] sm:$0xff]
    %v85 = vld [vmem:[%s4 + $0x10] sm:$0xff]
    %v86 = vld [vmem:[%s4 + $0x18] sm:$0xff]
    %v87 = vld [vmem:[%s4 + $0x20] sm:$0xff]
    %v88 = vlaneseq
    %v89 = vshrl.u32 %v88, 7
    %v90 = vsub.s32 0, %v89
    %v91 = vrot.slane %v82, %v90
    %v92 = vmul.f32 %v83, %v91
    %v93 = vmul.f32 %v84, %v91
    %v94 = vmul.f32 %v85, %v91
    %v95 = vmul.f32 %v86, %v91
    %v96 = vmul.f32 %v87, %v91
    %v97 = vld [vmem:[#allocation2] sm:$0xff]
    %v98 = vld [vmem:[#allocation2 + $0x8] sm:$0xff]
    %v99 = vld [vmem:[#allocation2 + $0x10] sm:$0xff]
    %v100 = vld [vmem:[#allocation2 + $0x18] sm:$0xff]
    %v101 = vld [vmem:[#allocation2 + $0x20] sm:$0xff]
    %v102 = vld [vmem:[#allocation2 + $0x28] sm:$0xff]
    %v103 = vld [vmem:[#allocation2 + $0x30] sm:$0xff]
    %v104 = vld [vmem:[#allocation2 + $0x38] sm:$0xff]
    %v105 = vld [vmem:[#allocation2 + $0x40] sm:$0xff]
    %v106 = vld [vmem:[#allocation2 + $0x48] sm:$0xff]
    %v107 = vld [vmem:[#allocation2 + $0x50] sm:$0xff]
    %v108 = vld [vmem:[#allocation2 + $0x58] sm:$0xff]
    %v109 = vld [vmem:[#allocation2 + $0x60] sm:$0xff]
    %v110 = vld [vmem:[#allocation2 + $0x68] sm:$0xff]
    %v111 = vld [vmem:[#allocation2 + $0x70] sm:$0xff]
    %v112 = vld [vmem:[#allocation2 + $0x78] sm:$0xff]
    %v113 = vld [vmem:[#allocation2 + $0x80] sm:$0xff]
    %v114 = vld [vmem:[#allocation2 + $0x88] sm:$0xff]
    %v115 = vld [vmem:[#allocation2 + $0x90] sm:$0xff]
    %v116 = vld [vmem:[#allocation2 + $0x98] sm:$0xff]
    %v117 = vld [vmem:[#allocation2 + $0xa0] sm:$0xff]
    %v118 = vld [vmem:[#allocation2 + $0xa8] sm:$0xff]
    %v119 = vld [vmem:[#allocation2 + $0xb0] sm:$0xff]
    %v120 = vld [vmem:[#allocation2 + $0xb8] sm:$0xff]
    %v121 = vld [vmem:[#allocation2 + $0xc0] sm:$0xff]
    %v122 = vld [vmem:[#allocation2 + $0xc8] sm:$0xff]
    %v123 = vld [vmem:[#allocation2 + $0xd0] sm:$0xff]
    %v124 = vld [vmem:[#allocation2 + $0xd8] sm:$0xff]
    %v125 = vld [vmem:[#allocation2 + $0xe0] sm:$0xff]
    %v126 = vld [vmem:[#allocation2 + $0xe8] sm:$0xff]
    %v127 = vld [vmem:[#allocation2 + $0xf0] sm:$0xff]
    %v128 = vld [vmem:[#allocation2 + $0xf8] sm:$0xff]
    %v129 = vld [vmem:[#allocation2 + $0x100] sm:$0xff]
    %v130 = vld [vmem:[#allocation2 + $0x108] sm:$0xff]
    %v131 = vld [vmem:[#allocation2 + $0x110] sm:$0xff]
    %v132 = vld [vmem:[#allocation2 + $0x118] sm:$0xff]
    %v133 = vld [vmem:[#allocation2 + $0x120] sm:$0xff]
    %v134 = vld [vmem:[#allocation2 + $0x128] sm:$0xff]
    %v135 = vld [vmem:[#allocation2 + $0x130] sm:$0xff]
    %v136 = vld [vmem:[#allocation2 + $0x138] sm:$0xff]
    %v137 = vld [vmem:[#allocation2 + $0x140] sm:$0xff]
    %v138 = vld [vmem:[#allocation2 + $0x148] sm:$0xff]
    %v139 = vld [vmem:[#allocation2 + $0x150] sm:$0xff]
    %v140 = vld [vmem:[#allocation2 + $0x158] sm:$0xff]
    %v141 = vld [vmem:[#allocation2 + $0x160] sm:$0xff]
    %v142 = vld [vmem:[#allocation2 + $0x168] sm:$0xff]
    %v143 = vld [vmem:[#allocation2 + $0x170] sm:$0xff]
    %v144 = vld [vmem:[#allocation2 + $0x178] sm:$0xff]
    %v145 = vld [vmem:[#allocation2 + $0x180] sm:$0xff]
    %v146 = vld [vmem:[#allocation2 + $0x188] sm:$0xff]
    %v147 = vld [vmem:[#allocation2 + $0x190] sm:$0xff]
    %v148 = vld [vmem:[#allocation2 + $0x198] sm:$0xff]
    %v149 = vld [vmem:[#allocation2 + $0x1a0] sm:$0xff]
    %v150 = vld [vmem:[#allocation2 + $0x1a8] sm:$0xff]
    %v151 = vld [vmem:[#allocation2 + $0x1b0] sm:$0xff]
    %v152 = vld [vmem:[#allocation2 + $0x1b8] sm:$0xff]
    %v153 = vld [vmem:[#allocation2 + $0x1c0] sm:$0xff]
    %v154 = vld [vmem:[#allocation2 + $0x1c8] sm:$0xff]
    %v155 = vld [vmem:[#allocation2 + $0x1d0] sm:$0xff]
    %v156 = vld [vmem:[#allocation2 + $0x1d8] sm:$0xff]
    %v157 = vld [vmem:[#allocation2 + $0x1e0] sm:$0xff]
    %v158 = vld [vmem:[#allocation2 + $0x1e8] sm:$0xff]
    %v159 = vld [vmem:[#allocation2 + $0x1f0] sm:$0xff]
    %v161 = vsel %vm65, %v92, 0
    %v164 = vsel %vm65, %v93, 0
    %v167 = vsel %vm65, %v94, 0
    %v170 = vsel %vm65, %v95, 0
    %v173 = vsel %vm65, %v96, 0
    %175 = vmatprep.subr.mxu0 0.0
    %176 = vmatpush1.msra.mxu0 0.0
    %177 = vmatprep.subr.mxu0 0.0
    %178 = vmatpush1.msra.mxu0 0.0
    %179 = vmatprep.subr.mxu0 0.0
    %180 = vmatpush1.msra.mxu0 0.0
    %181 = vmatprep.subr.mxu0 0.0
    %182 = vmatpush1.msra.mxu0 0.0
    %183 = vmatprep.subr.mxu0 0.0
    %184 = vmatpush1.msra.mxu0 0.0
    %185 = vmatprep.subr.mxu0 0.0
    %186 = vmatpush1.msra.mxu0 0.0
    %187 = vmatprep.subr.mxu0 0.0
    %188 = vmatpush1.msra.mxu0 0.0
    %v189 = vand.u32 %v154, 4294901760
    %190 = vmatprep.subr.mxu0 %v189
    %v191 = vand.u32 %v153, 4294901760
    %192 = vmatpush1.msra.mxu0 %v191
    %v193 = vand.u32 %v147, 4294901760
    %194 = vmatprep.subr.mxu0 %v193
    %v195 = vand.u32 %v146, 4294901760
    %196 = vmatpush1.msra.mxu0 %v195
    %v197 = vand.u32 %v140, 4294901760
    %198 = vmatprep.subr.mxu0 %v197
    %v199 = vand.u32 %v139, 4294901760
    %200 = vmatpush1.msra.mxu0 %v199
    %v201 = vand.u32 %v133, 4294901760
    %202 = vmatprep.subr.mxu0 %v201
    %v203 = vand.u32 %v132, 4294901760
    %204 = vmatpush1.msra.mxu0 %v203
    %v205 = vand.u32 %v126, 4294901760
    %206 = vmatprep.subr.mxu0 %v205
    %v207 = vand.u32 %v125, 4294901760
    %208 = vmatpush1.msra.mxu0 %v207
    %v209 = vand.u32 %v119, 4294901760
    %210 = vmatprep.subr.mxu0 %v209
    %v211 = vand.u32 %v118, 4294901760
    %212 = vmatpush1.msra.mxu0 %v211
    %v213 = vand.u32 %v112, 4294901760
    %214 = vmatprep.subr.mxu0 %v213
    %v215 = vand.u32 %v111, 4294901760
    %216 = vmatpush1.msra.mxu0 %v215
    %v217 = vand.u32 %v105, 4294901760
    %218 = vmatprep.subr.mxu0 %v217
    %v219 = vand.u32 %v104, 4294901760
    %220 = vmatpush1.msra.mxu0 %v219
    %v221 = vand.u32 %v98, 4294901760
    %222 = vmatprep.subr.mxu0 %v221
    %v223 = vand.u32 %v97, 4294901760
    %224 = vmatpush1.msra.mxu0 %v223
    %225 = vmatprep.subr.mxu0 0.0
    %226 = vmatpush2.msra.mxu0 0.0
    %227 = vmatprep.subr.mxu0 0.0
    %228 = vmatpush2.msra.mxu0 0.0
    %229 = vmatprep.subr.mxu0 0.0
    %230 = vmatpush2.msra.mxu0 0.0
    %231 = vmatprep.subr.mxu0 0.0
    %232 = vmatpush2.msra.mxu0 0.0
    %233 = vmatprep.subr.mxu0 0.0
    %234 = vmatpush2.msra.mxu0 0.0
    %235 = vmatprep.subr.mxu0 0.0
    %236 = vmatpush2.msra.mxu0 0.0
    %237 = vmatprep.subr.mxu0 0.0
    %238 = vmatpush2.msra.mxu0 0.0
    %239 = vmatprep.subr.mxu0 0.0
    %240 = vmatpush2.msra.mxu0 0.0
    %241 = vmatprep.subr.mxu0 0.0
    %242 = vmatpush2.msra.mxu0 0.0
    %243 = vmatprep.subr.mxu0 0.0
    %244 = vmatpush2.msra.mxu0 0.0
    %245 = vmatprep.subr.mxu0 0.0
    %246 = vmatpush2.msra.mxu0 0.0
    %247 = vmatprep.subr.mxu0 0.0
    %248 = vmatpush2.msra.mxu0 0.0
    %249 = vmatprep.subr.mxu0 0.0
    %250 = vmatpush2.msra.mxu0 0.0
    %251 = vmatprep.subr.mxu0 0.0
    %252 = vmatpush2.msra.mxu0 0.0
    %253 = vmatprep.subr.mxu0 0.0
    %254 = vmatpush2.msra.mxu0 0.0
    %255 = vmatprep.subr.mxu0 0.0
    %256 = vmatpush2.msra.mxu0 0.0
    %257 = vmatprep.mubr.f32.mxu0 0.0
    %v258 = vand.u32 %v161, 4294901760
    %v259 = vsub.f32 %v161, %v258
    %v260 = vand.u32 %v259, 4294901760
    %v261 = vsub.f32 %v259, %v260
    %v262 = vand.u32 %v261, 4294901760
    %263 = vmatmul.mubr.f32.gmra.mxu0 %v262
    %v264 = vpop.f32.mrf.mxu0
    %v265 = vadd.f32 0.0, %v264
    %v266 = vpop.f32.mrf.mxu0
    %v267 = vadd.f32 0.0, %v266
    %268 = vmatprep.mubr.f32.mxu0 0.0
    %v269 = vand.u32 %v164, 4294901760
    %v270 = vsub.f32 %v164, %v269
    %v271 = vand.u32 %v270, 4294901760
    %v272 = vsub.f32 %v270, %v271
    %v273 = vand.u32 %v272, 4294901760
    %274 = vmatmul.mubr.f32.gmra.mxu0 %v273
    %v275 = vpop.f32.mrf.mxu0
    %v276 = vadd.f32 0.0, %v275
    %v277 = vpop.f32.mrf.mxu0
    %v278 = vadd.f32 0.0, %v277
    %279 = vmatprep.mubr.f32.mxu0 0.0
    %v280 = vand.u32 %v167, 4294901760
    %v281 = vsub.f32 %v167, %v280
    %v282 = vand.u32 %v281, 4294901760
    %v283 = vsub.f32 %v281, %v282
    %v284 = vand.u32 %v283, 4294901760
    %285 = vmatmul.mubr.f32.gmra.mxu0 %v284
    %v286 = vpop.f32.mrf.mxu0
    %v287 = vadd.f32 0.0, %v286
    %v288 = vpop.f32.mrf.mxu0
    %v289 = vadd.f32 0.0, %v288
    %290 = vmatprep.mubr.f32.mxu0 0.0
    %v291 = vand.u32 %v170, 4294901760
    %v292 = vsub.f32 %v170, %v291
    %v293 = vand.u32 %v292, 4294901760
    %v294 = vsub.f32 %v292, %v293
    %v295 = vand.u32 %v294, 4294901760
    %296 = vmatmul.mubr.f32.gmra.mxu0 %v295
    %v297 = vpop.f32.mrf.mxu0
    %v298 = vadd.f32 0.0, %v297
    %v299 = vpop.f32.mrf.mxu0
    %v300 = vadd.f32 0.0, %v299
    %301 = vmatprep.mubr.f32.mxu0 0.0
    %v302 = vand.u32 %v173, 4294901760
    %v303 = vsub.f32 %v173, %v302
    %v304 = vand.u32 %v303, 4294901760
    %v305 = vsub.f32 %v303, %v304
    %v306 = vand.u32 %v305, 4294901760
    %307 = vmatmul.mubr.f32.gmra.mxu0 %v306
    %v308 = vpop.f32.mrf.mxu0
    %v309 = vadd.f32 0.0, %v308
    %v310 = vpop.f32.mrf.mxu0
    %v311 = vadd.f32 0.0, %v310
    %312 = vdwg.mxu0
    %313 = vmatprep.subr.mxu0 0.0
    %314 = vmatpush1.msra.mxu0 0.0
    %315 = vmatprep.subr.mxu0 0.0
    %316 = vmatpush1.msra.mxu0 0.0
    %317 = vmatprep.subr.mxu0 0.0
    %318 = vmatpush1.msra.mxu0 0.0
    %319 = vmatprep.subr.mxu0 0.0
    %320 = vmatpush1.msra.mxu0 0.0
    %321 = vmatprep.subr.mxu0 0.0
    %322 = vmatpush1.msra.mxu0 0.0
    %323 = vmatprep.subr.mxu0 0.0
    %324 = vmatpush1.msra.mxu0 0.0
    %325 = vmatprep.subr.mxu0 0.0
    %326 = vmatpush1.msra.mxu0 0.0
    %v327 = vand.u32 %v154, 4294901760
    %v328 = vsub.f32 %v154, %v327
    %v329 = vand.u32 %v328, 4294901760
    %v330 = vsub.f32 %v328, %v329
    %v331 = vand.u32 %v330, 4294901760
    %332 = vmatprep.subr.mxu0 %v331
    %v333 = vand.u32 %v153, 4294901760
    %v334 = vsub.f32 %v153, %v333
    %v335 = vand.u32 %v334, 4294901760
    %v336 = vsub.f32 %v334, %v335
    %v337 = vand.u32 %v336, 4294901760
    %338 = vmatpush1.msra.mxu0 %v337
    %v339 = vand.u32 %v147, 4294901760
    %v340 = vsub.f32 %v147, %v339
    %v341 = vand.u32 %v340, 4294901760
    %v342 = vsub.f32 %v340, %v341
    %v343 = vand.u32 %v342, 4294901760
    %344 = vmatprep.subr.mxu0 %v343
    %v345 = vand.u32 %v146, 4294901760
    %v346 = vsub.f32 %v146, %v345
    %v347 = vand.u32 %v346, 4294901760
    %v348 = vsub.f32 %v346, %v347
    %v349 = vand.u32 %v348, 4294901760
    %350 = vmatpush1.msra.mxu0 %v349
    %v351 = vand.u32 %v140, 4294901760
    %v352 = vsub.f32 %v140, %v351
    %v353 = vand.u32 %v352, 4294901760
    %v354 = vsub.f32 %v352, %v353
    %v355 = vand.u32 %v354, 4294901760
    %356 = vmatprep.subr.mxu0 %v355
    %v357 = vand.u32 %v139, 4294901760
    %v358 = vsub.f32 %v139, %v357
    %v359 = vand.u32 %v358, 4294901760
    %v360 = vsub.f32 %v358, %v359
    %v361 = vand.u32 %v360, 4294901760
    %362 = vmatpush1.msra.mxu0 %v361
    %v363 = vand.u32 %v133, 4294901760
    %v364 = vsub.f32 %v133, %v363
    %v365 = vand.u32 %v364, 4294901760
    %v366 = vsub.f32 %v364, %v365
    %v367 = vand.u32 %v366, 4294901760
    %368 = vmatprep.subr.mxu0 %v367
    %v369 = vand.u32 %v132, 4294901760
    %v370 = vsub.f32 %v132, %v369
    %v371 = vand.u32 %v370, 4294901760
    %v372 = vsub.f32 %v370, %v371
    %v373 = vand.u32 %v372, 4294901760
    %374 = vmatpush1.msra.mxu0 %v373
    %v375 = vand.u32 %v126, 4294901760
    %v376 = vsub.f32 %v126, %v375
    %v377 = vand.u32 %v376, 4294901760
    %v378 = vsub.f32 %v376, %v377
    %v379 = vand.u32 %v378, 4294901760
    %380 = vmatprep.subr.mxu0 %v379
    %v381 = vand.u32 %v125, 4294901760
    %v382 = vsub.f32 %v125, %v381
    %v383 = vand.u32 %v382, 4294901760
    %v384 = vsub.f32 %v382, %v383
    %v385 = vand.u32 %v384, 4294901760
    %386 = vmatpush1.msra.mxu0 %v385
    %v387 = vand.u32 %v119, 4294901760
    %v388 = vsub.f32 %v119, %v387
    %v389 = vand.u32 %v388, 4294901760
    %v390 = vsub.f32 %v388, %v389
    %v391 = vand.u32 %v390, 4294901760
    %392 = vmatprep.subr.mxu0 %v391
    %v393 = vand.u32 %v118, 4294901760
    %v394 = vsub.f32 %v118, %v393
    %v395 = vand.u32 %v394, 4294901760
    %v396 = vsub.f32 %v394, %v395
    %v397 = vand.u32 %v396, 4294901760
    %398 = vmatpush1.msra.mxu0 %v397
    %v399 = vand.u32 %v112, 4294901760
    %v400 = vsub.f32 %v112, %v399
    %v401 = vand.u32 %v400, 4294901760
    %v402 = vsub.f32 %v400, %v401
    %v403 = vand.u32 %v402, 4294901760
    %404 = vmatprep.subr.mxu0 %v403
    %v405 = vand.u32 %v111, 4294901760
    %v406 = vsub.f32 %v111, %v405
    %v407 = vand.u32 %v406, 4294901760
    %v408 = vsub.f32 %v406, %v407
    %v409 = vand.u32 %v408, 4294901760
    %410 = vmatpush1.msra.mxu0 %v409
    %v411 = vand.u32 %v105, 4294901760
    %v412 = vsub.f32 %v105, %v411
    %v413 = vand.u32 %v412, 4294901760
    %v414 = vsub.f32 %v412, %v413
    %v415 = vand.u32 %v414, 4294901760
    %416 = vmatprep.subr.mxu0 %v415
    %v417 = vand.u32 %v104, 4294901760
    %v418 = vsub.f32 %v104, %v417
    %v419 = vand.u32 %v418, 4294901760
    %v420 = vsub.f32 %v418, %v419
    %v421 = vand.u32 %v420, 4294901760
    %422 = vmatpush1.msra.mxu0 %v421
    %v423 = vand.u32 %v98, 4294901760
    %v424 = vsub.f32 %v98, %v423
    %v425 = vand.u32 %v424, 4294901760
    %v426 = vsub.f32 %v424, %v425
    %v427 = vand.u32 %v426, 4294901760
    %428 = vmatprep.subr.mxu0 %v427
    %v429 = vand.u32 %v97, 4294901760
    %v430 = vsub.f32 %v97, %v429
    %v431 = vand.u32 %v430, 4294901760
    %v432 = vsub.f32 %v430, %v431
    %v433 = vand.u32 %v432, 4294901760
    %434 = vmatpush1.msra.mxu0 %v433
    %435 = vmatprep.subr.mxu0 0.0
    %436 = vmatpush2.msra.mxu0 0.0
    %437 = vmatprep.subr.mxu0 0.0
    %438 = vmatpush2.msra.mxu0 0.0
    %439 = vmatprep.subr.mxu0 0.0
    %440 = vmatpush2.msra.mxu0 0.0
    %441 = vmatprep.subr.mxu0 0.0
    %442 = vmatpush2.msra.mxu0 0.0
    %443 = vmatprep.subr.mxu0 0.0
    %444 = vmatpush2.msra.mxu0 0.0
    %445 = vmatprep.subr.mxu0 0.0
    %446 = vmatpush2.msra.mxu0 0.0
    %447 = vmatprep.subr.mxu0 0.0
    %448 = vmatpush2.msra.mxu0 0.0
    %449 = vmatprep.subr.mxu0 0.0
    %450 = vmatpush2.msra.mxu0 0.0
    %451 = vmatprep.subr.mxu0 0.0
    %452 = vmatpush2.msra.mxu0 0.0
    %453 = vmatprep.subr.mxu0 0.0
    %454 = vmatpush2.msra.mxu0 0.0
    %455 = vmatprep.subr.mxu0 0.0
    %456 = vmatpush2.msra.mxu0 0.0
    %457 = vmatprep.subr.mxu0 0.0
    %458 = vmatpush2.msra.mxu0 0.0
    %459 = vmatprep.subr.mxu0 0.0
    %460 = vmatpush2.msra.mxu0 0.0
    %461 = vmatprep.subr.mxu0 0.0
    %462 = vmatpush2.msra.mxu0 0.0
    %463 = vmatprep.subr.mxu0 0.0
    %464 = vmatpush2.msra.mxu0 0.0
    %465 = vmatprep.subr.mxu0 0.0
    %466 = vmatpush2.msra.mxu0 0.0
    %467 = vmatprep.mubr.f32.mxu0 0.0
    %v468 = vand.u32 %v161, 4294901760
    %469 = vmatmul.mubr.f32.gmra.mxu0 %v468
    %v470 = vpop.f32.mrf.mxu0
    %v471 = vadd.f32 %v265, %v470
    %v472 = vpop.f32.mrf.mxu0
    %v473 = vadd.f32 %v267, %v472
    %474 = vmatprep.mubr.f32.mxu0 0.0
    %v475 = vand.u32 %v164, 4294901760
    %476 = vmatmul.mubr.f32.gmra.mxu0 %v475
    %v477 = vpop.f32.mrf.mxu0
    %v478 = vadd.f32 %v276, %v477
    %v479 = vpop.f32.mrf.mxu0
    %v480 = vadd.f32 %v278, %v479
    %481 = vmatprep.mubr.f32.mxu0 0.0
    %v482 = vand.u32 %v167, 4294901760
    %483 = vmatmul.mubr.f32.gmra.mxu0 %v482
    %v484 = vpop.f32.mrf.mxu0
    %v485 = vadd.f32 %v287, %v484
    %v486 = vpop.f32.mrf.mxu0
    %v487 = vadd.f32 %v289, %v486
    %488 = vmatprep.mubr.f32.mxu0 0.0
    %v489 = vand.u32 %v170, 4294901760
    %490 = vmatmul.mubr.f32.gmra.mxu0 %v489
    %v491 = vpop.f32.mrf.mxu0
    %v492 = vadd.f32 %v298, %v491
    %v493 = vpop.f32.mrf.mxu0
    %v494 = vadd.f32 %v300, %v493
    %495 = vmatprep.mubr.f32.mxu0 0.0
    %v496 = vand.u32 %v173, 4294901760
    %497 = vmatmul.mubr.f32.gmra.mxu0 %v496
    %v498 = vpop.f32.mrf.mxu0
    %v499 = vadd.f32 %v309, %v498
    %v500 = vpop.f32.mrf.mxu0
    %v501 = vadd.f32 %v311, %v500
    %502 = vdwg.mxu0
    %503 = vmatprep.subr.mxu0 0.0
    %504 = vmatpush1.msra.mxu0 0.0
    %505 = vmatprep.subr.mxu0 0.0
    %506 = vmatpush1.msra.mxu0 0.0
    %507 = vmatprep.subr.mxu0 0.0
    %508 = vmatpush1.msra.mxu0 0.0
    %509 = vmatprep.subr.mxu0 0.0
    %510 = vmatpush1.msra.mxu0 0.0
    %511 = vmatprep.subr.mxu0 0.0
    %512 = vmatpush1.msra.mxu0 0.0
    %513 = vmatprep.subr.mxu0 0.0
    %514 = vmatpush1.msra.mxu0 0.0
    %515 = vmatprep.subr.mxu0 0.0
    %516 = vmatpush1.msra.mxu0 0.0
    %v517 = vand.u32 %v154, 4294901760
    %v518 = vsub.f32 %v154, %v517
    %519 = vmatprep.subr.mxu0 %v518
    %v520 = vand.u32 %v153, 4294901760
    %v521 = vsub.f32 %v153, %v520
    %522 = vmatpush1.msra.mxu0 %v521
    %v523 = vand.u32 %v147, 4294901760
    %v524 = vsub.f32 %v147, %v523
    %525 = vmatprep.subr.mxu0 %v524
    %v526 = vand.u32 %v146, 4294901760
    %v527 = vsub.f32 %v146, %v526
    %528 = vmatpush1.msra.mxu0 %v527
    %v529 = vand.u32 %v140, 4294901760
    %v530 = vsub.f32 %v140, %v529
    %531 = vmatprep.subr.mxu0 %v530
    %v532 = vand.u32 %v139, 4294901760
    %v533 = vsub.f32 %v139, %v532
    %534 = vmatpush1.msra.mxu0 %v533
    %v535 = vand.u32 %v133, 4294901760
    %v536 = vsub.f32 %v133, %v535
    %537 = vmatprep.subr.mxu0 %v536
    %v538 = vand.u32 %v132, 4294901760
    %v539 = vsub.f32 %v132, %v538
    %540 = vmatpush1.msra.mxu0 %v539
    %v541 = vand.u32 %v126, 4294901760
    %v542 = vsub.f32 %v126, %v541
    %543 = vmatprep.subr.mxu0 %v542
    %v544 = vand.u32 %v125, 4294901760
    %v545 = vsub.f32 %v125, %v544
    %546 = vmatpush1.msra.mxu0 %v545
    %v547 = vand.u32 %v119, 4294901760
    %v548 = vsub.f32 %v119, %v547
    %549 = vmatprep.subr.mxu0 %v548
    %v550 = vand.u32 %v118, 4294901760
    %v551 = vsub.f32 %v118, %v550
    %552 = vmatpush1.msra.mxu0 %v551
    %v553 = vand.u32 %v112, 4294901760
    %v554 = vsub.f32 %v112, %v553
    %555 = vmatprep.subr.mxu0 %v554
    %v556 = vand.u32 %v111, 4294901760
    %v557 = vsub.f32 %v111, %v556
    %558 = vmatpush1.msra.mxu0 %v557
    %v559 = vand.u32 %v105, 4294901760
    %v560 = vsub.f32 %v105, %v559
    %561 = vmatprep.subr.mxu0 %v560
    %v562 = vand.u32 %v104, 4294901760
    %v563 = vsub.f32 %v104, %v562
    %564 = vmatpush1.msra.mxu0 %v563
    %v565 = vand.u32 %v98, 4294901760
    %v566 = vsub.f32 %v98, %v565
    %567 = vmatprep.subr.mxu0 %v566
    %v568 = vand.u32 %v97, 4294901760
    %v569 = vsub.f32 %v97, %v568
    %570 = vmatpush1.msra.mxu0 %v569
    %571 = vmatprep.subr.mxu0 0.0
    %572 = vmatpush2.msra.mxu0 0.0
    %573 = vmatprep.subr.mxu0 0.0
    %574 = vmatpush2.msra.mxu0 0.0
    %575 = vmatprep.subr.mxu0 0.0
    %576 = vmatpush2.msra.mxu0 0.0
    %577 = vmatprep.subr.mxu0 0.0
    %578 = vmatpush2.msra.mxu0 0.0
    %579 = vmatprep.subr.mxu0 0.0
    %580 = vmatpush2.msra.mxu0 0.0
    %581 = vmatprep.subr.mxu0 0.0
    %582 = vmatpush2.msra.mxu0 0.0
    %583 = vmatprep.subr.mxu0 0.0
    %584 = vmatpush2.msra.mxu0 0.0
    %585 = vmatprep.subr.mxu0 0.0
    %586 = vmatpush2.msra.mxu0 0.0
    %587 = vmatprep.subr.mxu0 0.0
    %588 = vmatpush2.msra.mxu0 0.0
    %589 = vmatprep.subr.mxu0 0.0
    %590 = vmatpush2.msra.mxu0 0.0
    %591 = vmatprep.subr.mxu0 0.0
    %592 = vmatpush2.msra.mxu0 0.0
    %593 = vmatprep.subr.mxu0 0.0
    %594 = vmatpush2.msra.mxu0 0.0
    %595 = vmatprep.subr.mxu0 0.0
    %596 = vmatpush2.msra.mxu0 0.0
    %597 = vmatprep.subr.mxu0 0.0
    %598 = vmatpush2.msra.mxu0 0.0
    %599 = vmatprep.subr.mxu0 0.0
    %600 = vmatpush2.msra.mxu0 0.0
    %601 = vmatprep.subr.mxu0 0.0
    %602 = vmatpush2.msra.mxu0 0.0
    %603 = vmatprep.mubr.f32.mxu0 0.0
    %v604 = vand.u32 %v161, 4294901760
    %v605 = vsub.f32 %v161, %v604
    %606 = vmatmul.mubr.f32.gmra.mxu0 %v605
    %v607 = vpop.f32.mrf.mxu0
    %v608 = vadd.f32 %v471, %v607
    %v609 = vpop.f32.mrf.mxu0
    %v610 = vadd.f32 %v473, %v609
    %611 = vmatprep.mubr.f32.mxu0 0.0
    %v612 = vand.u32 %v164, 4294901760
    %v613 = vsub.f32 %v164, %v612
    %614 = vmatmul.mubr.f32.gmra.mxu0 %v613
    %v615 = vpop.f32.mrf.mxu0
    %v616 = vadd.f32 %v478, %v615
    %v617 = vpop.f32.mrf.mxu0
    %v618 = vadd.f32 %v480, %v617
    %619 = vmatprep.mubr.f32.mxu0 0.0
    %v620 = vand.u32 %v167, 4294901760
    %v621 = vsub.f32 %v167, %v620
    %622 = vmatmul.mubr.f32.gmra.mxu0 %v621
    %v623 = vpop.f32.mrf.mxu0
    %v624 = vadd.f32 %v485, %v623
    %v625 = vpop.f32.mrf.mxu0
    %v626 = vadd.f32 %v487, %v625
    %627 = vmatprep.mubr.f32.mxu0 0.0
    %v628 = vand.u32 %v170, 4294901760
    %v629 = vsub.f32 %v170, %v628
    %630 = vmatmul.mubr.f32.gmra.mxu0 %v629
    %v631 = vpop.f32.mrf.mxu0
    %v632 = vadd.f32 %v492, %v631
    %v633 = vpop.f32.mrf.mxu0
    %v634 = vadd.f32 %v494, %v633
    %635 = vmatprep.mubr.f32.mxu0 0.0
    %v636 = vand.u32 %v173, 4294901760
    %v637 = vsub.f32 %v173, %v636
    %638 = vmatmul.mubr.f32.gmra.mxu0 %v637
    %v639 = vpop.f32.mrf.mxu0
    %v640 = vadd.f32 %v499, %v639
    %v641 = vpop.f32.mrf.mxu0
    %v642 = vadd.f32 %v501, %v641
    %643 = vdwg.mxu0
    %644 = vmatprep.subr.mxu0 0.0
    %645 = vmatpush1.msra.mxu0 0.0
    %646 = vmatprep.subr.mxu0 0.0
    %647 = vmatpush1.msra.mxu0 0.0
    %648 = vmatprep.subr.mxu0 0.0
    %649 = vmatpush1.msra.mxu0 0.0
    %650 = vmatprep.subr.mxu0 0.0
    %651 = vmatpush1.msra.mxu0 0.0
    %652 = vmatprep.subr.mxu0 0.0
    %653 = vmatpush1.msra.mxu0 0.0
    %654 = vmatprep.subr.mxu0 0.0
    %655 = vmatpush1.msra.mxu0 0.0
    %656 = vmatprep.subr.mxu0 0.0
    %657 = vmatpush1.msra.mxu0 0.0
    %v658 = vand.u32 %v154, 4294901760
    %659 = vmatprep.subr.mxu0 %v658
    %v660 = vand.u32 %v153, 4294901760
    %661 = vmatpush1.msra.mxu0 %v660
    %v662 = vand.u32 %v147, 4294901760
    %663 = vmatprep.subr.mxu0 %v662
    %v664 = vand.u32 %v146, 4294901760
    %665 = vmatpush1.msra.mxu0 %v664
    %v666 = vand.u32 %v140, 4294901760
    %667 = vmatprep.subr.mxu0 %v666
    %v668 = vand.u32 %v139, 4294901760
    %669 = vmatpush1.msra.mxu0 %v668
    %v670 = vand.u32 %v133, 4294901760
    %671 = vmatprep.subr.mxu0 %v670
    %v672 = vand.u32 %v132, 4294901760
    %673 = vmatpush1.msra.mxu0 %v672
    %v674 = vand.u32 %v126, 4294901760
    %675 = vmatprep.subr.mxu0 %v674
    %v676 = vand.u32 %v125, 4294901760
    %677 = vmatpush1.msra.mxu0 %v676
    %v678 = vand.u32 %v119, 4294901760
    %679 = vmatprep.subr.mxu0 %v678
    %v680 = vand.u32 %v118, 4294901760
    %681 = vmatpush1.msra.mxu0 %v680
    %v682 = vand.u32 %v112, 4294901760
    %683 = vmatprep.subr.mxu0 %v682
    %v684 = vand.u32 %v111, 4294901760
    %685 = vmatpush1.msra.mxu0 %v684
    %v686 = vand.u32 %v105, 4294901760
    %687 = vmatprep.subr.mxu0 %v686
    %v688 = vand.u32 %v104, 4294901760
    %689 = vmatpush1.msra.mxu0 %v688
    %v690 = vand.u32 %v98, 4294901760
    %691 = vmatprep.subr.mxu0 %v690
    %v692 = vand.u32 %v97, 4294901760
    %693 = vmatpush1.msra.mxu0 %v692
    %694 = vmatprep.subr.mxu0 0.0
    %695 = vmatpush2.msra.mxu0 0.0
    %696 = vmatprep.subr.mxu0 0.0
    %697 = vmatpush2.msra.mxu0 0.0
    %698 = vmatprep.subr.mxu0 0.0
    %699 = vmatpush2.msra.mxu0 0.0
    %700 = vmatprep.subr.mxu0 0.0
    %701 = vmatpush2.msra.mxu0 0.0
    %702 = vmatprep.subr.mxu0 0.0
    %703 = vmatpush2.msra.mxu0 0.0
    %704 = vmatprep.subr.mxu0 0.0
    %705 = vmatpush2.msra.mxu0 0.0
    %706 = vmatprep.subr.mxu0 0.0
    %707 = vmatpush2.msra.mxu0 0.0
    %708 = vmatprep.subr.mxu0 0.0
    %709 = vmatpush2.msra.mxu0 0.0
    %710 = vmatprep.subr.mxu0 0.0
    %711 = vmatpush2.msra.mxu0 0.0
    %712 = vmatprep.subr.mxu0 0.0
    %713 = vmatpush2.msra.mxu0 0.0
    %714 = vmatprep.subr.mxu0 0.0
    %715 = vmatpush2.msra.mxu0 0.0
    %716 = vmatprep.subr.mxu0 0.0
    %717 = vmatpush2.msra.mxu0 0.0
    %718 = vmatprep.subr.mxu0 0.0
    %719 = vmatpush2.msra.mxu0 0.0
    %720 = vmatprep.subr.mxu0 0.0
    %721 = vmatpush2.msra.mxu0 0.0
    %722 = vmatprep.subr.mxu0 0.0
    %723 = vmatpush2.msra.mxu0 0.0
    %724 = vmatprep.subr.mxu0 0.0
    %725 = vmatpush2.msra.mxu0 0.0
    %726 = vmatprep.mubr.f32.mxu0 0.0
    %v727 = vand.u32 %v161, 4294901760
    %v728 = vsub.f32 %v161, %v727
    %v729 = vand.u32 %v728, 4294901760
    %730 = vmatmul.mubr.f32.gmra.mxu0 %v729
    %v731 = vpop.f32.mrf.mxu0
    %v732 = vadd.f32 %v608, %v731
    %v733 = vpop.f32.mrf.mxu0
    %v734 = vadd.f32 %v610, %v733
    %735 = vmatprep.mubr.f32.mxu0 0.0
    %v736 = vand.u32 %v164, 4294901760
    %v737 = vsub.f32 %v164, %v736
    %v738 = vand.u32 %v737, 4294901760
    %739 = vmatmul.mubr.f32.gmra.mxu0 %v738
    %v740 = vpop.f32.mrf.mxu0
    %v741 = vadd.f32 %v616, %v740
    %v742 = vpop.f32.mrf.mxu0
    %v743 = vadd.f32 %v618, %v742
    %744 = vmatprep.mubr.f32.mxu0 0.0
    %v745 = vand.u32 %v167, 4294901760
    %v746 = vsub.f32 %v167, %v745
    %v747 = vand.u32 %v746, 4294901760
    %748 = vmatmul.mubr.f32.gmra.mxu0 %v747
    %v749 = vpop.f32.mrf.mxu0
    %v750 = vadd.f32 %v624, %v749
    %v751 = vpop.f32.mrf.mxu0
    %v752 = vadd.f32 %v626, %v751
    %753 = vmatprep.mubr.f32.mxu0 0.0
    %v754 = vand.u32 %v170, 4294901760
    %v755 = vsub.f32 %v170, %v754
    %v756 = vand.u32 %v755, 4294901760
    %757 = vmatmul.mubr.f32.gmra.mxu0 %v756
    %v758 = vpop.f32.mrf.mxu0
    %v759 = vadd.f32 %v632, %v758
    %v760 = vpop.f32.mrf.mxu0
    %v761 = vadd.f32 %v634, %v760
    %762 = vmatprep.mubr.f32.mxu0 0.0
    %v763 = vand.u32 %v173, 4294901760
    %v764 = vsub.f32 %v173, %v763
    %v765 = vand.u32 %v764, 4294901760
    %766 = vmatmul.mubr.f32.gmra.mxu0 %v765
    %v767 = vpop.f32.mrf.mxu0
    %v768 = vadd.f32 %v640, %v767
    %v769 = vpop.f32.mrf.mxu0
    %v770 = vadd.f32 %v642, %v769
    %771 = vdwg.mxu0
    %772 = vmatprep.subr.mxu0 0.0
    %773 = vmatpush1.msra.mxu0 0.0
    %774 = vmatprep.subr.mxu0 0.0
    %775 = vmatpush1.msra.mxu0 0.0
    %776 = vmatprep.subr.mxu0 0.0
    %777 = vmatpush1.msra.mxu0 0.0
    %778 = vmatprep.subr.mxu0 0.0
    %779 = vmatpush1.msra.mxu0 0.0
    %780 = vmatprep.subr.mxu0 0.0
    %781 = vmatpush1.msra.mxu0 0.0
    %782 = vmatprep.subr.mxu0 0.0
    %783 = vmatpush1.msra.mxu0 0.0
    %784 = vmatprep.subr.mxu0 0.0
    %785 = vmatpush1.msra.mxu0 0.0
    %v786 = vand.u32 %v154, 4294901760
    %v787 = vsub.f32 %v154, %v786
    %v788 = vand.u32 %v787, 4294901760
    %789 = vmatprep.subr.mxu0 %v788
    %v790 = vand.u32 %v153, 4294901760
    %v791 = vsub.f32 %v153, %v790
    %v792 = vand.u32 %v791, 4294901760
    %793 = vmatpush1.msra.mxu0 %v792
    %v794 = vand.u32 %v147, 4294901760
    %v795 = vsub.f32 %v147, %v794
    %v796 = vand.u32 %v795, 4294901760
    %797 = vmatprep.subr.mxu0 %v796
    %v798 = vand.u32 %v146, 4294901760
    %v799 = vsub.f32 %v146, %v798
    %v800 = vand.u32 %v799, 4294901760
    %801 = vmatpush1.msra.mxu0 %v800
    %v802 = vand.u32 %v140, 4294901760
    %v803 = vsub.f32 %v140, %v802
    %v804 = vand.u32 %v803, 4294901760
    %805 = vmatprep.subr.mxu0 %v804
    %v806 = vand.u32 %v139, 4294901760
    %v807 = vsub.f32 %v139, %v806
    %v808 = vand.u32 %v807, 4294901760
    %809 = vmatpush1.msra.mxu0 %v808
    %v810 = vand.u32 %v133, 4294901760
    %v811 = vsub.f32 %v133, %v810
    %v812 = vand.u32 %v811, 4294901760
    %813 = vmatprep.subr.mxu0 %v812
    %v814 = vand.u32 %v132, 4294901760
    %v815 = vsub.f32 %v132, %v814
    %v816 = vand.u32 %v815, 4294901760
    %817 = vmatpush1.msra.mxu0 %v816
    %v818 = vand.u32 %v126, 4294901760
    %v819 = vsub.f32 %v126, %v818
    %v820 = vand.u32 %v819, 4294901760
    %821 = vmatprep.subr.mxu0 %v820
    %v822 = vand.u32 %v125, 4294901760
    %v823 = vsub.f32 %v125, %v822
    %v824 = vand.u32 %v823, 4294901760
    %825 = vmatpush1.msra.mxu0 %v824
    %v826 = vand.u32 %v119, 4294901760
    %v827 = vsub.f32 %v119, %v826
    %v828 = vand.u32 %v827, 4294901760
    %829 = vmatprep.subr.mxu0 %v828
    %v830 = vand.u32 %v118, 4294901760
    %v831 = vsub.f32 %v118, %v830
    %v832 = vand.u32 %v831, 4294901760
    %833 = vmatpush1.msra.mxu0 %v832
    %v834 = vand.u32 %v112, 4294901760
    %v835 = vsub.f32 %v112, %v834
    %v836 = vand.u32 %v835, 4294901760
    %837 = vmatprep.subr.mxu0 %v836
    %v838 = vand.u32 %v111, 4294901760
    %v839 = vsub.f32 %v111, %v838
    %v840 = vand.u32 %v839, 4294901760
    %841 = vmatpush1.msra.mxu0 %v840
    %v842 = vand.u32 %v105, 4294901760
    %v843 = vsub.f32 %v105, %v842
    %v844 = vand.u32 %v843, 4294901760
    %845 = vmatprep.subr.mxu0 %v844
    %v846 = vand.u32 %v104, 4294901760
    %v847 = vsub.f32 %v104, %v846
    %v848 = vand.u32 %v847, 4294901760
    %849 = vmatpush1.msra.mxu0 %v848
    %v850 = vand.u32 %v98, 4294901760
    %v851 = vsub.f32 %v98, %v850
    %v852 = vand.u32 %v851, 4294901760
    %853 = vmatprep.subr.mxu0 %v852
    %v854 = vand.u32 %v97, 4294901760
    %v855 = vsub.f32 %v97, %v854
    %v856 = vand.u32 %v855, 4294901760
    %857 = vmatpush1.msra.mxu0 %v856
    %858 = vmatprep.subr.mxu0 0.0
    %859 = vmatpush2.msra.mxu0 0.0
    %860 = vmatprep.subr.mxu0 0.0
    %861 = vmatpush2.msra.mxu0 0.0
    %862 = vmatprep.subr.mxu0 0.0
    %863 = vmatpush2.msra.mxu0 0.0
    %864 = vmatprep.subr.mxu0 0.0
    %865 = vmatpush2.msra.mxu0 0.0
    %866 = vmatprep.subr.mxu0 0.0
    %867 = vmatpush2.msra.mxu0 0.0
    %868 = vmatprep.subr.mxu0 0.0
    %869 = vmatpush2.msra.mxu0 0.0
    %870 = vmatprep.subr.mxu0 0.0
    %871 = vmatpush2.msra.mxu0 0.0
    %872 = vmatprep.subr.mxu0 0.0
    %873 = vmatpush2.msra.mxu0 0.0
    %874 = vmatprep.subr.mxu0 0.0
    %875 = vmatpush2.msra.mxu0 0.0
    %876 = vmatprep.subr.mxu0 0.0
    %877 = vmatpush2.msra.mxu0 0.0
    %878 = vmatprep.subr.mxu0 0.0
    %879 = vmatpush2.msra.mxu0 0.0
    %880 = vmatprep.subr.mxu0 0.0
    %881 = vmatpush2.msra.mxu0 0.0
    %882 = vmatprep.subr.mxu0 0.0
    %883 = vmatpush2.msra.mxu0 0.0
    %884 = vmatprep.subr.mxu0 0.0
    %885 = vmatpush2.msra.mxu0 0.0
    %886 = vmatprep.subr.mxu0 0.0
    %887 = vmatpush2.msra.mxu0 0.0
    %888 = vmatprep.subr.mxu0 0.0
    %889 = vmatpush2.msra.mxu0 0.0
    %890 = vmatprep.mubr.f32.mxu0 0.0
    %v891 = vand.u32 %v161, 4294901760
    %892 = vmatmul.mubr.f32.gmra.mxu0 %v891
    %v893 = vpop.f32.mrf.mxu0
    %v894 = vadd.f32 %v732, %v893
    %v895 = vpop.f32.mrf.mxu0
    %v896 = vadd.f32 %v734, %v895
    %897 = vmatprep.mubr.f32.mxu0 0.0
    %v898 = vand.u32 %v164, 4294901760
    %899 = vmatmul.mubr.f32.gmra.mxu0 %v898
    %v900 = vpop.f32.mrf.mxu0
    %v901 = vadd.f32 %v741, %v900
    %v902 = vpop.f32.mrf.mxu0
    %v903 = vadd.f32 %v743, %v902
    %904 = vmatprep.mubr.f32.mxu0 0.0
    %v905 = vand.u32 %v167, 4294901760
    %906 = vmatmul.mubr.f32.gmra.mxu0 %v905
    %v907 = vpop.f32.mrf.mxu0
    %v908 = vadd.f32 %v750, %v907
    %v909 = vpop.f32.mrf.mxu0
    %v910 = vadd.f32 %v752, %v909
    %911 = vmatprep.mubr.f32.mxu0 0.0
    %v912 = vand.u32 %v170, 4294901760
    %913 = vmatmul.mubr.f32.gmra.mxu0 %v912
    %v914 = vpop.f32.mrf.mxu0
    %v915 = vadd.f32 %v759, %v914
    %v916 = vpop.f32.mrf.mxu0
    %v917 = vadd.f32 %v761, %v916
    %918 = vmatprep.mubr.f32.mxu0 0.0
    %v919 = vand.u32 %v173, 4294901760
    %920 = vmatmul.mubr.f32.gmra.mxu0 %v919
    %v921 = vpop.f32.mrf.mxu0
    %v922 = vadd.f32 %v768, %v921
    %v923 = vpop.f32.mrf.mxu0
    %v924 = vadd.f32 %v770, %v923
    %925 = vdwg.mxu0
    %926 = vmatprep.subr.mxu0 0.0
    %927 = vmatpush1.msra.mxu0 0.0
    %928 = vmatprep.subr.mxu0 0.0
    %929 = vmatpush1.msra.mxu0 0.0
    %930 = vmatprep.subr.mxu0 0.0
    %931 = vmatpush1.msra.mxu0 0.0
    %932 = vmatprep.subr.mxu0 0.0
    %933 = vmatpush1.msra.mxu0 0.0
    %934 = vmatprep.subr.mxu0 0.0
    %935 = vmatpush1.msra.mxu0 0.0
    %936 = vmatprep.subr.mxu0 0.0
    %937 = vmatpush1.msra.mxu0 0.0
    %938 = vmatprep.subr.mxu0 0.0
    %939 = vmatpush1.msra.mxu0 0.0
    %v940 = vand.u32 %v154, 4294901760
    %941 = vmatprep.subr.mxu0 %v940
    %v942 = vand.u32 %v153, 4294901760
    %943 = vmatpush1.msra.mxu0 %v942
    %v944 = vand.u32 %v147, 4294901760
    %945 = vmatprep.subr.mxu0 %v944
    %v946 = vand.u32 %v146, 4294901760
    %947 = vmatpush1.msra.mxu0 %v946
    %v948 = vand.u32 %v140, 4294901760
    %949 = vmatprep.subr.mxu0 %v948
    %v950 = vand.u32 %v139, 4294901760
    %951 = vmatpush1.msra.mxu0 %v950
    %v952 = vand.u32 %v133, 4294901760
    %953 = vmatprep.subr.mxu0 %v952
    %v954 = vand.u32 %v132, 4294901760
    %955 = vmatpush1.msra.mxu0 %v954
    %v956 = vand.u32 %v126, 4294901760
    %957 = vmatprep.subr.mxu0 %v956
    %v958 = vand.u32 %v125, 4294901760
    %959 = vmatpush1.msra.mxu0 %v958
    %v960 = vand.u32 %v119, 4294901760
    %961 = vmatprep.subr.mxu0 %v960
    %v962 = vand.u32 %v118, 4294901760
    %963 = vmatpush1.msra.mxu0 %v962
    %v964 = vand.u32 %v112, 4294901760
    %965 = vmatprep.subr.mxu0 %v964
    %v966 = vand.u32 %v111, 4294901760
    %967 = vmatpush1.msra.mxu0 %v966
    %v968 = vand.u32 %v105, 4294901760
    %969 = vmatprep.subr.mxu0 %v968
    %v970 = vand.u32 %v104, 4294901760
    %971 = vmatpush1.msra.mxu0 %v970
    %v972 = vand.u32 %v98, 4294901760
    %973 = vmatprep.subr.mxu0 %v972
    %v974 = vand.u32 %v97, 4294901760
    %975 = vmatpush1.msra.mxu0 %v974
    %976 = vmatprep.subr.mxu0 0.0
    %977 = vmatpush2.msra.mxu0 0.0
    %978 = vmatprep.subr.mxu0 0.0
    %979 = vmatpush2.msra.mxu0 0.0
    %980 = vmatprep.subr.mxu0 0.0
    %981 = vmatpush2.msra.mxu0 0.0
    %982 = vmatprep.subr.mxu0 0.0
    %983 = vmatpush2.msra.mxu0 0.0
    %984 = vmatprep.subr.mxu0 0.0
    %985 = vmatpush2.msra.mxu0 0.0
    %986 = vmatprep.subr.mxu0 0.0
    %987 = vmatpush2.msra.mxu0 0.0
    %988 = vmatprep.subr.mxu0 0.0
    %989 = vmatpush2.msra.mxu0 0.0
    %990 = vmatprep.subr.mxu0 0.0
    %991 = vmatpush2.msra.mxu0 0.0
    %992 = vmatprep.subr.mxu0 0.0
    %993 = vmatpush2.msra.mxu0 0.0
    %994 = vmatprep.subr.mxu0 0.0
    %995 = vmatpush2.msra.mxu0 0.0
    %996 = vmatprep.subr.mxu0 0.0
    %997 = vmatpush2.msra.mxu0 0.0
    %998 = vmatprep.subr.mxu0 0.0
    %999 = vmatpush2.msra.mxu0 0.0
    %1000 = vmatprep.subr.mxu0 0.0
    %1001 = vmatpush2.msra.mxu0 0.0
    %1002 = vmatprep.subr.mxu0 0.0
    %1003 = vmatpush2.msra.mxu0 0.0
    %1004 = vmatprep.subr.mxu0 0.0
    %1005 = vmatpush2.msra.mxu0 0.0
    %1006 = vmatprep.subr.mxu0 0.0
    %1007 = vmatpush2.msra.mxu0 0.0
    %1008 = vmatprep.mubr.f32.mxu0 0.0
    %v1009 = vand.u32 %v161, 4294901760
    %1010 = vmatmul.mubr.f32.gmra.mxu0 %v1009
    %v1011 = vpop.f32.mrf.mxu0
    %v1012 = vadd.f32 %v894, %v1011
    %v1013 = vpop.f32.mrf.mxu0
    %v1014 = vadd.f32 %v896, %v1013
    %1015 = vmatprep.mubr.f32.mxu0 0.0
    %v1016 = vand.u32 %v164, 4294901760
    %1017 = vmatmul.mubr.f32.gmra.mxu0 %v1016
    %v1018 = vpop.f32.mrf.mxu0
    %v1019 = vadd.f32 %v901, %v1018
    %v1020 = vpop.f32.mrf.mxu0
    %v1021 = vadd.f32 %v903, %v1020
    %1022 = vmatprep.mubr.f32.mxu0 0.0
    %v1023 = vand.u32 %v167, 4294901760
    %1024 = vmatmul.mubr.f32.gmra.mxu0 %v1023
    %v1025 = vpop.f32.mrf.mxu0
    %v1026 = vadd.f32 %v908, %v1025
    %v1027 = vpop.f32.mrf.mxu0
    %v1028 = vadd.f32 %v910, %v1027
    %1029 = vmatprep.mubr.f32.mxu0 0.0
    %v1030 = vand.u32 %v170, 4294901760
    %1031 = vmatmul.mubr.f32.gmra.mxu0 %v1030
    %v1032 = vpop.f32.mrf.mxu0
    %v1033 = vadd.f32 %v915, %v1032
    %v1034 = vpop.f32.mrf.mxu0
    %v1035 = vadd.f32 %v917, %v1034
    %1036 = vmatprep.mubr.f32.mxu0 0.0
    %v1037 = vand.u32 %v173, 4294901760
    %1038 = vmatmul.mubr.f32.gmra.mxu0 %v1037
    %v1039 = vpop.f32.mrf.mxu0
    %v1040 = vadd.f32 %v922, %v1039
    %v1041 = vpop.f32.mrf.mxu0
    %v1042 = vadd.f32 %v924, %v1041
    %1043 = vdwg.mxu0
    %1044 = vmatprep.subr.mxu0 0.0
    %1045 = vmatpush1.msra.mxu0 0.0
    %1046 = vmatprep.subr.mxu0 0.0
    %1047 = vmatpush1.msra.mxu0 0.0
    %1048 = vmatprep.subr.mxu0 0.0
    %1049 = vmatpush1.msra.mxu0 0.0
    %1050 = vmatprep.subr.mxu0 0.0
    %1051 = vmatpush1.msra.mxu0 0.0
    %1052 = vmatprep.subr.mxu0 0.0
    %1053 = vmatpush1.msra.mxu0 0.0
    %1054 = vmatprep.subr.mxu0 0.0
    %1055 = vmatpush1.msra.mxu0 0.0
    %1056 = vmatprep.subr.mxu0 0.0
    %1057 = vmatpush1.msra.mxu0 0.0
    %v1058 = vand.u32 %v156, 4294901760
    %1059 = vmatprep.subr.mxu0 %v1058
    %v1060 = vand.u32 %v155, 4294901760
    %1061 = vmatpush1.msra.mxu0 %v1060
    %v1062 = vand.u32 %v149, 4294901760
    %1063 = vmatprep.subr.mxu0 %v1062
    %v1064 = vand.u32 %v148, 4294901760
    %1065 = vmatpush1.msra.mxu0 %v1064
    %v1066 = vand.u32 %v142, 4294901760
    %1067 = vmatprep.subr.mxu0 %v1066
    %v1068 = vand.u32 %v141, 4294901760
    %1069 = vmatpush1.msra.mxu0 %v1068
    %v1070 = vand.u32 %v135, 4294901760
    %1071 = vmatprep.subr.mxu0 %v1070
    %v1072 = vand.u32 %v134, 4294901760
    %1073 = vmatpush1.msra.mxu0 %v1072
    %v1074 = vand.u32 %v128, 4294901760
    %1075 = vmatprep.subr.mxu0 %v1074
    %v1076 = vand.u32 %v127, 4294901760
    %1077 = vmatpush1.msra.mxu0 %v1076
    %v1078 = vand.u32 %v121, 4294901760
    %1079 = vmatprep.subr.mxu0 %v1078
    %v1080 = vand.u32 %v120, 4294901760
    %1081 = vmatpush1.msra.mxu0 %v1080
    %v1082 = vand.u32 %v114, 4294901760
    %1083 = vmatprep.subr.mxu0 %v1082
    %v1084 = vand.u32 %v113, 4294901760
    %1085 = vmatpush1.msra.mxu0 %v1084
    %v1086 = vand.u32 %v107, 4294901760
    %1087 = vmatprep.subr.mxu0 %v1086
    %v1088 = vand.u32 %v106, 4294901760
    %1089 = vmatpush1.msra.mxu0 %v1088
    %v1090 = vand.u32 %v100, 4294901760
    %1091 = vmatprep.subr.mxu0 %v1090
    %v1092 = vand.u32 %v99, 4294901760
    %1093 = vmatpush1.msra.mxu0 %v1092
    %1094 = vmatprep.subr.mxu0 0.0
    %1095 = vmatpush2.msra.mxu0 0.0
    %1096 = vmatprep.subr.mxu0 0.0
    %1097 = vmatpush2.msra.mxu0 0.0
    %1098 = vmatprep.subr.mxu0 0.0
    %1099 = vmatpush2.msra.mxu0 0.0
    %1100 = vmatprep.subr.mxu0 0.0
    %1101 = vmatpush2.msra.mxu0 0.0
    %1102 = vmatprep.subr.mxu0 0.0
    %1103 = vmatpush2.msra.mxu0 0.0
    %1104 = vmatprep.subr.mxu0 0.0
    %1105 = vmatpush2.msra.mxu0 0.0
    %1106 = vmatprep.subr.mxu0 0.0
    %1107 = vmatpush2.msra.mxu0 0.0
    %1108 = vmatprep.subr.mxu0 0.0
    %1109 = vmatpush2.msra.mxu0 0.0
    %1110 = vmatprep.subr.mxu0 0.0
    %1111 = vmatpush2.msra.mxu0 0.0
    %1112 = vmatprep.subr.mxu0 0.0
    %1113 = vmatpush2.msra.mxu0 0.0
    %1114 = vmatprep.subr.mxu0 0.0
    %1115 = vmatpush2.msra.mxu0 0.0
    %1116 = vmatprep.subr.mxu0 0.0
    %1117 = vmatpush2.msra.mxu0 0.0
    %1118 = vmatprep.subr.mxu0 0.0
    %1119 = vmatpush2.msra.mxu0 0.0
    %1120 = vmatprep.subr.mxu0 0.0
    %1121 = vmatpush2.msra.mxu0 0.0
    %1122 = vmatprep.subr.mxu0 0.0
    %1123 = vmatpush2.msra.mxu0 0.0
    %1124 = vmatprep.subr.mxu0 0.0
    %1125 = vmatpush2.msra.mxu0 0.0
    %1126 = vmatprep.mubr.f32.mxu0 0.0
    %v1127 = vand.u32 %v161, 4294901760
    %v1128 = vsub.f32 %v161, %v1127
    %v1129 = vand.u32 %v1128, 4294901760
    %v1130 = vsub.f32 %v1128, %v1129
    %v1131 = vand.u32 %v1130, 4294901760
    %1132 = vmatmul.mubr.f32.gmra.mxu0 %v1131
    %v1133 = vpop.f32.mrf.mxu0
    %v1134 = vadd.f32 0.0, %v1133
    %v1135 = vpop.f32.mrf.mxu0
    %v1136 = vadd.f32 0.0, %v1135
    %1137 = vmatprep.mubr.f32.mxu0 0.0
    %v1138 = vand.u32 %v164, 4294901760
    %v1139 = vsub.f32 %v164, %v1138
    %v1140 = vand.u32 %v1139, 4294901760
    %v1141 = vsub.f32 %v1139, %v1140
    %v1142 = vand.u32 %v1141, 4294901760
    %1143 = vmatmul.mubr.f32.gmra.mxu0 %v1142
    %v1144 = vpop.f32.mrf.mxu0
    %v1145 = vadd.f32 0.0, %v1144
    %v1146 = vpop.f32.mrf.mxu0
    %v1147 = vadd.f32 0.0, %v1146
    %1148 = vmatprep.mubr.f32.mxu0 0.0
    %v1149 = vand.u32 %v167, 4294901760
    %v1150 = vsub.f32 %v167, %v1149
    %v1151 = vand.u32 %v1150, 4294901760
    %v1152 = vsub.f32 %v1150, %v1151
    %v1153 = vand.u32 %v1152, 4294901760
    %1154 = vmatmul.mubr.f32.gmra.mxu0 %v1153
    %v1155 = vpop.f32.mrf.mxu0
    %v1156 = vadd.f32 0.0, %v1155
    %v1157 = vpop.f32.mrf.mxu0
    %v1158 = vadd.f32 0.0, %v1157
    %1159 = vmatprep.mubr.f32.mxu0 0.0
    %v1160 = vand.u32 %v170, 4294901760
    %v1161 = vsub.f32 %v170, %v1160
    %v1162 = vand.u32 %v1161, 4294901760
    %v1163 = vsub.f32 %v1161, %v1162
    %v1164 = vand.u32 %v1163, 4294901760
    %1165 = vmatmul.mubr.f32.gmra.mxu0 %v1164
    %v1166 = vpop.f32.mrf.mxu0
    %v1167 = vadd.f32 0.0, %v1166
    %v1168 = vpop.f32.mrf.mxu0
    %v1169 = vadd.f32 0.0, %v1168
    %1170 = vmatprep.mubr.f32.mxu0 0.0
    %v1171 = vand.u32 %v173, 4294901760
    %v1172 = vsub.f32 %v173, %v1171
    %v1173 = vand.u32 %v1172, 4294901760
    %v1174 = vsub.f32 %v1172, %v1173
    %v1175 = vand.u32 %v1174, 4294901760
    %1176 = vmatmul.mubr.f32.gmra.mxu0 %v1175
    %v1177 = vpop.f32.mrf.mxu0
    %v1178 = vadd.f32 0.0, %v1177
    %v1179 = vpop.f32.mrf.mxu0
    %v1180 = vadd.f32 0.0, %v1179
    %1181 = vdwg.mxu0
    %1182 = vmatprep.subr.mxu0 0.0
    %1183 = vmatpush1.msra.mxu0 0.0
    %1184 = vmatprep.subr.mxu0 0.0
    %1185 = vmatpush1.msra.mxu0 0.0
    %1186 = vmatprep.subr.mxu0 0.0
    %1187 = vmatpush1.msra.mxu0 0.0
    %1188 = vmatprep.subr.mxu0 0.0
    %1189 = vmatpush1.msra.mxu0 0.0
    %1190 = vmatprep.subr.mxu0 0.0
    %1191 = vmatpush1.msra.mxu0 0.0
    %1192 = vmatprep.subr.mxu0 0.0
    %1193 = vmatpush1.msra.mxu0 0.0
    %1194 = vmatprep.subr.mxu0 0.0
    %1195 = vmatpush1.msra.mxu0 0.0
    %v1196 = vand.u32 %v156, 4294901760
    %v1197 = vsub.f32 %v156, %v1196
    %v1198 = vand.u32 %v1197, 4294901760
    %v1199 = vsub.f32 %v1197, %v1198
    %v1200 = vand.u32 %v1199, 4294901760
    %1201 = vmatprep.subr.mxu0 %v1200
    %v1202 = vand.u32 %v155, 4294901760
    %v1203 = vsub.f32 %v155, %v1202
    %v1204 = vand.u32 %v1203, 4294901760
    %v1205 = vsub.f32 %v1203, %v1204
    %v1206 = vand.u32 %v1205, 4294901760
    %1207 = vmatpush1.msra.mxu0 %v1206
    %v1208 = vand.u32 %v149, 4294901760
    %v1209 = vsub.f32 %v149, %v1208
    %v1210 = vand.u32 %v1209, 4294901760
    %v1211 = vsub.f32 %v1209, %v1210
    %v1212 = vand.u32 %v1211, 4294901760
    %1213 = vmatprep.subr.mxu0 %v1212
    %v1214 = vand.u32 %v148, 4294901760
    %v1215 = vsub.f32 %v148, %v1214
    %v1216 = vand.u32 %v1215, 4294901760
    %v1217 = vsub.f32 %v1215, %v1216
    %v1218 = vand.u32 %v1217, 4294901760
    %1219 = vmatpush1.msra.mxu0 %v1218
    %v1220 = vand.u32 %v142, 4294901760
    %v1221 = vsub.f32 %v142, %v1220
    %v1222 = vand.u32 %v1221, 4294901760
    %v1223 = vsub.f32 %v1221, %v1222
    %v1224 = vand.u32 %v1223, 4294901760
    %1225 = vmatprep.subr.mxu0 %v1224
    %v1226 = vand.u32 %v141, 4294901760
    %v1227 = vsub.f32 %v141, %v1226
    %v1228 = vand.u32 %v1227, 4294901760
    %v1229 = vsub.f32 %v1227, %v1228
    %v1230 = vand.u32 %v1229, 4294901760
    %1231 = vmatpush1.msra.mxu0 %v1230
    %v1232 = vand.u32 %v135, 4294901760
    %v1233 = vsub.f32 %v135, %v1232
    %v1234 = vand.u32 %v1233, 4294901760
    %v1235 = vsub.f32 %v1233, %v1234
    %v1236 = vand.u32 %v1235, 4294901760
    %1237 = vmatprep.subr.mxu0 %v1236
    %v1238 = vand.u32 %v134, 4294901760
    %v1239 = vsub.f32 %v134, %v1238
    %v1240 = vand.u32 %v1239, 4294901760
    %v1241 = vsub.f32 %v1239, %v1240
    %v1242 = vand.u32 %v1241, 4294901760
    %1243 = vmatpush1.msra.mxu0 %v1242
    %v1244 = vand.u32 %v128, 4294901760
    %v1245 = vsub.f32 %v128, %v1244
    %v1246 = vand.u32 %v1245, 4294901760
    %v1247 = vsub.f32 %v1245, %v1246
    %v1248 = vand.u32 %v1247, 4294901760
    %1249 = vmatprep.subr.mxu0 %v1248
    %v1250 = vand.u32 %v127, 4294901760
    %v1251 = vsub.f32 %v127, %v1250
    %v1252 = vand.u32 %v1251, 4294901760
    %v1253 = vsub.f32 %v1251, %v1252
    %v1254 = vand.u32 %v1253, 4294901760
    %1255 = vmatpush1.msra.mxu0 %v1254
    %v1256 = vand.u32 %v121, 4294901760
    %v1257 = vsub.f32 %v121, %v1256
    %v1258 = vand.u32 %v1257, 4294901760
    %v1259 = vsub.f32 %v1257, %v1258
    %v1260 = vand.u32 %v1259, 4294901760
    %1261 = vmatprep.subr.mxu0 %v1260
    %v1262 = vand.u32 %v120, 4294901760
    %v1263 = vsub.f32 %v120, %v1262
    %v1264 = vand.u32 %v1263, 4294901760
    %v1265 = vsub.f32 %v1263, %v1264
    %v1266 = vand.u32 %v1265, 4294901760
    %1267 = vmatpush1.msra.mxu0 %v1266
    %v1268 = vand.u32 %v114, 4294901760
    %v1269 = vsub.f32 %v114, %v1268
    %v1270 = vand.u32 %v1269, 4294901760
    %v1271 = vsub.f32 %v1269, %v1270
    %v1272 = vand.u32 %v1271, 4294901760
    %1273 = vmatprep.subr.mxu0 %v1272
    %v1274 = vand.u32 %v113, 4294901760
    %v1275 = vsub.f32 %v113, %v1274
    %v1276 = vand.u32 %v1275, 4294901760
    %v1277 = vsub.f32 %v1275, %v1276
    %v1278 = vand.u32 %v1277, 4294901760
    %1279 = vmatpush1.msra.mxu0 %v1278
    %v1280 = vand.u32 %v107, 4294901760
    %v1281 = vsub.f32 %v107, %v1280
    %v1282 = vand.u32 %v1281, 4294901760
    %v1283 = vsub.f32 %v1281, %v1282
    %v1284 = vand.u32 %v1283, 4294901760
    %1285 = vmatprep.subr.mxu0 %v1284
    %v1286 = vand.u32 %v106, 4294901760
    %v1287 = vsub.f32 %v106, %v1286
    %v1288 = vand.u32 %v1287, 4294901760
    %v1289 = vsub.f32 %v1287, %v1288
    %v1290 = vand.u32 %v1289, 4294901760
    %1291 = vmatpush1.msra.mxu0 %v1290
    %v1292 = vand.u32 %v100, 4294901760
    %v1293 = vsub.f32 %v100, %v1292
    %v1294 = vand.u32 %v1293, 4294901760
    %v1295 = vsub.f32 %v1293, %v1294
    %v1296 = vand.u32 %v1295, 4294901760
    %1297 = vmatprep.subr.mxu0 %v1296
    %v1298 = vand.u32 %v99, 4294901760
    %v1299 = vsub.f32 %v99, %v1298
    %v1300 = vand.u32 %v1299, 4294901760
    %v1301 = vsub.f32 %v1299, %v1300
    %v1302 = vand.u32 %v1301, 4294901760
    %1303 = vmatpush1.msra.mxu0 %v1302
    %1304 = vmatprep.subr.mxu0 0.0
    %1305 = vmatpush2.msra.mxu0 0.0
    %1306 = vmatprep.subr.mxu0 0.0
    %1307 = vmatpush2.msra.mxu0 0.0
    %1308 = vmatprep.subr.mxu0 0.0
    %1309 = vmatpush2.msra.mxu0 0.0
    %1310 = vmatprep.subr.mxu0 0.0
    %1311 = vmatpush2.msra.mxu0 0.0
    %1312 = vmatprep.subr.mxu0 0.0
    %1313 = vmatpush2.msra.mxu0 0.0
    %1314 = vmatprep.subr.mxu0 0.0
    %1315 = vmatpush2.msra.mxu0 0.0
    %1316 = vmatprep.subr.mxu0 0.0
    %1317 = vmatpush2.msra.mxu0 0.0
    %1318 = vmatprep.subr.mxu0 0.0
    %1319 = vmatpush2.msra.mxu0 0.0
    %1320 = vmatprep.subr.mxu0 0.0
    %1321 = vmatpush2.msra.mxu0 0.0
    %1322 = vmatprep.subr.mxu0 0.0
    %1323 = vmatpush2.msra.mxu0 0.0
    %1324 = vmatprep.subr.mxu0 0.0
    %1325 = vmatpush2.msra.mxu0 0.0
    %1326 = vmatprep.subr.mxu0 0.0
    %1327 = vmatpush2.msra.mxu0 0.0
    %1328 = vmatprep.subr.mxu0 0.0
    %1329 = vmatpush2.msra.mxu0 0.0
    %1330 = vmatprep.subr.mxu0 0.0
    %1331 = vmatpush2.msra.mxu0 0.0
    %1332 = vmatprep.subr.mxu0 0.0
    %1333 = vmatpush2.msra.mxu0 0.0
    %1334 = vmatprep.subr.mxu0 0.0
    %1335 = vmatpush2.msra.mxu0 0.0
    %1336 = vmatprep.mubr.f32.mxu0 0.0
    %v1337 = vand.u32 %v161, 4294901760
    %1338 = vmatmul.mubr.f32.gmra.mxu0 %v1337
    %v1339 = vpop.f32.mrf.mxu0
    %v1340 = vadd.f32 %v1134, %v1339
    %v1341 = vpop.f32.mrf.mxu0
    %v1342 = vadd.f32 %v1136, %v1341
    %1343 = vmatprep.mubr.f32.mxu0 0.0
    %v1344 = vand.u32 %v164, 4294901760
    %1345 = vmatmul.mubr.f32.gmra.mxu0 %v1344
    %v1346 = vpop.f32.mrf.mxu0
    %v1347 = vadd.f32 %v1145, %v1346
    %v1348 = vpop.f32.mrf.mxu0
    %v1349 = vadd.f32 %v1147, %v1348
    %1350 = vmatprep.mubr.f32.mxu0 0.0
    %v1351 = vand.u32 %v167, 4294901760
    %1352 = vmatmul.mubr.f32.gmra.mxu0 %v1351
    %v1353 = vpop.f32.mrf.mxu0
    %v1354 = vadd.f32 %v1156, %v1353
    %v1355 = vpop.f32.mrf.mxu0
    %v1356 = vadd.f32 %v1158, %v1355
    %1357 = vmatprep.mubr.f32.mxu0 0.0
    %v1358 = vand.u32 %v170, 4294901760
    %1359 = vmatmul.mubr.f32.gmra.mxu0 %v1358
    %v1360 = vpop.f32.mrf.mxu0
    %v1361 = vadd.f32 %v1167, %v1360
    %v1362 = vpop.f32.mrf.mxu0
    %v1363 = vadd.f32 %v1169, %v1362
    %1364 = vmatprep.mubr.f32.mxu0 0.0
    %v1365 = vand.u32 %v173, 4294901760
    %1366 = vmatmul.mubr.f32.gmra.mxu0 %v1365
    %v1367 = vpop.f32.mrf.mxu0
    %v1368 = vadd.f32 %v1178, %v1367
    %v1369 = vpop.f32.mrf.mxu0
    %v1370 = vadd.f32 %v1180, %v1369
    %1371 = vdwg.mxu0
    %1372 = vmatprep.subr.mxu0 0.0
    %1373 = vmatpush1.msra.mxu0 0.0
    %1374 = vmatprep.subr.mxu0 0.0
    %1375 = vmatpush1.msra.mxu0 0.0
    %1376 = vmatprep.subr.mxu0 0.0
    %1377 = vmatpush1.msra.mxu0 0.0
    %1378 = vmatprep.subr.mxu0 0.0
    %1379 = vmatpush1.msra.mxu0 0.0
    %1380 = vmatprep.subr.mxu0 0.0
    %1381 = vmatpush1.msra.mxu0 0.0
    %1382 = vmatprep.subr.mxu0 0.0
    %1383 = vmatpush1.msra.mxu0 0.0
    %1384 = vmatprep.subr.mxu0 0.0
    %1385 = vmatpush1.msra.mxu0 0.0
    %v1386 = vand.u32 %v156, 4294901760
    %v1387 = vsub.f32 %v156, %v1386
    %1388 = vmatprep.subr.mxu0 %v1387
    %v1389 = vand.u32 %v155, 4294901760
    %v1390 = vsub.f32 %v155, %v1389
    %1391 = vmatpush1.msra.mxu0 %v1390
    %v1392 = vand.u32 %v149, 4294901760
    %v1393 = vsub.f32 %v149, %v1392
    %1394 = vmatprep.subr.mxu0 %v1393
    %v1395 = vand.u32 %v148, 4294901760
    %v1396 = vsub.f32 %v148, %v1395
    %1397 = vmatpush1.msra.mxu0 %v1396
    %v1398 = vand.u32 %v142, 4294901760
    %v1399 = vsub.f32 %v142, %v1398
    %1400 = vmatprep.subr.mxu0 %v1399
    %v1401 = vand.u32 %v141, 4294901760
    %v1402 = vsub.f32 %v141, %v1401
    %1403 = vmatpush1.msra.mxu0 %v1402
    %v1404 = vand.u32 %v135, 4294901760
    %v1405 = vsub.f32 %v135, %v1404
    %1406 = vmatprep.subr.mxu0 %v1405
    %v1407 = vand.u32 %v134, 4294901760
    %v1408 = vsub.f32 %v134, %v1407
    %1409 = vmatpush1.msra.mxu0 %v1408
    %v1410 = vand.u32 %v128, 4294901760
    %v1411 = vsub.f32 %v128, %v1410
    %1412 = vmatprep.subr.mxu0 %v1411
    %v1413 = vand.u32 %v127, 4294901760
    %v1414 = vsub.f32 %v127, %v1413
    %1415 = vmatpush1.msra.mxu0 %v1414
    %v1416 = vand.u32 %v121, 4294901760
    %v1417 = vsub.f32 %v121, %v1416
    %1418 = vmatprep.subr.mxu0 %v1417
    %v1419 = vand.u32 %v120, 4294901760
    %v1420 = vsub.f32 %v120, %v1419
    %1421 = vmatpush1.msra.mxu0 %v1420
    %v1422 = vand.u32 %v114, 4294901760
    %v1423 = vsub.f32 %v114, %v1422
    %1424 = vmatprep.subr.mxu0 %v1423
    %v1425 = vand.u32 %v113, 4294901760
    %v1426 = vsub.f32 %v113, %v1425
    %1427 = vmatpush1.msra.mxu0 %v1426
    %v1428 = vand.u32 %v107, 4294901760
    %v1429 = vsub.f32 %v107, %v1428
    %1430 = vmatprep.subr.mxu0 %v1429
    %v1431 = vand.u32 %v106, 4294901760
    %v1432 = vsub.f32 %v106, %v1431
    %1433 = vmatpush1.msra.mxu0 %v1432
    %v1434 = vand.u32 %v100, 4294901760
    %v1435 = vsub.f32 %v100, %v1434
    %1436 = vmatprep.subr.mxu0 %v1435
    %v1437 = vand.u32 %v99, 4294901760
    %v1438 = vsub.f32 %v99, %v1437
    %1439 = vmatpush1.msra.mxu0 %v1438
    %1440 = vmatprep.subr.mxu0 0.0
    %1441 = vmatpush2.msra.mxu0 0.0
    %1442 = vmatprep.subr.mxu0 0.0
    %1443 = vmatpush2.msra.mxu0 0.0
    %1444 = vmatprep.subr.mxu0 0.0
    %1445 = vmatpush2.msra.mxu0 0.0
    %1446 = vmatprep.subr.mxu0 0.0
    %1447 = vmatpush2.msra.mxu0 0.0
    %1448 = vmatprep.subr.mxu0 0.0
    %1449 = vmatpush2.msra.mxu0 0.0
    %1450 = vmatprep.subr.mxu0 0.0
    %1451 = vmatpush2.msra.mxu0 0.0
    %1452 = vmatprep.subr.mxu0 0.0
    %1453 = vmatpush2.msra.mxu0 0.0
    %1454 = vmatprep.subr.mxu0 0.0
    %1455 = vmatpush2.msra.mxu0 0.0
    %1456 = vmatprep.subr.mxu0 0.0
    %1457 = vmatpush2.msra.mxu0 0.0
    %1458 = vmatprep.subr.mxu0 0.0
    %1459 = vmatpush2.msra.mxu0 0.0
    %1460 = vmatprep.subr.mxu0 0.0
    %1461 = vmatpush2.msra.mxu0 0.0
    %1462 = vmatprep.subr.mxu0 0.0
    %1463 = vmatpush2.msra.mxu0 0.0
    %1464 = vmatprep.subr.mxu0 0.0
    %1465 = vmatpush2.msra.mxu0 0.0
    %1466 = vmatprep.subr.mxu0 0.0
    %1467 = vmatpush2.msra.mxu0 0.0
    %1468 = vmatprep.subr.mxu0 0.0
    %1469 = vmatpush2.msra.mxu0 0.0
    %1470 = vmatprep.subr.mxu0 0.0
    %1471 = vmatpush2.msra.mxu0 0.0
    %1472 = vmatprep.mubr.f32.mxu0 0.0
    %v1473 = vand.u32 %v161, 4294901760
    %v1474 = vsub.f32 %v161, %v1473
    %1475 = vmatmul.mubr.f32.gmra.mxu0 %v1474
    %v1476 = vpop.f32.mrf.mxu0
    %v1477 = vadd.f32 %v1340, %v1476
    %v1478 = vpop.f32.mrf.mxu0
    %v1479 = vadd.f32 %v1342, %v1478
    %1480 = vmatprep.mubr.f32.mxu0 0.0
    %v1481 = vand.u32 %v164, 4294901760
    %v1482 = vsub.f32 %v164, %v1481
    %1483 = vmatmul.mubr.f32.gmra.mxu0 %v1482
    %v1484 = vpop.f32.mrf.mxu0
    %v1485 = vadd.f32 %v1347, %v1484
    %v1486 = vpop.f32.mrf.mxu0
    %v1487 = vadd.f32 %v1349, %v1486
    %1488 = vmatprep.mubr.f32.mxu0 0.0
    %v1489 = vand.u32 %v167, 4294901760
    %v1490 = vsub.f32 %v167, %v1489
    %1491 = vmatmul.mubr.f32.gmra.mxu0 %v1490
    %v1492 = vpop.f32.mrf.mxu0
    %v1493 = vadd.f32 %v1354, %v1492
    %v1494 = vpop.f32.mrf.mxu0
    %v1495 = vadd.f32 %v1356, %v1494
    %1496 = vmatprep.mubr.f32.mxu0 0.0
    %v1497 = vand.u32 %v170, 4294901760
    %v1498 = vsub.f32 %v170, %v1497
    %1499 = vmatmul.mubr.f32.gmra.mxu0 %v1498
    %v1500 = vpop.f32.mrf.mxu0
    %v1501 = vadd.f32 %v1361, %v1500
    %v1502 = vpop.f32.mrf.mxu0
    %v1503 = vadd.f32 %v1363, %v1502
    %1504 = vmatprep.mubr.f32.mxu0 0.0
    %v1505 = vand.u32 %v173, 4294901760
    %v1506 = vsub.f32 %v173, %v1505
    %1507 = vmatmul.mubr.f32.gmra.mxu0 %v1506
    %v1508 = vpop.f32.mrf.mxu0
    %v1509 = vadd.f32 %v1368, %v1508
    %v1510 = vpop.f32.mrf.mxu0
    %v1511 = vadd.f32 %v1370, %v1510
    %1512 = vdwg.mxu0
    %1513 = vmatprep.subr.mxu0 0.0
    %1514 = vmatpush1.msra.mxu0 0.0
    %1515 = vmatprep.subr.mxu0 0.0
    %1516 = vmatpush1.msra.mxu0 0.0
    %1517 = vmatprep.subr.mxu0 0.0
    %1518 = vmatpush1.msra.mxu0 0.0
    %1519 = vmatprep.subr.mxu0 0.0
    %1520 = vmatpush1.msra.mxu0 0.0
    %1521 = vmatprep.subr.mxu0 0.0
    %1522 = vmatpush1.msra.mxu0 0.0
    %1523 = vmatprep.subr.mxu0 0.0
    %1524 = vmatpush1.msra.mxu0 0.0
    %1525 = vmatprep.subr.mxu0 0.0
    %1526 = vmatpush1.msra.mxu0 0.0
    %v1527 = vand.u32 %v156, 4294901760
    %1528 = vmatprep.subr.mxu0 %v1527
    %v1529 = vand.u32 %v155, 4294901760
    %1530 = vmatpush1.msra.mxu0 %v1529
    %v1531 = vand.u32 %v149, 4294901760
    %1532 = vmatprep.subr.mxu0 %v1531
    %v1533 = vand.u32 %v148, 4294901760
    %1534 = vmatpush1.msra.mxu0 %v1533
    %v1535 = vand.u32 %v142, 4294901760
    %1536 = vmatprep.subr.mxu0 %v1535
    %v1537 = vand.u32 %v141, 4294901760
    %1538 = vmatpush1.msra.mxu0 %v1537
    %v1539 = vand.u32 %v135, 4294901760
    %1540 = vmatprep.subr.mxu0 %v1539
    %v1541 = vand.u32 %v134, 4294901760
    %1542 = vmatpush1.msra.mxu0 %v1541
    %v1543 = vand.u32 %v128, 4294901760
    %1544 = vmatprep.subr.mxu0 %v1543
    %v1545 = vand.u32 %v127, 4294901760
    %1546 = vmatpush1.msra.mxu0 %v1545
    %v1547 = vand.u32 %v121, 4294901760
    %1548 = vmatprep.subr.mxu0 %v1547
    %v1549 = vand.u32 %v120, 4294901760
    %1550 = vmatpush1.msra.mxu0 %v1549
    %v1551 = vand.u32 %v114, 4294901760
    %1552 = vmatprep.subr.mxu0 %v1551
    %v1553 = vand.u32 %v113, 4294901760
    %1554 = vmatpush1.msra.mxu0 %v1553
    %v1555 = vand.u32 %v107, 4294901760
    %1556 = vmatprep.subr.mxu0 %v1555
    %v1557 = vand.u32 %v106, 4294901760
    %1558 = vmatpush1.msra.mxu0 %v1557
    %v1559 = vand.u32 %v100, 4294901760
    %1560 = vmatprep.subr.mxu0 %v1559
    %v1561 = vand.u32 %v99, 4294901760
    %1562 = vmatpush1.msra.mxu0 %v1561
    %1563 = vmatprep.subr.mxu0 0.0
    %1564 = vmatpush2.msra.mxu0 0.0
    %1565 = vmatprep.subr.mxu0 0.0
    %1566 = vmatpush2.msra.mxu0 0.0
    %1567 = vmatprep.subr.mxu0 0.0
    %1568 = vmatpush2.msra.mxu0 0.0
    %1569 = vmatprep.subr.mxu0 0.0
    %1570 = vmatpush2.msra.mxu0 0.0
    %1571 = vmatprep.subr.mxu0 0.0
    %1572 = vmatpush2.msra.mxu0 0.0
    %1573 = vmatprep.subr.mxu0 0.0
    %1574 = vmatpush2.msra.mxu0 0.0
    %1575 = vmatprep.subr.mxu0 0.0
    %1576 = vmatpush2.msra.mxu0 0.0
    %1577 = vmatprep.subr.mxu0 0.0
    %1578 = vmatpush2.msra.mxu0 0.0
    %1579 = vmatprep.subr.mxu0 0.0
    %1580 = vmatpush2.msra.mxu0 0.0
    %1581 = vmatprep.subr.mxu0 0.0
    %1582 = vmatpush2.msra.mxu0 0.0
    %1583 = vmatprep.subr.mxu0 0.0
    %1584 = vmatpush2.msra.mxu0 0.0
    %1585 = vmatprep.subr.mxu0 0.0
    %1586 = vmatpush2.msra.mxu0 0.0
    %1587 = vmatprep.subr.mxu0 0.0
    %1588 = vmatpush2.msra.mxu0 0.0
    %1589 = vmatprep.subr.mxu0 0.0
    %1590 = vmatpush2.msra.mxu0 0.0
    %1591 = vmatprep.subr.mxu0 0.0
    %1592 = vmatpush2.msra.mxu0 0.0
    %1593 = vmatprep.subr.mxu0 0.0
    %1594 = vmatpush2.msra.mxu0 0.0
    %1595 = vmatprep.mubr.f32.mxu0 0.0
    %v1596 = vand.u32 %v161, 4294901760
    %v1597 = vsub.f32 %v161, %v1596
    %v1598 = vand.u32 %v1597, 4294901760
    %1599 = vmatmul.mubr.f32.gmra.mxu0 %v1598
    %v1600 = vpop.f32.mrf.mxu0
    %v1601 = vadd.f32 %v1477, %v1600
    %v1602 = vpop.f32.mrf.mxu0
    %v1603 = vadd.f32 %v1479, %v1602
    %1604 = vmatprep.mubr.f32.mxu0 0.0
    %v1605 = vand.u32 %v164, 4294901760
    %v1606 = vsub.f32 %v164, %v1605
    %v1607 = vand.u32 %v1606, 4294901760
    %1608 = vmatmul.mubr.f32.gmra.mxu0 %v1607
    %v1609 = vpop.f32.mrf.mxu0
    %v1610 = vadd.f32 %v1485, %v1609
    %v1611 = vpop.f32.mrf.mxu0
    %v1612 = vadd.f32 %v1487, %v1611
    %1613 = vmatprep.mubr.f32.mxu0 0.0
    %v1614 = vand.u32 %v167, 4294901760
    %v1615 = vsub.f32 %v167, %v1614
    %v1616 = vand.u32 %v1615, 4294901760
    %1617 = vmatmul.mubr.f32.gmra.mxu0 %v1616
    %v1618 = vpop.f32.mrf.mxu0
    %v1619 = vadd.f32 %v1493, %v1618
    %v1620 = vpop.f32.mrf.mxu0
    %v1621 = vadd.f32 %v1495, %v1620
    %1622 = vmatprep.mubr.f32.mxu0 0.0
    %v1623 = vand.u32 %v170, 4294901760
    %v1624 = vsub.f32 %v170, %v1623
    %v1625 = vand.u32 %v1624, 4294901760
    %1626 = vmatmul.mubr.f32.gmra.mxu0 %v1625
    %v1627 = vpop.f32.mrf.mxu0
    %v1628 = vadd.f32 %v1501, %v1627
    %v1629 = vpop.f32.mrf.mxu0
    %v1630 = vadd.f32 %v1503, %v1629
    %1631 = vmatprep.mubr.f32.mxu0 0.0
    %v1632 = vand.u32 %v173, 4294901760
    %v1633 = vsub.f32 %v173, %v1632
    %v1634 = vand.u32 %v1633, 4294901760
    %1635 = vmatmul.mubr.f32.gmra.mxu0 %v1634
    %v1636 = vpop.f32.mrf.mxu0
    %v1637 = vadd.f32 %v1509, %v1636
    %v1638 = vpop.f32.mrf.mxu0
    %v1639 = vadd.f32 %v1511, %v1638
    %1640 = vdwg.mxu0
    %1641 = vmatprep.subr.mxu0 0.0
    %1642 = vmatpush1.msra.mxu0 0.0
    %1643 = vmatprep.subr.mxu0 0.0
    %1644 = vmatpush1.msra.mxu0 0.0
    %1645 = vmatprep.subr.mxu0 0.0
    %1646 = vmatpush1.msra.mxu0 0.0
    %1647 = vmatprep.subr.mxu0 0.0
    %1648 = vmatpush1.msra.mxu0 0.0
    %1649 = vmatprep.subr.mxu0 0.0
    %1650 = vmatpush1.msra.mxu0 0.0
    %1651 = vmatprep.subr.mxu0 0.0
    %1652 = vmatpush1.msra.mxu0 0.0
    %1653 = vmatprep.subr.mxu0 0.0
    %1654 = vmatpush1.msra.mxu0 0.0
    %v1655 = vand.u32 %v156, 4294901760
    %v1656 = vsub.f32 %v156, %v1655
    %v1657 = vand.u32 %v1656, 4294901760
    %1658 = vmatprep.subr.mxu0 %v1657
    %v1659 = vand.u32 %v155, 4294901760
    %v1660 = vsub.f32 %v155, %v1659
    %v1661 = vand.u32 %v1660, 4294901760
    %1662 = vmatpush1.msra.mxu0 %v1661
    %v1663 = vand.u32 %v149, 4294901760
    %v1664 = vsub.f32 %v149, %v1663
    %v1665 = vand.u32 %v1664, 4294901760
    %1666 = vmatprep.subr.mxu0 %v1665
    %v1667 = vand.u32 %v148, 4294901760
    %v1668 = vsub.f32 %v148, %v1667
    %v1669 = vand.u32 %v1668, 4294901760
    %1670 = vmatpush1.msra.mxu0 %v1669
    %v1671 = vand.u32 %v142, 4294901760
    %v1672 = vsub.f32 %v142, %v1671
    %v1673 = vand.u32 %v1672, 4294901760
    %1674 = vmatprep.subr.mxu0 %v1673
    %v1675 = vand.u32 %v141, 4294901760
    %v1676 = vsub.f32 %v141, %v1675
    %v1677 = vand.u32 %v1676, 4294901760
    %1678 = vmatpush1.msra.mxu0 %v1677
    %v1679 = vand.u32 %v135, 4294901760
    %v1680 = vsub.f32 %v135, %v1679
    %v1681 = vand.u32 %v1680, 4294901760
    %1682 = vmatprep.subr.mxu0 %v1681
    %v1683 = vand.u32 %v134, 4294901760
    %v1684 = vsub.f32 %v134, %v1683
    %v1685 = vand.u32 %v1684, 4294901760
    %1686 = vmatpush1.msra.mxu0 %v1685
    %v1687 = vand.u32 %v128, 4294901760
    %v1688 = vsub.f32 %v128, %v1687
    %v1689 = vand.u32 %v1688, 4294901760
    %1690 = vmatprep.subr.mxu0 %v1689
    %v1691 = vand.u32 %v127, 4294901760
    %v1692 = vsub.f32 %v127, %v1691
    %v1693 = vand.u32 %v1692, 4294901760
    %1694 = vmatpush1.msra.mxu0 %v1693
    %v1695 = vand.u32 %v121, 4294901760
    %v1696 = vsub.f32 %v121, %v1695
    %v1697 = vand.u32 %v1696, 4294901760
    %1698 = vmatprep.subr.mxu0 %v1697
    %v1699 = vand.u32 %v120, 4294901760
    %v1700 = vsub.f32 %v120, %v1699
    %v1701 = vand.u32 %v1700, 4294901760
    %1702 = vmatpush1.msra.mxu0 %v1701
    %v1703 = vand.u32 %v114, 4294901760
    %v1704 = vsub.f32 %v114, %v1703
    %v1705 = vand.u32 %v1704, 4294901760
    %1706 = vmatprep.subr.mxu0 %v1705
    %v1707 = vand.u32 %v113, 4294901760
    %v1708 = vsub.f32 %v113, %v1707
    %v1709 = vand.u32 %v1708, 4294901760
    %1710 = vmatpush1.msra.mxu0 %v1709
    %v1711 = vand.u32 %v107, 4294901760
    %v1712 = vsub.f32 %v107, %v1711
    %v1713 = vand.u32 %v1712, 4294901760
    %1714 = vmatprep.subr.mxu0 %v1713
    %v1715 = vand.u32 %v106, 4294901760
    %v1716 = vsub.f32 %v106, %v1715
    %v1717 = vand.u32 %v1716, 4294901760
    %1718 = vmatpush1.msra.mxu0 %v1717
    %v1719 = vand.u32 %v100, 4294901760
    %v1720 = vsub.f32 %v100, %v1719
    %v1721 = vand.u32 %v1720, 4294901760
    %1722 = vmatprep.subr.mxu0 %v1721
    %v1723 = vand.u32 %v99, 4294901760
    %v1724 = vsub.f32 %v99, %v1723
    %v1725 = vand.u32 %v1724, 4294901760
    %1726 = vmatpush1.msra.mxu0 %v1725
    %1727 = vmatprep.subr.mxu0 0.0
    %1728 = vmatpush2.msra.mxu0 0.0
    %1729 = vmatprep.subr.mxu0 0.0
    %1730 = vmatpush2.msra.mxu0 0.0
    %1731 = vmatprep.subr.mxu0 0.0
    %1732 = vmatpush2.msra.mxu0 0.0
    %1733 = vmatprep.subr.mxu0 0.0
    %1734 = vmatpush2.msra.mxu0 0.0
    %1735 = vmatprep.subr.mxu0 0.0
    %1736 = vmatpush2.msra.mxu0 0.0
    %1737 = vmatprep.subr.mxu0 0.0
    %1738 = vmatpush2.msra.mxu0 0.0
    %1739 = vmatprep.subr.mxu0 0.0
    %1740 = vmatpush2.msra.mxu0 0.0
    %1741 = vmatprep.subr.mxu0 0.0
    %1742 = vmatpush2.msra.mxu0 0.0
    %1743 = vmatprep.subr.mxu0 0.0
    %1744 = vmatpush2.msra.mxu0 0.0
    %1745 = vmatprep.subr.mxu0 0.0
    %1746 = vmatpush2.msra.mxu0 0.0
    %1747 = vmatprep.subr.mxu0 0.0
    %1748 = vmatpush2.msra.mxu0 0.0
    %1749 = vmatprep.subr.mxu0 0.0
    %1750 = vmatpush2.msra.mxu0 0.0
    %1751 = vmatprep.subr.mxu0 0.0
    %1752 = vmatpush2.msra.mxu0 0.0
    %1753 = vmatprep.subr.mxu0 0.0
    %1754 = vmatpush2.msra.mxu0 0.0
    %1755 = vmatprep.subr.mxu0 0.0
    %1756 = vmatpush2.msra.mxu0 0.0
    %1757 = vmatprep.subr.mxu0 0.0
    %1758 = vmatpush2.msra.mxu0 0.0
    %1759 = vmatprep.mubr.f32.mxu0 0.0
    %v1760 = vand.u32 %v161, 4294901760
    %1761 = vmatmul.mubr.f32.gmra.mxu0 %v1760
    %v1762 = vpop.f32.mrf.mxu0
    %v1763 = vadd.f32 %v1601, %v1762
    %v1764 = vpop.f32.mrf.mxu0
    %v1765 = vadd.f32 %v1603, %v1764
    %1766 = vmatprep.mubr.f32.mxu0 0.0
    %v1767 = vand.u32 %v164, 4294901760
    %1768 = vmatmul.mubr.f32.gmra.mxu0 %v1767
    %v1769 = vpop.f32.mrf.mxu0
    %v1770 = vadd.f32 %v1610, %v1769
    %v1771 = vpop.f32.mrf.mxu0
    %v1772 = vadd.f32 %v1612, %v1771
    %1773 = vmatprep.mubr.f32.mxu0 0.0
    %v1774 = vand.u32 %v167, 4294901760
    %1775 = vmatmul.mubr.f32.gmra.mxu0 %v1774
    %v1776 = vpop.f32.mrf.mxu0
    %v1777 = vadd.f32 %v1619, %v1776
    %v1778 = vpop.f32.mrf.mxu0
    %v1779 = vadd.f32 %v1621, %v1778
    %1780 = vmatprep.mubr.f32.mxu0 0.0
    %v1781 = vand.u32 %v170, 4294901760
    %1782 = vmatmul.mubr.f32.gmra.mxu0 %v1781
    %v1783 = vpop.f32.mrf.mxu0
    %v1784 = vadd.f32 %v1628, %v1783
    %v1785 = vpop.f32.mrf.mxu0
    %v1786 = vadd.f32 %v1630, %v1785
    %1787 = vmatprep.mubr.f32.mxu0 0.0
    %v1788 = vand.u32 %v173, 4294901760
    %1789 = vmatmul.mubr.f32.gmra.mxu0 %v1788
    %v1790 = vpop.f32.mrf.mxu0
    %v1791 = vadd.f32 %v1637, %v1790
    %v1792 = vpop.f32.mrf.mxu0
    %v1793 = vadd.f32 %v1639, %v1792
    %1794 = vdwg.mxu0
    %1795 = vmatprep.subr.mxu0 0.0
    %1796 = vmatpush1.msra.mxu0 0.0
    %1797 = vmatprep.subr.mxu0 0.0
    %1798 = vmatpush1.msra.mxu0 0.0
    %1799 = vmatprep.subr.mxu0 0.0
    %1800 = vmatpush1.msra.mxu0 0.0
    %1801 = vmatprep.subr.mxu0 0.0
    %1802 = vmatpush1.msra.mxu0 0.0
    %1803 = vmatprep.subr.mxu0 0.0
    %1804 = vmatpush1.msra.mxu0 0.0
    %1805 = vmatprep.subr.mxu0 0.0
    %1806 = vmatpush1.msra.mxu0 0.0
    %1807 = vmatprep.subr.mxu0 0.0
    %1808 = vmatpush1.msra.mxu0 0.0
    %v1809 = vand.u32 %v156, 4294901760
    %1810 = vmatprep.subr.mxu0 %v1809
    %v1811 = vand.u32 %v155, 4294901760
    %1812 = vmatpush1.msra.mxu0 %v1811
    %v1813 = vand.u32 %v149, 4294901760
    %1814 = vmatprep.subr.mxu0 %v1813
    %v1815 = vand.u32 %v148, 4294901760
    %1816 = vmatpush1.msra.mxu0 %v1815
    %v1817 = vand.u32 %v142, 4294901760
    %1818 = vmatprep.subr.mxu0 %v1817
    %v1819 = vand.u32 %v141, 4294901760
    %1820 = vmatpush1.msra.mxu0 %v1819
    %v1821 = vand.u32 %v135, 4294901760
    %1822 = vmatprep.subr.mxu0 %v1821
    %v1823 = vand.u32 %v134, 4294901760
    %1824 = vmatpush1.msra.mxu0 %v1823
    %v1825 = vand.u32 %v128, 4294901760
    %1826 = vmatprep.subr.mxu0 %v1825
    %v1827 = vand.u32 %v127, 4294901760
    %1828 = vmatpush1.msra.mxu0 %v1827
    %v1829 = vand.u32 %v121, 4294901760
    %1830 = vmatprep.subr.mxu0 %v1829
    %v1831 = vand.u32 %v120, 4294901760
    %1832 = vmatpush1.msra.mxu0 %v1831
    %v1833 = vand.u32 %v114, 4294901760
    %1834 = vmatprep.subr.mxu0 %v1833
    %v1835 = vand.u32 %v113, 4294901760
    %1836 = vmatpush1.msra.mxu0 %v1835
    %v1837 = vand.u32 %v107, 4294901760
    %1838 = vmatprep.subr.mxu0 %v1837
    %v1839 = vand.u32 %v106, 4294901760
    %1840 = vmatpush1.msra.mxu0 %v1839
    %v1841 = vand.u32 %v100, 4294901760
    %1842 = vmatprep.subr.mxu0 %v1841
    %v1843 = vand.u32 %v99, 4294901760
    %1844 = vmatpush1.msra.mxu0 %v1843
    %1845 = vmatprep.subr.mxu0 0.0
    %1846 = vmatpush2.msra.mxu0 0.0
    %1847 = vmatprep.subr.mxu0 0.0
    %1848 = vmatpush2.msra.mxu0 0.0
    %1849 = vmatprep.subr.mxu0 0.0
    %1850 = vmatpush2.msra.mxu0 0.0
    %1851 = vmatprep.subr.mxu0 0.0
    %1852 = vmatpush2.msra.mxu0 0.0
    %1853 = vmatprep.subr.mxu0 0.0
    %1854 = vmatpush2.msra.mxu0 0.0
    %1855 = vmatprep.subr.mxu0 0.0
    %1856 = vmatpush2.msra.mxu0 0.0
    %1857 = vmatprep.subr.mxu0 0.0
    %1858 = vmatpush2.msra.mxu0 0.0
    %1859 = vmatprep.subr.mxu0 0.0
    %1860 = vmatpush2.msra.mxu0 0.0
    %1861 = vmatprep.subr.mxu0 0.0
    %1862 = vmatpush2.msra.mxu0 0.0
    %1863 = vmatprep.subr.mxu0 0.0
    %1864 = vmatpush2.msra.mxu0 0.0
    %1865 = vmatprep.subr.mxu0 0.0
    %1866 = vmatpush2.msra.mxu0 0.0
    %1867 = vmatprep.subr.mxu0 0.0
    %1868 = vmatpush2.msra.mxu0 0.0
    %1869 = vmatprep.subr.mxu0 0.0
    %1870 = vmatpush2.msra.mxu0 0.0
    %1871 = vmatprep.subr.mxu0 0.0
    %1872 = vmatpush2.msra.mxu0 0.0
    %1873 = vmatprep.subr.mxu0 0.0
    %1874 = vmatpush2.msra.mxu0 0.0
    %1875 = vmatprep.subr.mxu0 0.0
    %1876 = vmatpush2.msra.mxu0 0.0
    %1877 = vmatprep.mubr.f32.mxu0 0.0
    %v1878 = vand.u32 %v161, 4294901760
    %1879 = vmatmul.mubr.f32.gmra.mxu0 %v1878
    %v1880 = vpop.f32.mrf.mxu0
    %v1881 = vadd.f32 %v1763, %v1880
    %v1882 = vpop.f32.mrf.mxu0
    %v1883 = vadd.f32 %v1765, %v1882
    %1884 = vmatprep.mubr.f32.mxu0 0.0
    %v1885 = vand.u32 %v164, 4294901760
    %1886 = vmatmul.mubr.f32.gmra.mxu0 %v1885
    %v1887 = vpop.f32.mrf.mxu0
    %v1888 = vadd.f32 %v1770, %v1887
    %v1889 = vpop.f32.mrf.mxu0
    %v1890 = vadd.f32 %v1772, %v1889
    %1891 = vmatprep.mubr.f32.mxu0 0.0
    %v1892 = vand.u32 %v167, 4294901760
    %1893 = vmatmul.mubr.f32.gmra.mxu0 %v1892
    %v1894 = vpop.f32.mrf.mxu0
    %v1895 = vadd.f32 %v1777, %v1894
    %v1896 = vpop.f32.mrf.mxu0
    %v1897 = vadd.f32 %v1779, %v1896
    %1898 = vmatprep.mubr.f32.mxu0 0.0
    %v1899 = vand.u32 %v170, 4294901760
    %1900 = vmatmul.mubr.f32.gmra.mxu0 %v1899
    %v1901 = vpop.f32.mrf.mxu0
    %v1902 = vadd.f32 %v1784, %v1901
    %v1903 = vpop.f32.mrf.mxu0
    %v1904 = vadd.f32 %v1786, %v1903
    %1905 = vmatprep.mubr.f32.mxu0 0.0
    %v1906 = vand.u32 %v173, 4294901760
    %1907 = vmatmul.mubr.f32.gmra.mxu0 %v1906
    %v1908 = vpop.f32.mrf.mxu0
    %v1909 = vadd.f32 %v1791, %v1908
    %v1910 = vpop.f32.mrf.mxu0
    %v1911 = vadd.f32 %v1793, %v1910
    %1912 = vdwg.mxu0
    %1913 = vmatprep.subr.mxu0 0.0
    %1914 = vmatpush1.msra.mxu0 0.0
    %1915 = vmatprep.subr.mxu0 0.0
    %1916 = vmatpush1.msra.mxu0 0.0
    %1917 = vmatprep.subr.mxu0 0.0
    %1918 = vmatpush1.msra.mxu0 0.0
    %1919 = vmatprep.subr.mxu0 0.0
    %1920 = vmatpush1.msra.mxu0 0.0
    %1921 = vmatprep.subr.mxu0 0.0
    %1922 = vmatpush1.msra.mxu0 0.0
    %1923 = vmatprep.subr.mxu0 0.0
    %1924 = vmatpush1.msra.mxu0 0.0
    %1925 = vmatprep.subr.mxu0 0.0
    %1926 = vmatpush1.msra.mxu0 0.0
    %v1927 = vand.u32 %v158, 4294901760
    %1928 = vmatprep.subr.mxu0 %v1927
    %v1929 = vand.u32 %v157, 4294901760
    %1930 = vmatpush1.msra.mxu0 %v1929
    %v1931 = vand.u32 %v151, 4294901760
    %1932 = vmatprep.subr.mxu0 %v1931
    %v1933 = vand.u32 %v150, 4294901760
    %1934 = vmatpush1.msra.mxu0 %v1933
    %v1935 = vand.u32 %v144, 4294901760
    %1936 = vmatprep.subr.mxu0 %v1935
    %v1937 = vand.u32 %v143, 4294901760
    %1938 = vmatpush1.msra.mxu0 %v1937
    %v1939 = vand.u32 %v137, 4294901760
    %1940 = vmatprep.subr.mxu0 %v1939
    %v1941 = vand.u32 %v136, 4294901760
    %1942 = vmatpush1.msra.mxu0 %v1941
    %v1943 = vand.u32 %v130, 4294901760
    %1944 = vmatprep.subr.mxu0 %v1943
    %v1945 = vand.u32 %v129, 4294901760
    %1946 = vmatpush1.msra.mxu0 %v1945
    %v1947 = vand.u32 %v123, 4294901760
    %1948 = vmatprep.subr.mxu0 %v1947
    %v1949 = vand.u32 %v122, 4294901760
    %1950 = vmatpush1.msra.mxu0 %v1949
    %v1951 = vand.u32 %v116, 4294901760
    %1952 = vmatprep.subr.mxu0 %v1951
    %v1953 = vand.u32 %v115, 4294901760
    %1954 = vmatpush1.msra.mxu0 %v1953
    %v1955 = vand.u32 %v109, 4294901760
    %1956 = vmatprep.subr.mxu0 %v1955
    %v1957 = vand.u32 %v108, 4294901760
    %1958 = vmatpush1.msra.mxu0 %v1957
    %v1959 = vand.u32 %v102, 4294901760
    %1960 = vmatprep.subr.mxu0 %v1959
    %v1961 = vand.u32 %v101, 4294901760
    %1962 = vmatpush1.msra.mxu0 %v1961
    %1963 = vmatprep.subr.mxu0 0.0
    %1964 = vmatpush2.msra.mxu0 0.0
    %1965 = vmatprep.subr.mxu0 0.0
    %1966 = vmatpush2.msra.mxu0 0.0
    %1967 = vmatprep.subr.mxu0 0.0
    %1968 = vmatpush2.msra.mxu0 0.0
    %1969 = vmatprep.subr.mxu0 0.0
    %1970 = vmatpush2.msra.mxu0 0.0
    %1971 = vmatprep.subr.mxu0 0.0
    %1972 = vmatpush2.msra.mxu0 0.0
    %1973 = vmatprep.subr.mxu0 0.0
    %1974 = vmatpush2.msra.mxu0 0.0
    %1975 = vmatprep.subr.mxu0 0.0
    %1976 = vmatpush2.msra.mxu0 0.0
    %1977 = vmatprep.subr.mxu0 0.0
    %1978 = vmatpush2.msra.mxu0 0.0
    %1979 = vmatprep.subr.mxu0 0.0
    %1980 = vmatpush2.msra.mxu0 0.0
    %1981 = vmatprep.subr.mxu0 0.0
    %1982 = vmatpush2.msra.mxu0 0.0
    %1983 = vmatprep.subr.mxu0 0.0
    %1984 = vmatpush2.msra.mxu0 0.0
    %1985 = vmatprep.subr.mxu0 0.0
    %1986 = vmatpush2.msra.mxu0 0.0
    %1987 = vmatprep.subr.mxu0 0.0
    %1988 = vmatpush2.msra.mxu0 0.0
    %1989 = vmatprep.subr.mxu0 0.0
    %1990 = vmatpush2.msra.mxu0 0.0
    %1991 = vmatprep.subr.mxu0 0.0
    %1992 = vmatpush2.msra.mxu0 0.0
    %1993 = vmatprep.subr.mxu0 0.0
    %1994 = vmatpush2.msra.mxu0 0.0
    %1995 = vmatprep.mubr.f32.mxu0 0.0
    %v1996 = vand.u32 %v161, 4294901760
    %v1997 = vsub.f32 %v161, %v1996
    %v1998 = vand.u32 %v1997, 4294901760
    %v1999 = vsub.f32 %v1997, %v1998
    %v2000 = vand.u32 %v1999, 4294901760
    %2001 = vmatmul.mubr.f32.gmra.mxu0 %v2000
    %v2002 = vpop.f32.mrf.mxu0
    %v2003 = vadd.f32 0.0, %v2002
    %v2004 = vpop.f32.mrf.mxu0
    %v2005 = vadd.f32 0.0, %v2004
    %2006 = vmatprep.mubr.f32.mxu0 0.0
    %v2007 = vand.u32 %v164, 4294901760
    %v2008 = vsub.f32 %v164, %v2007
    %v2009 = vand.u32 %v2008, 4294901760
    %v2010 = vsub.f32 %v2008, %v2009
    %v2011 = vand.u32 %v2010, 4294901760
    %2012 = vmatmul.mubr.f32.gmra.mxu0 %v2011
    %v2013 = vpop.f32.mrf.mxu0
    %v2014 = vadd.f32 0.0, %v2013
    %v2015 = vpop.f32.mrf.mxu0
    %v2016 = vadd.f32 0.0, %v2015
    %2017 = vmatprep.mubr.f32.mxu0 0.0
    %v2018 = vand.u32 %v167, 4294901760
    %v2019 = vsub.f32 %v167, %v2018
    %v2020 = vand.u32 %v2019, 4294901760
    %v2021 = vsub.f32 %v2019, %v2020
    %v2022 = vand.u32 %v2021, 4294901760
    %2023 = vmatmul.mubr.f32.gmra.mxu0 %v2022
    %v2024 = vpop.f32.mrf.mxu0
    %v2025 = vadd.f32 0.0, %v2024
    %v2026 = vpop.f32.mrf.mxu0
    %v2027 = vadd.f32 0.0, %v2026
    %2028 = vmatprep.mubr.f32.mxu0 0.0
    %v2029 = vand.u32 %v170, 4294901760
    %v2030 = vsub.f32 %v170, %v2029
    %v2031 = vand.u32 %v2030, 4294901760
    %v2032 = vsub.f32 %v2030, %v2031
    %v2033 = vand.u32 %v2032, 4294901760
    %2034 = vmatmul.mubr.f32.gmra.mxu0 %v2033
    %v2035 = vpop.f32.mrf.mxu0
    %v2036 = vadd.f32 0.0, %v2035
    %v2037 = vpop.f32.mrf.mxu0
    %v2038 = vadd.f32 0.0, %v2037
    %2039 = vmatprep.mubr.f32.mxu0 0.0
    %v2040 = vand.u32 %v173, 4294901760
    %v2041 = vsub.f32 %v173, %v2040
    %v2042 = vand.u32 %v2041, 4294901760
    %v2043 = vsub.f32 %v2041, %v2042
    %v2044 = vand.u32 %v2043, 4294901760
    %2045 = vmatmul.mubr.f32.gmra.mxu0 %v2044
    %v2046 = vpop.f32.mrf.mxu0
    %v2047 = vadd.f32 0.0, %v2046
    %v2048 = vpop.f32.mrf.mxu0
    %v2049 = vadd.f32 0.0, %v2048
    %2050 = vdwg.mxu0
    %2051 = vmatprep.subr.mxu0 0.0
    %2052 = vmatpush1.msra.mxu0 0.0
    %2053 = vmatprep.subr.mxu0 0.0
    %2054 = vmatpush1.msra.mxu0 0.0
    %2055 = vmatprep.subr.mxu0 0.0
    %2056 = vmatpush1.msra.mxu0 0.0
    %2057 = vmatprep.subr.mxu0 0.0
    %2058 = vmatpush1.msra.mxu0 0.0
    %2059 = vmatprep.subr.mxu0 0.0
    %2060 = vmatpush1.msra.mxu0 0.0
    %2061 = vmatprep.subr.mxu0 0.0
    %2062 = vmatpush1.msra.mxu0 0.0
    %2063 = vmatprep.subr.mxu0 0.0
    %2064 = vmatpush1.msra.mxu0 0.0
    %v2065 = vand.u32 %v158, 4294901760
    %v2066 = vsub.f32 %v158, %v2065
    %v2067 = vand.u32 %v2066, 4294901760
    %v2068 = vsub.f32 %v2066, %v2067
    %v2069 = vand.u32 %v2068, 4294901760
    %2070 = vmatprep.subr.mxu0 %v2069
    %v2071 = vand.u32 %v157, 4294901760
    %v2072 = vsub.f32 %v157, %v2071
    %v2073 = vand.u32 %v2072, 4294901760
    %v2074 = vsub.f32 %v2072, %v2073
    %v2075 = vand.u32 %v2074, 4294901760
    %2076 = vmatpush1.msra.mxu0 %v2075
    %v2077 = vand.u32 %v151, 4294901760
    %v2078 = vsub.f32 %v151, %v2077
    %v2079 = vand.u32 %v2078, 4294901760
    %v2080 = vsub.f32 %v2078, %v2079
    %v2081 = vand.u32 %v2080, 4294901760
    %2082 = vmatprep.subr.mxu0 %v2081
    %v2083 = vand.u32 %v150, 4294901760
    %v2084 = vsub.f32 %v150, %v2083
    %v2085 = vand.u32 %v2084, 4294901760
    %v2086 = vsub.f32 %v2084, %v2085
    %v2087 = vand.u32 %v2086, 4294901760
    %2088 = vmatpush1.msra.mxu0 %v2087
    %v2089 = vand.u32 %v144, 4294901760
    %v2090 = vsub.f32 %v144, %v2089
    %v2091 = vand.u32 %v2090, 4294901760
    %v2092 = vsub.f32 %v2090, %v2091
    %v2093 = vand.u32 %v2092, 4294901760
    %2094 = vmatprep.subr.mxu0 %v2093
    %v2095 = vand.u32 %v143, 4294901760
    %v2096 = vsub.f32 %v143, %v2095
    %v2097 = vand.u32 %v2096, 4294901760
    %v2098 = vsub.f32 %v2096, %v2097
    %v2099 = vand.u32 %v2098, 4294901760
    %2100 = vmatpush1.msra.mxu0 %v2099
    %v2101 = vand.u32 %v137, 4294901760
    %v2102 = vsub.f32 %v137, %v2101
    %v2103 = vand.u32 %v2102, 4294901760
    %v2104 = vsub.f32 %v2102, %v2103
    %v2105 = vand.u32 %v2104, 4294901760
    %2106 = vmatprep.subr.mxu0 %v2105
    %v2107 = vand.u32 %v136, 4294901760
    %v2108 = vsub.f32 %v136, %v2107
    %v2109 = vand.u32 %v2108, 4294901760
    %v2110 = vsub.f32 %v2108, %v2109
    %v2111 = vand.u32 %v2110, 4294901760
    %2112 = vmatpush1.msra.mxu0 %v2111
    %v2113 = vand.u32 %v130, 4294901760
    %v2114 = vsub.f32 %v130, %v2113
    %v2115 = vand.u32 %v2114, 4294901760
    %v2116 = vsub.f32 %v2114, %v2115
    %v2117 = vand.u32 %v2116, 4294901760
    %2118 = vmatprep.subr.mxu0 %v2117
    %v2119 = vand.u32 %v129, 4294901760
    %v2120 = vsub.f32 %v129, %v2119
    %v2121 = vand.u32 %v2120, 4294901760
    %v2122 = vsub.f32 %v2120, %v2121
    %v2123 = vand.u32 %v2122, 4294901760
    %2124 = vmatpush1.msra.mxu0 %v2123
    %v2125 = vand.u32 %v123, 4294901760
    %v2126 = vsub.f32 %v123, %v2125
    %v2127 = vand.u32 %v2126, 4294901760
    %v2128 = vsub.f32 %v2126, %v2127
    %v2129 = vand.u32 %v2128, 4294901760
    %2130 = vmatprep.subr.mxu0 %v2129
    %v2131 = vand.u32 %v122, 4294901760
    %v2132 = vsub.f32 %v122, %v2131
    %v2133 = vand.u32 %v2132, 4294901760
    %v2134 = vsub.f32 %v2132, %v2133
    %v2135 = vand.u32 %v2134, 4294901760
    %2136 = vmatpush1.msra.mxu0 %v2135
    %v2137 = vand.u32 %v116, 4294901760
    %v2138 = vsub.f32 %v116, %v2137
    %v2139 = vand.u32 %v2138, 4294901760
    %v2140 = vsub.f32 %v2138, %v2139
    %v2141 = vand.u32 %v2140, 4294901760
    %2142 = vmatprep.subr.mxu0 %v2141
    %v2143 = vand.u32 %v115, 4294901760
    %v2144 = vsub.f32 %v115, %v2143
    %v2145 = vand.u32 %v2144, 4294901760
    %v2146 = vsub.f32 %v2144, %v2145
    %v2147 = vand.u32 %v2146, 4294901760
    %2148 = vmatpush1.msra.mxu0 %v2147
    %v2149 = vand.u32 %v109, 4294901760
    %v2150 = vsub.f32 %v109, %v2149
    %v2151 = vand.u32 %v2150, 4294901760
    %v2152 = vsub.f32 %v2150, %v2151
    %v2153 = vand.u32 %v2152, 4294901760
    %2154 = vmatprep.subr.mxu0 %v2153
    %v2155 = vand.u32 %v108, 4294901760
    %v2156 = vsub.f32 %v108, %v2155
    %v2157 = vand.u32 %v2156, 4294901760
    %v2158 = vsub.f32 %v2156, %v2157
    %v2159 = vand.u32 %v2158, 4294901760
    %2160 = vmatpush1.msra.mxu0 %v2159
    %v2161 = vand.u32 %v102, 4294901760
    %v2162 = vsub.f32 %v102, %v2161
    %v2163 = vand.u32 %v2162, 4294901760
    %v2164 = vsub.f32 %v2162, %v2163
    %v2165 = vand.u32 %v2164, 4294901760
    %2166 = vmatprep.subr.mxu0 %v2165
    %v2167 = vand.u32 %v101, 4294901760
    %v2168 = vsub.f32 %v101, %v2167
    %v2169 = vand.u32 %v2168, 4294901760
    %v2170 = vsub.f32 %v2168, %v2169
    %v2171 = vand.u32 %v2170, 4294901760
    %2172 = vmatpush1.msra.mxu0 %v2171
    %2173 = vmatprep.subr.mxu0 0.0
    %2174 = vmatpush2.msra.mxu0 0.0
    %2175 = vmatprep.subr.mxu0 0.0
    %2176 = vmatpush2.msra.mxu0 0.0
    %2177 = vmatprep.subr.mxu0 0.0
    %2178 = vmatpush2.msra.mxu0 0.0
    %2179 = vmatprep.subr.mxu0 0.0
    %2180 = vmatpush2.msra.mxu0 0.0
    %2181 = vmatprep.subr.mxu0 0.0
    %2182 = vmatpush2.msra.mxu0 0.0
    %2183 = vmatprep.subr.mxu0 0.0
    %2184 = vmatpush2.msra.mxu0 0.0
    %2185 = vmatprep.subr.mxu0 0.0
    %2186 = vmatpush2.msra.mxu0 0.0
    %2187 = vmatprep.subr.mxu0 0.0
    %2188 = vmatpush2.msra.mxu0 0.0
    %2189 = vmatprep.subr.mxu0 0.0
    %2190 = vmatpush2.msra.mxu0 0.0
    %2191 = vmatprep.subr.mxu0 0.0
    %2192 = vmatpush2.msra.mxu0 0.0
    %2193 = vmatprep.subr.mxu0 0.0
    %2194 = vmatpush2.msra.mxu0 0.0
    %2195 = vmatprep.subr.mxu0 0.0
    %2196 = vmatpush2.msra.mxu0 0.0
    %2197 = vmatprep.subr.mxu0 0.0
    %2198 = vmatpush2.msra.mxu0 0.0
    %2199 = vmatprep.subr.mxu0 0.0
    %2200 = vmatpush2.msra.mxu0 0.0
    %2201 = vmatprep.subr.mxu0 0.0
    %2202 = vmatpush2.msra.mxu0 0.0
    %2203 = vmatprep.subr.mxu0 0.0
    %2204 = vmatpush2.msra.mxu0 0.0
    %2205 = vmatprep.mubr.f32.mxu0 0.0
    %v2206 = vand.u32 %v161, 4294901760
    %2207 = vmatmul.mubr.f32.gmra.mxu0 %v2206
    %v2208 = vpop.f32.mrf.mxu0
    %v2209 = vadd.f32 %v2003, %v2208
    %v2210 = vpop.f32.mrf.mxu0
    %v2211 = vadd.f32 %v2005, %v2210
    %2212 = vmatprep.mubr.f32.mxu0 0.0
    %v2213 = vand.u32 %v164, 4294901760
    %2214 = vmatmul.mubr.f32.gmra.mxu0 %v2213
    %v2215 = vpop.f32.mrf.mxu0
    %v2216 = vadd.f32 %v2014, %v2215
    %v2217 = vpop.f32.mrf.mxu0
    %v2218 = vadd.f32 %v2016, %v2217
    %2219 = vmatprep.mubr.f32.mxu0 0.0
    %v2220 = vand.u32 %v167, 4294901760
    %2221 = vmatmul.mubr.f32.gmra.mxu0 %v2220
    %v2222 = vpop.f32.mrf.mxu0
    %v2223 = vadd.f32 %v2025, %v2222
    %v2224 = vpop.f32.mrf.mxu0
    %v2225 = vadd.f32 %v2027, %v2224
    %2226 = vmatprep.mubr.f32.mxu0 0.0
    %v2227 = vand.u32 %v170, 4294901760
    %2228 = vmatmul.mubr.f32.gmra.mxu0 %v2227
    %v2229 = vpop.f32.mrf.mxu0
    %v2230 = vadd.f32 %v2036, %v2229
    %v2231 = vpop.f32.mrf.mxu0
    %v2232 = vadd.f32 %v2038, %v2231
    %2233 = vmatprep.mubr.f32.mxu0 0.0
    %v2234 = vand.u32 %v173, 4294901760
    %2235 = vmatmul.mubr.f32.gmra.mxu0 %v2234
    %v2236 = vpop.f32.mrf.mxu0
    %v2237 = vadd.f32 %v2047, %v2236
    %v2238 = vpop.f32.mrf.mxu0
    %v2239 = vadd.f32 %v2049, %v2238
    %2240 = vdwg.mxu0
    %2241 = vmatprep.subr.mxu0 0.0
    %2242 = vmatpush1.msra.mxu0 0.0
    %2243 = vmatprep.subr.mxu0 0.0
    %2244 = vmatpush1.msra.mxu0 0.0
    %2245 = vmatprep.subr.mxu0 0.0
    %2246 = vmatpush1.msra.mxu0 0.0
    %2247 = vmatprep.subr.mxu0 0.0
    %2248 = vmatpush1.msra.mxu0 0.0
    %2249 = vmatprep.subr.mxu0 0.0
    %2250 = vmatpush1.msra.mxu0 0.0
    %2251 = vmatprep.subr.mxu0 0.0
    %2252 = vmatpush1.msra.mxu0 0.0
    %2253 = vmatprep.subr.mxu0 0.0
    %2254 = vmatpush1.msra.mxu0 0.0
    %v2255 = vand.u32 %v158, 4294901760
    %v2256 = vsub.f32 %v158, %v2255
    %2257 = vmatprep.subr.mxu0 %v2256
    %v2258 = vand.u32 %v157, 4294901760
    %v2259 = vsub.f32 %v157, %v2258
    %2260 = vmatpush1.msra.mxu0 %v2259
    %v2261 = vand.u32 %v151, 4294901760
    %v2262 = vsub.f32 %v151, %v2261
    %2263 = vmatprep.subr.mxu0 %v2262
    %v2264 = vand.u32 %v150, 4294901760
    %v2265 = vsub.f32 %v150, %v2264
    %2266 = vmatpush1.msra.mxu0 %v2265
    %v2267 = vand.u32 %v144, 4294901760
    %v2268 = vsub.f32 %v144, %v2267
    %2269 = vmatprep.subr.mxu0 %v2268
    %v2270 = vand.u32 %v143, 4294901760
    %v2271 = vsub.f32 %v143, %v2270
    %2272 = vmatpush1.msra.mxu0 %v2271
    %v2273 = vand.u32 %v137, 4294901760
    %v2274 = vsub.f32 %v137, %v2273
    %2275 = vmatprep.subr.mxu0 %v2274
    %v2276 = vand.u32 %v136, 4294901760
    %v2277 = vsub.f32 %v136, %v2276
    %2278 = vmatpush1.msra.mxu0 %v2277
    %v2279 = vand.u32 %v130, 4294901760
    %v2280 = vsub.f32 %v130, %v2279
    %2281 = vmatprep.subr.mxu0 %v2280
    %v2282 = vand.u32 %v129, 4294901760
    %v2283 = vsub.f32 %v129, %v2282
    %2284 = vmatpush1.msra.mxu0 %v2283
    %v2285 = vand.u32 %v123, 4294901760
    %v2286 = vsub.f32 %v123, %v2285
    %2287 = vmatprep.subr.mxu0 %v2286
    %v2288 = vand.u32 %v122, 4294901760
    %v2289 = vsub.f32 %v122, %v2288
    %2290 = vmatpush1.msra.mxu0 %v2289
    %v2291 = vand.u32 %v116, 4294901760
    %v2292 = vsub.f32 %v116, %v2291
    %2293 = vmatprep.subr.mxu0 %v2292
    %v2294 = vand.u32 %v115, 4294901760
    %v2295 = vsub.f32 %v115, %v2294
    %2296 = vmatpush1.msra.mxu0 %v2295
    %v2297 = vand.u32 %v109, 4294901760
    %v2298 = vsub.f32 %v109, %v2297
    %2299 = vmatprep.subr.mxu0 %v2298
    %v2300 = vand.u32 %v108, 4294901760
    %v2301 = vsub.f32 %v108, %v2300
    %2302 = vmatpush1.msra.mxu0 %v2301
    %v2303 = vand.u32 %v102, 4294901760
    %v2304 = vsub.f32 %v102, %v2303
    %2305 = vmatprep.subr.mxu0 %v2304
    %v2306 = vand.u32 %v101, 4294901760
    %v2307 = vsub.f32 %v101, %v2306
    %2308 = vmatpush1.msra.mxu0 %v2307
    %2309 = vmatprep.subr.mxu0 0.0
    %2310 = vmatpush2.msra.mxu0 0.0
    %2311 = vmatprep.subr.mxu0 0.0
    %2312 = vmatpush2.msra.mxu0 0.0
    %2313 = vmatprep.subr.mxu0 0.0
    %2314 = vmatpush2.msra.mxu0 0.0
    %2315 = vmatprep.subr.mxu0 0.0
    %2316 = vmatpush2.msra.mxu0 0.0
    %2317 = vmatprep.subr.mxu0 0.0
    %2318 = vmatpush2.msra.mxu0 0.0
    %2319 = vmatprep.subr.mxu0 0.0
    %2320 = vmatpush2.msra.mxu0 0.0
    %2321 = vmatprep.subr.mxu0 0.0
    %2322 = vmatpush2.msra.mxu0 0.0
    %2323 = vmatprep.subr.mxu0 0.0
    %2324 = vmatpush2.msra.mxu0 0.0
    %2325 = vmatprep.subr.mxu0 0.0
    %2326 = vmatpush2.msra.mxu0 0.0
    %2327 = vmatprep.subr.mxu0 0.0
    %2328 = vmatpush2.msra.mxu0 0.0
    %2329 = vmatprep.subr.mxu0 0.0
    %2330 = vmatpush2.msra.mxu0 0.0
    %2331 = vmatprep.subr.mxu0 0.0
    %2332 = vmatpush2.msra.mxu0 0.0
    %2333 = vmatprep.subr.mxu0 0.0
    %2334 = vmatpush2.msra.mxu0 0.0
    %2335 = vmatprep.subr.mxu0 0.0
    %2336 = vmatpush2.msra.mxu0 0.0
    %2337 = vmatprep.subr.mxu0 0.0
    %2338 = vmatpush2.msra.mxu0 0.0
    %2339 = vmatprep.subr.mxu0 0.0
    %2340 = vmatpush2.msra.mxu0 0.0
    %2341 = vmatprep.mubr.f32.mxu0 0.0
    %v2342 = vand.u32 %v161, 4294901760
    %v2343 = vsub.f32 %v161, %v2342
    %2344 = vmatmul.mubr.f32.gmra.mxu0 %v2343
    %v2345 = vpop.f32.mrf.mxu0
    %v2346 = vadd.f32 %v2209, %v2345
    %v2347 = vpop.f32.mrf.mxu0
    %v2348 = vadd.f32 %v2211, %v2347
    %2349 = vmatprep.mubr.f32.mxu0 0.0
    %v2350 = vand.u32 %v164, 4294901760
    %v2351 = vsub.f32 %v164, %v2350
    %2352 = vmatmul.mubr.f32.gmra.mxu0 %v2351
    %v2353 = vpop.f32.mrf.mxu0
    %v2354 = vadd.f32 %v2216, %v2353
    %v2355 = vpop.f32.mrf.mxu0
    %v2356 = vadd.f32 %v2218, %v2355
    %2357 = vmatprep.mubr.f32.mxu0 0.0
    %v2358 = vand.u32 %v167, 4294901760
    %v2359 = vsub.f32 %v167, %v2358
    %2360 = vmatmul.mubr.f32.gmra.mxu0 %v2359
    %v2361 = vpop.f32.mrf.mxu0
    %v2362 = vadd.f32 %v2223, %v2361
    %v2363 = vpop.f32.mrf.mxu0
    %v2364 = vadd.f32 %v2225, %v2363
    %2365 = vmatprep.mubr.f32.mxu0 0.0
    %v2366 = vand.u32 %v170, 4294901760
    %v2367 = vsub.f32 %v170, %v2366
    %2368 = vmatmul.mubr.f32.gmra.mxu0 %v2367
    %v2369 = vpop.f32.mrf.mxu0
    %v2370 = vadd.f32 %v2230, %v2369
    %v2371 = vpop.f32.mrf.mxu0
    %v2372 = vadd.f32 %v2232, %v2371
    %2373 = vmatprep.mubr.f32.mxu0 0.0
    %v2374 = vand.u32 %v173, 4294901760
    %v2375 = vsub.f32 %v173, %v2374
    %2376 = vmatmul.mubr.f32.gmra.mxu0 %v2375
    %v2377 = vpop.f32.mrf.mxu0
    %v2378 = vadd.f32 %v2237, %v2377
    %v2379 = vpop.f32.mrf.mxu0
    %v2380 = vadd.f32 %v2239, %v2379
    %2381 = vdwg.mxu0
    %2382 = vmatprep.subr.mxu0 0.0
    %2383 = vmatpush1.msra.mxu0 0.0
    %2384 = vmatprep.subr.mxu0 0.0
    %2385 = vmatpush1.msra.mxu0 0.0
    %2386 = vmatprep.subr.mxu0 0.0
    %2387 = vmatpush1.msra.mxu0 0.0
    %2388 = vmatprep.subr.mxu0 0.0
    %2389 = vmatpush1.msra.mxu0 0.0
    %2390 = vmatprep.subr.mxu0 0.0
    %2391 = vmatpush1.msra.mxu0 0.0
    %2392 = vmatprep.subr.mxu0 0.0
    %2393 = vmatpush1.msra.mxu0 0.0
    %2394 = vmatprep.subr.mxu0 0.0
    %2395 = vmatpush1.msra.mxu0 0.0
    %v2396 = vand.u32 %v158, 4294901760
    %2397 = vmatprep.subr.mxu0 %v2396
    %v2398 = vand.u32 %v157, 4294901760
    %2399 = vmatpush1.msra.mxu0 %v2398
    %v2400 = vand.u32 %v151, 4294901760
    %2401 = vmatprep.subr.mxu0 %v2400
    %v2402 = vand.u32 %v150, 4294901760
    %2403 = vmatpush1.msra.mxu0 %v2402
    %v2404 = vand.u32 %v144, 4294901760
    %2405 = vmatprep.subr.mxu0 %v2404
    %v2406 = vand.u32 %v143, 4294901760
    %2407 = vmatpush1.msra.mxu0 %v2406
    %v2408 = vand.u32 %v137, 4294901760
    %2409 = vmatprep.subr.mxu0 %v2408
    %v2410 = vand.u32 %v136, 4294901760
    %2411 = vmatpush1.msra.mxu0 %v2410
    %v2412 = vand.u32 %v130, 4294901760
    %2413 = vmatprep.subr.mxu0 %v2412
    %v2414 = vand.u32 %v129, 4294901760
    %2415 = vmatpush1.msra.mxu0 %v2414
    %v2416 = vand.u32 %v123, 4294901760
    %2417 = vmatprep.subr.mxu0 %v2416
    %v2418 = vand.u32 %v122, 4294901760
    %2419 = vmatpush1.msra.mxu0 %v2418
    %v2420 = vand.u32 %v116, 4294901760
    %2421 = vmatprep.subr.mxu0 %v2420
    %v2422 = vand.u32 %v115, 4294901760
    %2423 = vmatpush1.msra.mxu0 %v2422
    %v2424 = vand.u32 %v109, 4294901760
    %2425 = vmatprep.subr.mxu0 %v2424
    %v2426 = vand.u32 %v108, 4294901760
    %2427 = vmatpush1.msra.mxu0 %v2426
    %v2428 = vand.u32 %v102, 4294901760
    %2429 = vmatprep.subr.mxu0 %v2428
    %v2430 = vand.u32 %v101, 4294901760
    %2431 = vmatpush1.msra.mxu0 %v2430
    %2432 = vmatprep.subr.mxu0 0.0
    %2433 = vmatpush2.msra.mxu0 0.0
    %2434 = vmatprep.subr.mxu0 0.0
    %2435 = vmatpush2.msra.mxu0 0.0
    %2436 = vmatprep.subr.mxu0 0.0
    %2437 = vmatpush2.msra.mxu0 0.0
    %2438 = vmatprep.subr.mxu0 0.0
    %2439 = vmatpush2.msra.mxu0 0.0
    %2440 = vmatprep.subr.mxu0 0.0
    %2441 = vmatpush2.msra.mxu0 0.0
    %2442 = vmatprep.subr.mxu0 0.0
    %2443 = vmatpush2.msra.mxu0 0.0
    %2444 = vmatprep.subr.mxu0 0.0
    %2445 = vmatpush2.msra.mxu0 0.0
    %2446 = vmatprep.subr.mxu0 0.0
    %2447 = vmatpush2.msra.mxu0 0.0
    %2448 = vmatprep.subr.mxu0 0.0
    %2449 = vmatpush2.msra.mxu0 0.0
    %2450 = vmatprep.subr.mxu0 0.0
    %2451 = vmatpush2.msra.mxu0 0.0
    %2452 = vmatprep.subr.mxu0 0.0
    %2453 = vmatpush2.msra.mxu0 0.0
    %2454 = vmatprep.subr.mxu0 0.0
    %2455 = vmatpush2.msra.mxu0 0.0
    %2456 = vmatprep.subr.mxu0 0.0
    %2457 = vmatpush2.msra.mxu0 0.0
    %2458 = vmatprep.subr.mxu0 0.0
    %2459 = vmatpush2.msra.mxu0 0.0
    %2460 = vmatprep.subr.mxu0 0.0
    %2461 = vmatpush2.msra.mxu0 0.0
    %2462 = vmatprep.subr.mxu0 0.0
    %2463 = vmatpush2.msra.mxu0 0.0
    %2464 = vmatprep.mubr.f32.mxu0 0.0
    %v2465 = vand.u32 %v161, 4294901760
    %v2466 = vsub.f32 %v161, %v2465
    %v2467 = vand.u32 %v2466, 4294901760
    %2468 = vmatmul.mubr.f32.gmra.mxu0 %v2467
    %v2469 = vpop.f32.mrf.mxu0
    %v2470 = vadd.f32 %v2346, %v2469
    %v2471 = vpop.f32.mrf.mxu0
    %v2472 = vadd.f32 %v2348, %v2471
    %2473 = vmatprep.mubr.f32.mxu0 0.0
    %v2474 = vand.u32 %v164, 4294901760
    %v2475 = vsub.f32 %v164, %v2474
    %v2476 = vand.u32 %v2475, 4294901760
    %2477 = vmatmul.mubr.f32.gmra.mxu0 %v2476
    %v2478 = vpop.f32.mrf.mxu0
    %v2479 = vadd.f32 %v2354, %v2478
    %v2480 = vpop.f32.mrf.mxu0
    %v2481 = vadd.f32 %v2356, %v2480
    %2482 = vmatprep.mubr.f32.mxu0 0.0
    %v2483 = vand.u32 %v167, 4294901760
    %v2484 = vsub.f32 %v167, %v2483
    %v2485 = vand.u32 %v2484, 4294901760
    %2486 = vmatmul.mubr.f32.gmra.mxu0 %v2485
    %v2487 = vpop.f32.mrf.mxu0
    %v2488 = vadd.f32 %v2362, %v2487
    %v2489 = vpop.f32.mrf.mxu0
    %v2490 = vadd.f32 %v2364, %v2489
    %2491 = vmatprep.mubr.f32.mxu0 0.0
    %v2492 = vand.u32 %v170, 4294901760
    %v2493 = vsub.f32 %v170, %v2492
    %v2494 = vand.u32 %v2493, 4294901760
    %2495 = vmatmul.mubr.f32.gmra.mxu0 %v2494
    %v2496 = vpop.f32.mrf.mxu0
    %v2497 = vadd.f32 %v2370, %v2496
    %v2498 = vpop.f32.mrf.mxu0
    %v2499 = vadd.f32 %v2372, %v2498
    %2500 = vmatprep.mubr.f32.mxu0 0.0
    %v2501 = vand.u32 %v173, 4294901760
    %v2502 = vsub.f32 %v173, %v2501
    %v2503 = vand.u32 %v2502, 4294901760
    %2504 = vmatmul.mubr.f32.gmra.mxu0 %v2503
    %v2505 = vpop.f32.mrf.mxu0
    %v2506 = vadd.f32 %v2378, %v2505
    %v2507 = vpop.f32.mrf.mxu0
    %v2508 = vadd.f32 %v2380, %v2507
    %2509 = vdwg.mxu0
    %2510 = vmatprep.subr.mxu0 0.0
    %2511 = vmatpush1.msra.mxu0 0.0
    %2512 = vmatprep.subr.mxu0 0.0
    %2513 = vmatpush1.msra.mxu0 0.0
    %2514 = vmatprep.subr.mxu0 0.0
    %2515 = vmatpush1.msra.mxu0 0.0
    %2516 = vmatprep.subr.mxu0 0.0
    %2517 = vmatpush1.msra.mxu0 0.0
    %2518 = vmatprep.subr.mxu0 0.0
    %2519 = vmatpush1.msra.mxu0 0.0
    %2520 = vmatprep.subr.mxu0 0.0
    %2521 = vmatpush1.msra.mxu0 0.0
    %2522 = vmatprep.subr.mxu0 0.0
    %2523 = vmatpush1.msra.mxu0 0.0
    %v2524 = vand.u32 %v158, 4294901760
    %v2525 = vsub.f32 %v158, %v2524
    %v2526 = vand.u32 %v2525, 4294901760
    %2527 = vmatprep.subr.mxu0 %v2526
    %v2528 = vand.u32 %v157, 4294901760
    %v2529 = vsub.f32 %v157, %v2528
    %v2530 = vand.u32 %v2529, 4294901760
    %2531 = vmatpush1.msra.mxu0 %v2530
    %v2532 = vand.u32 %v151, 4294901760
    %v2533 = vsub.f32 %v151, %v2532
    %v2534 = vand.u32 %v2533, 4294901760
    %2535 = vmatprep.subr.mxu0 %v2534
    %v2536 = vand.u32 %v150, 4294901760
    %v2537 = vsub.f32 %v150, %v2536
    %v2538 = vand.u32 %v2537, 4294901760
    %2539 = vmatpush1.msra.mxu0 %v2538
    %v2540 = vand.u32 %v144, 4294901760
    %v2541 = vsub.f32 %v144, %v2540
    %v2542 = vand.u32 %v2541, 4294901760
    %2543 = vmatprep.subr.mxu0 %v2542
    %v2544 = vand.u32 %v143, 4294901760
    %v2545 = vsub.f32 %v143, %v2544
    %v2546 = vand.u32 %v2545, 4294901760
    %2547 = vmatpush1.msra.mxu0 %v2546
    %v2548 = vand.u32 %v137, 4294901760
    %v2549 = vsub.f32 %v137, %v2548
    %v2550 = vand.u32 %v2549, 4294901760
    %2551 = vmatprep.subr.mxu0 %v2550
    %v2552 = vand.u32 %v136, 4294901760
    %v2553 = vsub.f32 %v136, %v2552
    %v2554 = vand.u32 %v2553, 4294901760
    %2555 = vmatpush1.msra.mxu0 %v2554
    %v2556 = vand.u32 %v130, 4294901760
    %v2557 = vsub.f32 %v130, %v2556
    %v2558 = vand.u32 %v2557, 4294901760
    %2559 = vmatprep.subr.mxu0 %v2558
    %v2560 = vand.u32 %v129, 4294901760
    %v2561 = vsub.f32 %v129, %v2560
    %v2562 = vand.u32 %v2561, 4294901760
    %2563 = vmatpush1.msra.mxu0 %v2562
    %v2564 = vand.u32 %v123, 4294901760
    %v2565 = vsub.f32 %v123, %v2564
    %v2566 = vand.u32 %v2565, 4294901760
    %2567 = vmatprep.subr.mxu0 %v2566
    %v2568 = vand.u32 %v122, 4294901760
    %v2569 = vsub.f32 %v122, %v2568
    %v2570 = vand.u32 %v2569, 4294901760
    %2571 = vmatpush1.msra.mxu0 %v2570
    %v2572 = vand.u32 %v116, 4294901760
    %v2573 = vsub.f32 %v116, %v2572
    %v2574 = vand.u32 %v2573, 4294901760
    %2575 = vmatprep.subr.mxu0 %v2574
    %v2576 = vand.u32 %v115, 4294901760
    %v2577 = vsub.f32 %v115, %v2576
    %v2578 = vand.u32 %v2577, 4294901760
    %2579 = vmatpush1.msra.mxu0 %v2578
    %v2580 = vand.u32 %v109, 4294901760
    %v2581 = vsub.f32 %v109, %v2580
    %v2582 = vand.u32 %v2581, 4294901760
    %2583 = vmatprep.subr.mxu0 %v2582
    %v2584 = vand.u32 %v108, 4294901760
    %v2585 = vsub.f32 %v108, %v2584
    %v2586 = vand.u32 %v2585, 4294901760
    %2587 = vmatpush1.msra.mxu0 %v2586
    %v2588 = vand.u32 %v102, 4294901760
    %v2589 = vsub.f32 %v102, %v2588
    %v2590 = vand.u32 %v2589, 4294901760
    %2591 = vmatprep.subr.mxu0 %v2590
    %v2592 = vand.u32 %v101, 4294901760
    %v2593 = vsub.f32 %v101, %v2592
    %v2594 = vand.u32 %v2593, 4294901760
    %2595 = vmatpush1.msra.mxu0 %v2594
    %2596 = vmatprep.subr.mxu0 0.0
    %2597 = vmatpush2.msra.mxu0 0.0
    %2598 = vmatprep.subr.mxu0 0.0
    %2599 = vmatpush2.msra.mxu0 0.0
    %2600 = vmatprep.subr.mxu0 0.0
    %2601 = vmatpush2.msra.mxu0 0.0
    %2602 = vmatprep.subr.mxu0 0.0
    %2603 = vmatpush2.msra.mxu0 0.0
    %2604 = vmatprep.subr.mxu0 0.0
    %2605 = vmatpush2.msra.mxu0 0.0
    %2606 = vmatprep.subr.mxu0 0.0
    %2607 = vmatpush2.msra.mxu0 0.0
    %2608 = vmatprep.subr.mxu0 0.0
    %2609 = vmatpush2.msra.mxu0 0.0
    %2610 = vmatprep.subr.mxu0 0.0
    %2611 = vmatpush2.msra.mxu0 0.0
    %2612 = vmatprep.subr.mxu0 0.0
    %2613 = vmatpush2.msra.mxu0 0.0
    %2614 = vmatprep.subr.mxu0 0.0
    %2615 = vmatpush2.msra.mxu0 0.0
    %2616 = vmatprep.subr.mxu0 0.0
    %2617 = vmatpush2.msra.mxu0 0.0
    %2618 = vmatprep.subr.mxu0 0.0
    %2619 = vmatpush2.msra.mxu0 0.0
    %2620 = vmatprep.subr.mxu0 0.0
    %2621 = vmatpush2.msra.mxu0 0.0
    %2622 = vmatprep.subr.mxu0 0.0
    %2623 = vmatpush2.msra.mxu0 0.0
    %2624 = vmatprep.subr.mxu0 0.0
    %2625 = vmatpush2.msra.mxu0 0.0
    %2626 = vmatprep.subr.mxu0 0.0
    %2627 = vmatpush2.msra.mxu0 0.0
    %2628 = vmatprep.mubr.f32.mxu0 0.0
    %v2629 = vand.u32 %v161, 4294901760
    %2630 = vmatmul.mubr.f32.gmra.mxu0 %v2629
    %v2631 = vpop.f32.mrf.mxu0
    %v2632 = vadd.f32 %v2470, %v2631
    %v2633 = vpop.f32.mrf.mxu0
    %v2634 = vadd.f32 %v2472, %v2633
    %2635 = vmatprep.mubr.f32.mxu0 0.0
    %v2636 = vand.u32 %v164, 4294901760
    %2637 = vmatmul.mubr.f32.gmra.mxu0 %v2636
    %v2638 = vpop.f32.mrf.mxu0
    %v2639 = vadd.f32 %v2479, %v2638
    %v2640 = vpop.f32.mrf.mxu0
    %v2641 = vadd.f32 %v2481, %v2640
    %2642 = vmatprep.mubr.f32.mxu0 0.0
    %v2643 = vand.u32 %v167, 4294901760
    %2644 = vmatmul.mubr.f32.gmra.mxu0 %v2643
    %v2645 = vpop.f32.mrf.mxu0
    %v2646 = vadd.f32 %v2488, %v2645
    %v2647 = vpop.f32.mrf.mxu0
    %v2648 = vadd.f32 %v2490, %v2647
    %2649 = vmatprep.mubr.f32.mxu0 0.0
    %v2650 = vand.u32 %v170, 4294901760
    %2651 = vmatmul.mubr.f32.gmra.mxu0 %v2650
    %v2652 = vpop.f32.mrf.mxu0
    %v2653 = vadd.f32 %v2497, %v2652
    %v2654 = vpop.f32.mrf.mxu0
    %v2655 = vadd.f32 %v2499, %v2654
    %2656 = vmatprep.mubr.f32.mxu0 0.0
    %v2657 = vand.u32 %v173, 4294901760
    %2658 = vmatmul.mubr.f32.gmra.mxu0 %v2657
    %v2659 = vpop.f32.mrf.mxu0
    %v2660 = vadd.f32 %v2506, %v2659
    %v2661 = vpop.f32.mrf.mxu0
    %v2662 = vadd.f32 %v2508, %v2661
    %2663 = vdwg.mxu0
    %2664 = vmatprep.subr.mxu0 0.0
    %2665 = vmatpush1.msra.mxu0 0.0
    %2666 = vmatprep.subr.mxu0 0.0
    %2667 = vmatpush1.msra.mxu0 0.0
    %2668 = vmatprep.subr.mxu0 0.0
    %2669 = vmatpush1.msra.mxu0 0.0
    %2670 = vmatprep.subr.mxu0 0.0
    %2671 = vmatpush1.msra.mxu0 0.0
    %2672 = vmatprep.subr.mxu0 0.0
    %2673 = vmatpush1.msra.mxu0 0.0
    %2674 = vmatprep.subr.mxu0 0.0
    %2675 = vmatpush1.msra.mxu0 0.0
    %2676 = vmatprep.subr.mxu0 0.0
    %2677 = vmatpush1.msra.mxu0 0.0
    %v2678 = vand.u32 %v158, 4294901760
    %2679 = vmatprep.subr.mxu0 %v2678
    %v2680 = vand.u32 %v157, 4294901760
    %2681 = vmatpush1.msra.mxu0 %v2680
    %v2682 = vand.u32 %v151, 4294901760
    %2683 = vmatprep.subr.mxu0 %v2682
    %v2684 = vand.u32 %v150, 4294901760
    %2685 = vmatpush1.msra.mxu0 %v2684
    %v2686 = vand.u32 %v144, 4294901760
    %2687 = vmatprep.subr.mxu0 %v2686
    %v2688 = vand.u32 %v143, 4294901760
    %2689 = vmatpush1.msra.mxu0 %v2688
    %v2690 = vand.u32 %v137, 4294901760
    %2691 = vmatprep.subr.mxu0 %v2690
    %v2692 = vand.u32 %v136, 4294901760
    %2693 = vmatpush1.msra.mxu0 %v2692
    %v2694 = vand.u32 %v130, 4294901760
    %2695 = vmatprep.subr.mxu0 %v2694
    %v2696 = vand.u32 %v129, 4294901760
    %2697 = vmatpush1.msra.mxu0 %v2696
    %v2698 = vand.u32 %v123, 4294901760
    %2699 = vmatprep.subr.mxu0 %v2698
    %v2700 = vand.u32 %v122, 4294901760
    %2701 = vmatpush1.msra.mxu0 %v2700
    %v2702 = vand.u32 %v116, 4294901760
    %2703 = vmatprep.subr.mxu0 %v2702
    %v2704 = vand.u32 %v115, 4294901760
    %2705 = vmatpush1.msra.mxu0 %v2704
    %v2706 = vand.u32 %v109, 4294901760
    %2707 = vmatprep.subr.mxu0 %v2706
    %v2708 = vand.u32 %v108, 4294901760
    %2709 = vmatpush1.msra.mxu0 %v2708
    %v2710 = vand.u32 %v102, 4294901760
    %2711 = vmatprep.subr.mxu0 %v2710
    %v2712 = vand.u32 %v101, 4294901760
    %2713 = vmatpush1.msra.mxu0 %v2712
    %2714 = vmatprep.subr.mxu0 0.0
    %2715 = vmatpush2.msra.mxu0 0.0
    %2716 = vmatprep.subr.mxu0 0.0
    %2717 = vmatpush2.msra.mxu0 0.0
    %2718 = vmatprep.subr.mxu0 0.0
    %2719 = vmatpush2.msra.mxu0 0.0
    %2720 = vmatprep.subr.mxu0 0.0
    %2721 = vmatpush2.msra.mxu0 0.0
    %2722 = vmatprep.subr.mxu0 0.0
    %2723 = vmatpush2.msra.mxu0 0.0
    %2724 = vmatprep.subr.mxu0 0.0
    %2725 = vmatpush2.msra.mxu0 0.0
    %2726 = vmatprep.subr.mxu0 0.0
    %2727 = vmatpush2.msra.mxu0 0.0
    %2728 = vmatprep.subr.mxu0 0.0
    %2729 = vmatpush2.msra.mxu0 0.0
    %2730 = vmatprep.subr.mxu0 0.0
    %2731 = vmatpush2.msra.mxu0 0.0
    %2732 = vmatprep.subr.mxu0 0.0
    %2733 = vmatpush2.msra.mxu0 0.0
    %2734 = vmatprep.subr.mxu0 0.0
    %2735 = vmatpush2.msra.mxu0 0.0
    %2736 = vmatprep.subr.mxu0 0.0
    %2737 = vmatpush2.msra.mxu0 0.0
    %2738 = vmatprep.subr.mxu0 0.0
    %2739 = vmatpush2.msra.mxu0 0.0
    %2740 = vmatprep.subr.mxu0 0.0
    %2741 = vmatpush2.msra.mxu0 0.0
    %2742 = vmatprep.subr.mxu0 0.0
    %2743 = vmatpush2.msra.mxu0 0.0
    %2744 = vmatprep.subr.mxu0 0.0
    %2745 = vmatpush2.msra.mxu0 0.0
    %2746 = vmatprep.mubr.f32.mxu0 0.0
    %v2747 = vand.u32 %v161, 4294901760
    %2748 = vmatmul.mubr.f32.gmra.mxu0 %v2747
    %v2749 = vpop.f32.mrf.mxu0
    %v2750 = vadd.f32 %v2632, %v2749
    %v2751 = vpop.f32.mrf.mxu0
    %v2752 = vadd.f32 %v2634, %v2751
    %2753 = vmatprep.mubr.f32.mxu0 0.0
    %v2754 = vand.u32 %v164, 4294901760
    %2755 = vmatmul.mubr.f32.gmra.mxu0 %v2754
    %v2756 = vpop.f32.mrf.mxu0
    %v2757 = vadd.f32 %v2639, %v2756
    %v2758 = vpop.f32.mrf.mxu0
    %v2759 = vadd.f32 %v2641, %v2758
    %2760 = vmatprep.mubr.f32.mxu0 0.0
    %v2761 = vand.u32 %v167, 4294901760
    %2762 = vmatmul.mubr.f32.gmra.mxu0 %v2761
    %v2763 = vpop.f32.mrf.mxu0
    %v2764 = vadd.f32 %v2646, %v2763
    %v2765 = vpop.f32.mrf.mxu0
    %v2766 = vadd.f32 %v2648, %v2765
    %2767 = vmatprep.mubr.f32.mxu0 0.0
    %v2768 = vand.u32 %v170, 4294901760
    %2769 = vmatmul.mubr.f32.gmra.mxu0 %v2768
    %v2770 = vpop.f32.mrf.mxu0
    %v2771 = vadd.f32 %v2653, %v2770
    %v2772 = vpop.f32.mrf.mxu0
    %v2773 = vadd.f32 %v2655, %v2772
    %2774 = vmatprep.mubr.f32.mxu0 0.0
    %v2775 = vand.u32 %v173, 4294901760
    %2776 = vmatmul.mubr.f32.gmra.mxu0 %v2775
    %v2777 = vpop.f32.mrf.mxu0
    %v2778 = vadd.f32 %v2660, %v2777
    %v2779 = vpop.f32.mrf.mxu0
    %v2780 = vadd.f32 %v2662, %v2779
    %2781 = vdwg.mxu0
    %2782 = vmatprep.subr.mxu0 0.0
    %2783 = vmatpush1.msra.mxu0 0.0
    %2784 = vmatprep.subr.mxu0 0.0
    %2785 = vmatpush1.msra.mxu0 0.0
    %2786 = vmatprep.subr.mxu0 0.0
    %2787 = vmatpush1.msra.mxu0 0.0
    %2788 = vmatprep.subr.mxu0 0.0
    %2789 = vmatpush1.msra.mxu0 0.0
    %2790 = vmatprep.subr.mxu0 0.0
    %2791 = vmatpush1.msra.mxu0 0.0
    %2792 = vmatprep.subr.mxu0 0.0
    %2793 = vmatpush1.msra.mxu0 0.0
    %2794 = vmatprep.subr.mxu0 0.0
    %2795 = vmatpush1.msra.mxu0 0.0
    %2796 = vmatprep.subr.mxu0 0.0
    %v2797 = vand.u32 %v159, 4294901760
    %2798 = vmatpush1.msra.mxu0 %v2797
    %2799 = vmatprep.subr.mxu0 0.0
    %v2800 = vand.u32 %v152, 4294901760
    %2801 = vmatpush1.msra.mxu0 %v2800
    %2802 = vmatprep.subr.mxu0 0.0
    %v2803 = vand.u32 %v145, 4294901760
    %2804 = vmatpush1.msra.mxu0 %v2803
    %2805 = vmatprep.subr.mxu0 0.0
    %v2806 = vand.u32 %v138, 4294901760
    %2807 = vmatpush1.msra.mxu0 %v2806
    %2808 = vmatprep.subr.mxu0 0.0
    %v2809 = vand.u32 %v131, 4294901760
    %2810 = vmatpush1.msra.mxu0 %v2809
    %2811 = vmatprep.subr.mxu0 0.0
    %v2812 = vand.u32 %v124, 4294901760
    %2813 = vmatpush1.msra.mxu0 %v2812
    %2814 = vmatprep.subr.mxu0 0.0
    %v2815 = vand.u32 %v117, 4294901760
    %2816 = vmatpush1.msra.mxu0 %v2815
    %2817 = vmatprep.subr.mxu0 0.0
    %v2818 = vand.u32 %v110, 4294901760
    %2819 = vmatpush1.msra.mxu0 %v2818
    %2820 = vmatprep.subr.mxu0 0.0
    %v2821 = vand.u32 %v103, 4294901760
    %2822 = vmatpush1.msra.mxu0 %v2821
    %2823 = vmatprep.subr.mxu0 0.0
    %2824 = vmatpush2.msra.mxu0 0.0
    %2825 = vmatprep.subr.mxu0 0.0
    %2826 = vmatpush2.msra.mxu0 0.0
    %2827 = vmatprep.subr.mxu0 0.0
    %2828 = vmatpush2.msra.mxu0 0.0
    %2829 = vmatprep.subr.mxu0 0.0
    %2830 = vmatpush2.msra.mxu0 0.0
    %2831 = vmatprep.subr.mxu0 0.0
    %2832 = vmatpush2.msra.mxu0 0.0
    %2833 = vmatprep.subr.mxu0 0.0
    %2834 = vmatpush2.msra.mxu0 0.0
    %2835 = vmatprep.subr.mxu0 0.0
    %2836 = vmatpush2.msra.mxu0 0.0
    %2837 = vmatprep.subr.mxu0 0.0
    %2838 = vmatpush2.msra.mxu0 0.0
    %2839 = vmatprep.subr.mxu0 0.0
    %2840 = vmatpush2.msra.mxu0 0.0
    %2841 = vmatprep.subr.mxu0 0.0
    %2842 = vmatpush2.msra.mxu0 0.0
    %2843 = vmatprep.subr.mxu0 0.0
    %2844 = vmatpush2.msra.mxu0 0.0
    %2845 = vmatprep.subr.mxu0 0.0
    %2846 = vmatpush2.msra.mxu0 0.0
    %2847 = vmatprep.subr.mxu0 0.0
    %2848 = vmatpush2.msra.mxu0 0.0
    %2849 = vmatprep.subr.mxu0 0.0
    %2850 = vmatpush2.msra.mxu0 0.0
    %2851 = vmatprep.subr.mxu0 0.0
    %2852 = vmatpush2.msra.mxu0 0.0
    %2853 = vmatprep.subr.mxu0 0.0
    %2854 = vmatpush2.msra.mxu0 0.0
    %2855 = vmatprep.mubr.f32.mxu0 0.0
    %v2856 = vand.u32 %v161, 4294901760
    %v2857 = vsub.f32 %v161, %v2856
    %v2858 = vand.u32 %v2857, 4294901760
    %v2859 = vsub.f32 %v2857, %v2858
    %v2860 = vand.u32 %v2859, 4294901760
    %2861 = vmatmul.mubr.f32.gmra.mxu0 %v2860
    %v2862 = vpop.f32.mrf.mxu0
    %v2863 = vadd.f32 0.0, %v2862
    %v2864 = vpop.f32.mrf.mxu0
    %2865 = vmatprep.mubr.f32.mxu0 0.0
    %v2866 = vand.u32 %v164, 4294901760
    %v2867 = vsub.f32 %v164, %v2866
    %v2868 = vand.u32 %v2867, 4294901760
    %v2869 = vsub.f32 %v2867, %v2868
    %v2870 = vand.u32 %v2869, 4294901760
    %2871 = vmatmul.mubr.f32.gmra.mxu0 %v2870
    %v2872 = vpop.f32.mrf.mxu0
    %v2873 = vadd.f32 0.0, %v2872
    %v2874 = vpop.f32.mrf.mxu0
    %2875 = vmatprep.mubr.f32.mxu0 0.0
    %v2876 = vand.u32 %v167, 4294901760
    %v2877 = vsub.f32 %v167, %v2876
    %v2878 = vand.u32 %v2877, 4294901760
    %v2879 = vsub.f32 %v2877, %v2878
    %v2880 = vand.u32 %v2879, 4294901760
    %2881 = vmatmul.mubr.f32.gmra.mxu0 %v2880
    %v2882 = vpop.f32.mrf.mxu0
    %v2883 = vadd.f32 0.0, %v2882
    %v2884 = vpop.f32.mrf.mxu0
    %2885 = vmatprep.mubr.f32.mxu0 0.0
    %v2886 = vand.u32 %v170, 4294901760
    %v2887 = vsub.f32 %v170, %v2886
    %v2888 = vand.u32 %v2887, 4294901760
    %v2889 = vsub.f32 %v2887, %v2888
    %v2890 = vand.u32 %v2889, 4294901760
    %2891 = vmatmul.mubr.f32.gmra.mxu0 %v2890
    %v2892 = vpop.f32.mrf.mxu0
    %v2893 = vadd.f32 0.0, %v2892
    %v2894 = vpop.f32.mrf.mxu0
    %2895 = vmatprep.mubr.f32.mxu0 0.0
    %v2896 = vand.u32 %v173, 4294901760
    %v2897 = vsub.f32 %v173, %v2896
    %v2898 = vand.u32 %v2897, 4294901760
    %v2899 = vsub.f32 %v2897, %v2898
    %v2900 = vand.u32 %v2899, 4294901760
    %2901 = vmatmul.mubr.f32.gmra.mxu0 %v2900
    %v2902 = vpop.f32.mrf.mxu0
    %v2903 = vadd.f32 0.0, %v2902
    %v2904 = vpop.f32.mrf.mxu0
    %2905 = vdwg.mxu0
    %2906 = vmatprep.subr.mxu0 0.0
    %2907 = vmatpush1.msra.mxu0 0.0
    %2908 = vmatprep.subr.mxu0 0.0
    %2909 = vmatpush1.msra.mxu0 0.0
    %2910 = vmatprep.subr.mxu0 0.0
    %2911 = vmatpush1.msra.mxu0 0.0
    %2912 = vmatprep.subr.mxu0 0.0
    %2913 = vmatpush1.msra.mxu0 0.0
    %2914 = vmatprep.subr.mxu0 0.0
    %2915 = vmatpush1.msra.mxu0 0.0
    %2916 = vmatprep.subr.mxu0 0.0
    %2917 = vmatpush1.msra.mxu0 0.0
    %2918 = vmatprep.subr.mxu0 0.0
    %2919 = vmatpush1.msra.mxu0 0.0
    %2920 = vmatprep.subr.mxu0 0.0
    %v2921 = vand.u32 %v159, 4294901760
    %v2922 = vsub.f32 %v159, %v2921
    %v2923 = vand.u32 %v2922, 4294901760
    %v2924 = vsub.f32 %v2922, %v2923
    %v2925 = vand.u32 %v2924, 4294901760
    %2926 = vmatpush1.msra.mxu0 %v2925
    %2927 = vmatprep.subr.mxu0 0.0
    %v2928 = vand.u32 %v152, 4294901760
    %v2929 = vsub.f32 %v152, %v2928
    %v2930 = vand.u32 %v2929, 4294901760
    %v2931 = vsub.f32 %v2929, %v2930
    %v2932 = vand.u32 %v2931, 4294901760
    %2933 = vmatpush1.msra.mxu0 %v2932
    %2934 = vmatprep.subr.mxu0 0.0
    %v2935 = vand.u32 %v145, 4294901760
    %v2936 = vsub.f32 %v145, %v2935
    %v2937 = vand.u32 %v2936, 4294901760
    %v2938 = vsub.f32 %v2936, %v2937
    %v2939 = vand.u32 %v2938, 4294901760
    %2940 = vmatpush1.msra.mxu0 %v2939
    %2941 = vmatprep.subr.mxu0 0.0
    %v2942 = vand.u32 %v138, 4294901760
    %v2943 = vsub.f32 %v138, %v2942
    %v2944 = vand.u32 %v2943, 4294901760
    %v2945 = vsub.f32 %v2943, %v2944
    %v2946 = vand.u32 %v2945, 4294901760
    %2947 = vmatpush1.msra.mxu0 %v2946
    %2948 = vmatprep.subr.mxu0 0.0
    %v2949 = vand.u32 %v131, 4294901760
    %v2950 = vsub.f32 %v131, %v2949
    %v2951 = vand.u32 %v2950, 4294901760
    %v2952 = vsub.f32 %v2950, %v2951
    %v2953 = vand.u32 %v2952, 4294901760
    %2954 = vmatpush1.msra.mxu0 %v2953
    %2955 = vmatprep.subr.mxu0 0.0
    %v2956 = vand.u32 %v124, 4294901760
    %v2957 = vsub.f32 %v124, %v2956
    %v2958 = vand.u32 %v2957, 4294901760
    %v2959 = vsub.f32 %v2957, %v2958
    %v2960 = vand.u32 %v2959, 4294901760
    %2961 = vmatpush1.msra.mxu0 %v2960
    %2962 = vmatprep.subr.mxu0 0.0
    %v2963 = vand.u32 %v117, 4294901760
    %v2964 = vsub.f32 %v117, %v2963
    %v2965 = vand.u32 %v2964, 4294901760
    %v2966 = vsub.f32 %v2964, %v2965
    %v2967 = vand.u32 %v2966, 4294901760
    %2968 = vmatpush1.msra.mxu0 %v2967
    %2969 = vmatprep.subr.mxu0 0.0
    %v2970 = vand.u32 %v110, 4294901760
    %v2971 = vsub.f32 %v110, %v2970
    %v2972 = vand.u32 %v2971, 4294901760
    %v2973 = vsub.f32 %v2971, %v2972
    %v2974 = vand.u32 %v2973, 4294901760
    %2975 = vmatpush1.msra.mxu0 %v2974
    %2976 = vmatprep.subr.mxu0 0.0
    %v2977 = vand.u32 %v103, 4294901760
    %v2978 = vsub.f32 %v103, %v2977
    %v2979 = vand.u32 %v2978, 4294901760
    %v2980 = vsub.f32 %v2978, %v2979
    %v2981 = vand.u32 %v2980, 4294901760
    %2982 = vmatpush1.msra.mxu0 %v2981
    %2983 = vmatprep.subr.mxu0 0.0
    %2984 = vmatpush2.msra.mxu0 0.0
    %2985 = vmatprep.subr.mxu0 0.0
    %2986 = vmatpush2.msra.mxu0 0.0
    %2987 = vmatprep.subr.mxu0 0.0
    %2988 = vmatpush2.msra.mxu0 0.0
    %2989 = vmatprep.subr.mxu0 0.0
    %2990 = vmatpush2.msra.mxu0 0.0
    %2991 = vmatprep.subr.mxu0 0.0
    %2992 = vmatpush2.msra.mxu0 0.0
    %2993 = vmatprep.subr.mxu0 0.0
    %2994 = vmatpush2.msra.mxu0 0.0
    %2995 = vmatprep.subr.mxu0 0.0
    %2996 = vmatpush2.msra.mxu0 0.0
    %2997 = vmatprep.subr.mxu0 0.0
    %2998 = vmatpush2.msra.mxu0 0.0
    %2999 = vmatprep.subr.mxu0 0.0
    %3000 = vmatpush2.msra.mxu0 0.0
    %3001 = vmatprep.subr.mxu0 0.0
    %3002 = vmatpush2.msra.mxu0 0.0
    %3003 = vmatprep.subr.mxu0 0.0
    %3004 = vmatpush2.msra.mxu0 0.0
    %3005 = vmatprep.subr.mxu0 0.0
    %3006 = vmatpush2.msra.mxu0 0.0
    %3007 = vmatprep.subr.mxu0 0.0
    %3008 = vmatpush2.msra.mxu0 0.0
    %3009 = vmatprep.subr.mxu0 0.0
    %3010 = vmatpush2.msra.mxu0 0.0
    %3011 = vmatprep.subr.mxu0 0.0
    %3012 = vmatpush2.msra.mxu0 0.0
    %3013 = vmatprep.subr.mxu0 0.0
    %3014 = vmatpush2.msra.mxu0 0.0
    %3015 = vmatprep.mubr.f32.mxu0 0.0
    %v3016 = vand.u32 %v161, 4294901760
    %3017 = vmatmul.mubr.f32.gmra.mxu0 %v3016
    %v3018 = vpop.f32.mrf.mxu0
    %v3019 = vadd.f32 %v2863, %v3018
    %v3020 = vpop.f32.mrf.mxu0
    %3021 = vmatprep.mubr.f32.mxu0 0.0
    %v3022 = vand.u32 %v164, 4294901760
    %3023 = vmatmul.mubr.f32.gmra.mxu0 %v3022
    %v3024 = vpop.f32.mrf.mxu0
    %v3025 = vadd.f32 %v2873, %v3024
    %v3026 = vpop.f32.mrf.mxu0
    %3027 = vmatprep.mubr.f32.mxu0 0.0
    %v3028 = vand.u32 %v167, 4294901760
    %3029 = vmatmul.mubr.f32.gmra.mxu0 %v3028
    %v3030 = vpop.f32.mrf.mxu0
    %v3031 = vadd.f32 %v2883, %v3030
    %v3032 = vpop.f32.mrf.mxu0
    %3033 = vmatprep.mubr.f32.mxu0 0.0
    %v3034 = vand.u32 %v170, 4294901760
    %3035 = vmatmul.mubr.f32.gmra.mxu0 %v3034
    %v3036 = vpop.f32.mrf.mxu0
    %v3037 = vadd.f32 %v2893, %v3036
    %v3038 = vpop.f32.mrf.mxu0
    %3039 = vmatprep.mubr.f32.mxu0 0.0
    %v3040 = vand.u32 %v173, 4294901760
    %3041 = vmatmul.mubr.f32.gmra.mxu0 %v3040
    %v3042 = vpop.f32.mrf.mxu0
    %v3043 = vadd.f32 %v2903, %v3042
    %v3044 = vpop.f32.mrf.mxu0
    %3045 = vdwg.mxu0
    %3046 = vmatprep.subr.mxu0 0.0
    %3047 = vmatpush1.msra.mxu0 0.0
    %3048 = vmatprep.subr.mxu0 0.0
    %3049 = vmatpush1.msra.mxu0 0.0
    %3050 = vmatprep.subr.mxu0 0.0
    %3051 = vmatpush1.msra.mxu0 0.0
    %3052 = vmatprep.subr.mxu0 0.0
    %3053 = vmatpush1.msra.mxu0 0.0
    %3054 = vmatprep.subr.mxu0 0.0
    %3055 = vmatpush1.msra.mxu0 0.0
    %3056 = vmatprep.subr.mxu0 0.0
    %3057 = vmatpush1.msra.mxu0 0.0
    %3058 = vmatprep.subr.mxu0 0.0
    %3059 = vmatpush1.msra.mxu0 0.0
    %3060 = vmatprep.subr.mxu0 0.0
    %v3061 = vand.u32 %v159, 4294901760
    %v3062 = vsub.f32 %v159, %v3061
    %3063 = vmatpush1.msra.mxu0 %v3062
    %3064 = vmatprep.subr.mxu0 0.0
    %v3065 = vand.u32 %v152, 4294901760
    %v3066 = vsub.f32 %v152, %v3065
    %3067 = vmatpush1.msra.mxu0 %v3066
    %3068 = vmatprep.subr.mxu0 0.0
    %v3069 = vand.u32 %v145, 4294901760
    %v3070 = vsub.f32 %v145, %v3069
    %3071 = vmatpush1.msra.mxu0 %v3070
    %3072 = vmatprep.subr.mxu0 0.0
    %v3073 = vand.u32 %v138, 4294901760
    %v3074 = vsub.f32 %v138, %v3073
    %3075 = vmatpush1.msra.mxu0 %v3074
    %3076 = vmatprep.subr.mxu0 0.0
    %v3077 = vand.u32 %v131, 4294901760
    %v3078 = vsub.f32 %v131, %v3077
    %3079 = vmatpush1.msra.mxu0 %v3078
    %3080 = vmatprep.subr.mxu0 0.0
    %v3081 = vand.u32 %v124, 4294901760
    %v3082 = vsub.f32 %v124, %v3081
    %3083 = vmatpush1.msra.mxu0 %v3082
    %3084 = vmatprep.subr.mxu0 0.0
    %v3085 = vand.u32 %v117, 4294901760
    %v3086 = vsub.f32 %v117, %v3085
    %3087 = vmatpush1.msra.mxu0 %v3086
    %3088 = vmatprep.subr.mxu0 0.0
    %v3089 = vand.u32 %v110, 4294901760
    %v3090 = vsub.f32 %v110, %v3089
    %3091 = vmatpush1.msra.mxu0 %v3090
    %3092 = vmatprep.subr.mxu0 0.0
    %v3093 = vand.u32 %v103, 4294901760
    %v3094 = vsub.f32 %v103, %v3093
    %3095 = vmatpush1.msra.mxu0 %v3094
    %3096 = vmatprep.subr.mxu0 0.0
    %3097 = vmatpush2.msra.mxu0 0.0
    %3098 = vmatprep.subr.mxu0 0.0
    %3099 = vmatpush2.msra.mxu0 0.0
    %3100 = vmatprep.subr.mxu0 0.0
    %3101 = vmatpush2.msra.mxu0 0.0
    %3102 = vmatprep.subr.mxu0 0.0
    %3103 = vmatpush2.msra.mxu0 0.0
    %3104 = vmatprep.subr.mxu0 0.0
    %3105 = vmatpush2.msra.mxu0 0.0
    %3106 = vmatprep.subr.mxu0 0.0
    %3107 = vmatpush2.msra.mxu0 0.0
    %3108 = vmatprep.subr.mxu0 0.0
    %3109 = vmatpush2.msra.mxu0 0.0
    %3110 = vmatprep.subr.mxu0 0.0
    %3111 = vmatpush2.msra.mxu0 0.0
    %3112 = vmatprep.subr.mxu0 0.0
    %3113 = vmatpush2.msra.mxu0 0.0
    %3114 = vmatprep.subr.mxu0 0.0
    %3115 = vmatpush2.msra.mxu0 0.0
    %3116 = vmatprep.subr.mxu0 0.0
    %3117 = vmatpush2.msra.mxu0 0.0
    %3118 = vmatprep.subr.mxu0 0.0
    %3119 = vmatpush2.msra.mxu0 0.0
    %3120 = vmatprep.subr.mxu0 0.0
    %3121 = vmatpush2.msra.mxu0 0.0
    %3122 = vmatprep.subr.mxu0 0.0
    %3123 = vmatpush2.msra.mxu0 0.0
    %3124 = vmatprep.subr.mxu0 0.0
    %3125 = vmatpush2.msra.mxu0 0.0
    %3126 = vmatprep.subr.mxu0 0.0
    %3127 = vmatpush2.msra.mxu0 0.0
    %3128 = vmatprep.mubr.f32.mxu0 0.0
    %v3129 = vand.u32 %v161, 4294901760
    %v3130 = vsub.f32 %v161, %v3129
    %3131 = vmatmul.mubr.f32.gmra.mxu0 %v3130
    %v3132 = vpop.f32.mrf.mxu0
    %v3133 = vadd.f32 %v3019, %v3132
    %v3134 = vpop.f32.mrf.mxu0
    %3135 = vmatprep.mubr.f32.mxu0 0.0
    %v3136 = vand.u32 %v164, 4294901760
    %v3137 = vsub.f32 %v164, %v3136
    %3138 = vmatmul.mubr.f32.gmra.mxu0 %v3137
    %v3139 = vpop.f32.mrf.mxu0
    %v3140 = vadd.f32 %v3025, %v3139
    %v3141 = vpop.f32.mrf.mxu0
    %3142 = vmatprep.mubr.f32.mxu0 0.0
    %v3143 = vand.u32 %v167, 4294901760
    %v3144 = vsub.f32 %v167, %v3143
    %3145 = vmatmul.mubr.f32.gmra.mxu0 %v3144
    %v3146 = vpop.f32.mrf.mxu0
    %v3147 = vadd.f32 %v3031, %v3146
    %v3148 = vpop.f32.mrf.mxu0
    %3149 = vmatprep.mubr.f32.mxu0 0.0
    %v3150 = vand.u32 %v170, 4294901760
    %v3151 = vsub.f32 %v170, %v3150
    %3152 = vmatmul.mubr.f32.gmra.mxu0 %v3151
    %v3153 = vpop.f32.mrf.mxu0
    %v3154 = vadd.f32 %v3037, %v3153
    %v3155 = vpop.f32.mrf.mxu0
    %3156 = vmatprep.mubr.f32.mxu0 0.0
    %v3157 = vand.u32 %v173, 4294901760
    %v3158 = vsub.f32 %v173, %v3157
    %3159 = vmatmul.mubr.f32.gmra.mxu0 %v3158
    %v3160 = vpop.f32.mrf.mxu0
    %v3161 = vadd.f32 %v3043, %v3160
    %v3162 = vpop.f32.mrf.mxu0
    %3163 = vdwg.mxu0
    %3164 = vmatprep.subr.mxu0 0.0
    %3165 = vmatpush1.msra.mxu0 0.0
    %3166 = vmatprep.subr.mxu0 0.0
    %3167 = vmatpush1.msra.mxu0 0.0
    %3168 = vmatprep.subr.mxu0 0.0
    %3169 = vmatpush1.msra.mxu0 0.0
    %3170 = vmatprep.subr.mxu0 0.0
    %3171 = vmatpush1.msra.mxu0 0.0
    %3172 = vmatprep.subr.mxu0 0.0
    %3173 = vmatpush1.msra.mxu0 0.0
    %3174 = vmatprep.subr.mxu0 0.0
    %3175 = vmatpush1.msra.mxu0 0.0
    %3176 = vmatprep.subr.mxu0 0.0
    %3177 = vmatpush1.msra.mxu0 0.0
    %3178 = vmatprep.subr.mxu0 0.0
    %v3179 = vand.u32 %v159, 4294901760
    %3180 = vmatpush1.msra.mxu0 %v3179
    %3181 = vmatprep.subr.mxu0 0.0
    %v3182 = vand.u32 %v152, 4294901760
    %3183 = vmatpush1.msra.mxu0 %v3182
    %3184 = vmatprep.subr.mxu0 0.0
    %v3185 = vand.u32 %v145, 4294901760
    %3186 = vmatpush1.msra.mxu0 %v3185
    %3187 = vmatprep.subr.mxu0 0.0
    %v3188 = vand.u32 %v138, 4294901760
    %3189 = vmatpush1.msra.mxu0 %v3188
    %3190 = vmatprep.subr.mxu0 0.0
    %v3191 = vand.u32 %v131, 4294901760
    %3192 = vmatpush1.msra.mxu0 %v3191
    %3193 = vmatprep.subr.mxu0 0.0
    %v3194 = vand.u32 %v124, 4294901760
    %3195 = vmatpush1.msra.mxu0 %v3194
    %3196 = vmatprep.subr.mxu0 0.0
    %v3197 = vand.u32 %v117, 4294901760
    %3198 = vmatpush1.msra.mxu0 %v3197
    %3199 = vmatprep.subr.mxu0 0.0
    %v3200 = vand.u32 %v110, 4294901760
    %3201 = vmatpush1.msra.mxu0 %v3200
    %3202 = vmatprep.subr.mxu0 0.0
    %v3203 = vand.u32 %v103, 4294901760
    %3204 = vmatpush1.msra.mxu0 %v3203
    %3205 = vmatprep.subr.mxu0 0.0
    %3206 = vmatpush2.msra.mxu0 0.0
    %3207 = vmatprep.subr.mxu0 0.0
    %3208 = vmatpush2.msra.mxu0 0.0
    %3209 = vmatprep.subr.mxu0 0.0
    %3210 = vmatpush2.msra.mxu0 0.0
    %3211 = vmatprep.subr.mxu0 0.0
    %3212 = vmatpush2.msra.mxu0 0.0
    %3213 = vmatprep.subr.mxu0 0.0
    %3214 = vmatpush2.msra.mxu0 0.0
    %3215 = vmatprep.subr.mxu0 0.0
    %3216 = vmatpush2.msra.mxu0 0.0
    %3217 = vmatprep.subr.mxu0 0.0
    %3218 = vmatpush2.msra.mxu0 0.0
    %3219 = vmatprep.subr.mxu0 0.0
    %3220 = vmatpush2.msra.mxu0 0.0
    %3221 = vmatprep.subr.mxu0 0.0
    %3222 = vmatpush2.msra.mxu0 0.0
    %3223 = vmatprep.subr.mxu0 0.0
    %3224 = vmatpush2.msra.mxu0 0.0
    %3225 = vmatprep.subr.mxu0 0.0
    %3226 = vmatpush2.msra.mxu0 0.0
    %3227 = vmatprep.subr.mxu0 0.0
    %3228 = vmatpush2.msra.mxu0 0.0
    %3229 = vmatprep.subr.mxu0 0.0
    %3230 = vmatpush2.msra.mxu0 0.0
    %3231 = vmatprep.subr.mxu0 0.0
    %3232 = vmatpush2.msra.mxu0 0.0
    %3233 = vmatprep.subr.mxu0 0.0
    %3234 = vmatpush2.msra.mxu0 0.0
    %3235 = vmatprep.subr.mxu0 0.0
    %3236 = vmatpush2.msra.mxu0 0.0
    %3237 = vmatprep.mubr.f32.mxu0 0.0
    %v3238 = vand.u32 %v161, 4294901760
    %v3239 = vsub.f32 %v161, %v3238
    %v3240 = vand.u32 %v3239, 4294901760
    %3241 = vmatmul.mubr.f32.gmra.mxu0 %v3240
    %v3242 = vpop.f32.mrf.mxu0
    %v3243 = vadd.f32 %v3133, %v3242
    %v3244 = vpop.f32.mrf.mxu0
    %3245 = vmatprep.mubr.f32.mxu0 0.0
    %v3246 = vand.u32 %v164, 4294901760
    %v3247 = vsub.f32 %v164, %v3246
    %v3248 = vand.u32 %v3247, 4294901760
    %3249 = vmatmul.mubr.f32.gmra.mxu0 %v3248
    %v3250 = vpop.f32.mrf.mxu0
    %v3251 = vadd.f32 %v3140, %v3250
    %v3252 = vpop.f32.mrf.mxu0
    %3253 = vmatprep.mubr.f32.mxu0 0.0
    %v3254 = vand.u32 %v167, 4294901760
    %v3255 = vsub.f32 %v167, %v3254
    %v3256 = vand.u32 %v3255, 4294901760
    %3257 = vmatmul.mubr.f32.gmra.mxu0 %v3256
    %v3258 = vpop.f32.mrf.mxu0
    %v3259 = vadd.f32 %v3147, %v3258
    %v3260 = vpop.f32.mrf.mxu0
    %3261 = vmatprep.mubr.f32.mxu0 0.0
    %v3262 = vand.u32 %v170, 4294901760
    %v3263 = vsub.f32 %v170, %v3262
    %v3264 = vand.u32 %v3263, 4294901760
    %3265 = vmatmul.mubr.f32.gmra.mxu0 %v3264
    %v3266 = vpop.f32.mrf.mxu0
    %v3267 = vadd.f32 %v3154, %v3266
    %v3268 = vpop.f32.mrf.mxu0
    %3269 = vmatprep.mubr.f32.mxu0 0.0
    %v3270 = vand.u32 %v173, 4294901760
    %v3271 = vsub.f32 %v173, %v3270
    %v3272 = vand.u32 %v3271, 4294901760
    %3273 = vmatmul.mubr.f32.gmra.mxu0 %v3272
    %v3274 = vpop.f32.mrf.mxu0
    %v3275 = vadd.f32 %v3161, %v3274
    %v3276 = vpop.f32.mrf.mxu0
    %3277 = vdwg.mxu0
    %3278 = vmatprep.subr.mxu0 0.0
    %3279 = vmatpush1.msra.mxu0 0.0
    %3280 = vmatprep.subr.mxu0 0.0
    %3281 = vmatpush1.msra.mxu0 0.0
    %3282 = vmatprep.subr.mxu0 0.0
    %3283 = vmatpush1.msra.mxu0 0.0
    %3284 = vmatprep.subr.mxu0 0.0
    %3285 = vmatpush1.msra.mxu0 0.0
    %3286 = vmatprep.subr.mxu0 0.0
    %3287 = vmatpush1.msra.mxu0 0.0
    %3288 = vmatprep.subr.mxu0 0.0
    %3289 = vmatpush1.msra.mxu0 0.0
    %3290 = vmatprep.subr.mxu0 0.0
    %3291 = vmatpush1.msra.mxu0 0.0
    %3292 = vmatprep.subr.mxu0 0.0
    %v3293 = vand.u32 %v159, 4294901760
    %v3294 = vsub.f32 %v159, %v3293
    %v3295 = vand.u32 %v3294, 4294901760
    %3296 = vmatpush1.msra.mxu0 %v3295
    %3297 = vmatprep.subr.mxu0 0.0
    %v3298 = vand.u32 %v152, 4294901760
    %v3299 = vsub.f32 %v152, %v3298
    %v3300 = vand.u32 %v3299, 4294901760
    %3301 = vmatpush1.msra.mxu0 %v3300
    %3302 = vmatprep.subr.mxu0 0.0
    %v3303 = vand.u32 %v145, 4294901760
    %v3304 = vsub.f32 %v145, %v3303
    %v3305 = vand.u32 %v3304, 4294901760
    %3306 = vmatpush1.msra.mxu0 %v3305
    %3307 = vmatprep.subr.mxu0 0.0
    %v3308 = vand.u32 %v138, 4294901760
    %v3309 = vsub.f32 %v138, %v3308
    %v3310 = vand.u32 %v3309, 4294901760
    %3311 = vmatpush1.msra.mxu0 %v3310
    %3312 = vmatprep.subr.mxu0 0.0
    %v3313 = vand.u32 %v131, 4294901760
    %v3314 = vsub.f32 %v131, %v3313
    %v3315 = vand.u32 %v3314, 4294901760
    %3316 = vmatpush1.msra.mxu0 %v3315
    %3317 = vmatprep.subr.mxu0 0.0
    %v3318 = vand.u32 %v124, 4294901760
    %v3319 = vsub.f32 %v124, %v3318
    %v3320 = vand.u32 %v3319, 4294901760
    %3321 = vmatpush1.msra.mxu0 %v3320
    %3322 = vmatprep.subr.mxu0 0.0
    %v3323 = vand.u32 %v117, 4294901760
    %v3324 = vsub.f32 %v117, %v3323
    %v3325 = vand.u32 %v3324, 4294901760
    %3326 = vmatpush1.msra.mxu0 %v3325
    %3327 = vmatprep.subr.mxu0 0.0
    %v3328 = vand.u32 %v110, 4294901760
    %v3329 = vsub.f32 %v110, %v3328
    %v3330 = vand.u32 %v3329, 4294901760
    %3331 = vmatpush1.msra.mxu0 %v3330
    %3332 = vmatprep.subr.mxu0 0.0
    %v3333 = vand.u32 %v103, 4294901760
    %v3334 = vsub.f32 %v103, %v3333
    %v3335 = vand.u32 %v3334, 4294901760
    %3336 = vmatpush1.msra.mxu0 %v3335
    %3337 = vmatprep.subr.mxu0 0.0
    %3338 = vmatpush2.msra.mxu0 0.0
    %3339 = vmatprep.subr.mxu0 0.0
    %3340 = vmatpush2.msra.mxu0 0.0
    %3341 = vmatprep.subr.mxu0 0.0
    %3342 = vmatpush2.msra.mxu0 0.0
    %3343 = vmatprep.subr.mxu0 0.0
    %3344 = vmatpush2.msra.mxu0 0.0
    %3345 = vmatprep.subr.mxu0 0.0
    %3346 = vmatpush2.msra.mxu0 0.0
    %3347 = vmatprep.subr.mxu0 0.0
    %3348 = vmatpush2.msra.mxu0 0.0
    %3349 = vmatprep.subr.mxu0 0.0
    %3350 = vmatpush2.msra.mxu0 0.0
    %3351 = vmatprep.subr.mxu0 0.0
    %3352 = vmatpush2.msra.mxu0 0.0
    %3353 = vmatprep.subr.mxu0 0.0
    %3354 = vmatpush2.msra.mxu0 0.0
    %3355 = vmatprep.subr.mxu0 0.0
    %3356 = vmatpush2.msra.mxu0 0.0
    %3357 = vmatprep.subr.mxu0 0.0
    %3358 = vmatpush2.msra.mxu0 0.0
    %3359 = vmatprep.subr.mxu0 0.0
    %3360 = vmatpush2.msra.mxu0 0.0
    %3361 = vmatprep.subr.mxu0 0.0
    %3362 = vmatpush2.msra.mxu0 0.0
    %3363 = vmatprep.subr.mxu0 0.0
    %3364 = vmatpush2.msra.mxu0 0.0
    %3365 = vmatprep.subr.mxu0 0.0
    %3366 = vmatpush2.msra.mxu0 0.0
    %3367 = vmatprep.subr.mxu0 0.0
    %3368 = vmatpush2.msra.mxu0 0.0
    %3369 = vmatprep.mubr.f32.mxu0 0.0
    %v3370 = vand.u32 %v161, 4294901760
    %3371 = vmatmul.mubr.f32.gmra.mxu0 %v3370
    %v3372 = vpop.f32.mrf.mxu0
    %v3373 = vadd.f32 %v3243, %v3372
    %v3374 = vpop.f32.mrf.mxu0
    %3375 = vmatprep.mubr.f32.mxu0 0.0
    %v3376 = vand.u32 %v164, 4294901760
    %3377 = vmatmul.mubr.f32.gmra.mxu0 %v3376
    %v3378 = vpop.f32.mrf.mxu0
    %v3379 = vadd.f32 %v3251, %v3378
    %v3380 = vpop.f32.mrf.mxu0
    %3381 = vmatprep.mubr.f32.mxu0 0.0
    %v3382 = vand.u32 %v167, 4294901760
    %3383 = vmatmul.mubr.f32.gmra.mxu0 %v3382
    %v3384 = vpop.f32.mrf.mxu0
    %v3385 = vadd.f32 %v3259, %v3384
    %v3386 = vpop.f32.mrf.mxu0
    %3387 = vmatprep.mubr.f32.mxu0 0.0
    %v3388 = vand.u32 %v170, 4294901760
    %3389 = vmatmul.mubr.f32.gmra.mxu0 %v3388
    %v3390 = vpop.f32.mrf.mxu0
    %v3391 = vadd.f32 %v3267, %v3390
    %v3392 = vpop.f32.mrf.mxu0
    %3393 = vmatprep.mubr.f32.mxu0 0.0
    %v3394 = vand.u32 %v173, 4294901760
    %3395 = vmatmul.mubr.f32.gmra.mxu0 %v3394
    %v3396 = vpop.f32.mrf.mxu0
    %v3397 = vadd.f32 %v3275, %v3396
    %v3398 = vpop.f32.mrf.mxu0
    %3399 = vdwg.mxu0
    %3400 = vmatprep.subr.mxu0 0.0
    %3401 = vmatpush1.msra.mxu0 0.0
    %3402 = vmatprep.subr.mxu0 0.0
    %3403 = vmatpush1.msra.mxu0 0.0
    %3404 = vmatprep.subr.mxu0 0.0
    %3405 = vmatpush1.msra.mxu0 0.0
    %3406 = vmatprep.subr.mxu0 0.0
    %3407 = vmatpush1.msra.mxu0 0.0
    %3408 = vmatprep.subr.mxu0 0.0
    %3409 = vmatpush1.msra.mxu0 0.0
    %3410 = vmatprep.subr.mxu0 0.0
    %3411 = vmatpush1.msra.mxu0 0.0
    %3412 = vmatprep.subr.mxu0 0.0
    %3413 = vmatpush1.msra.mxu0 0.0
    %3414 = vmatprep.subr.mxu0 0.0
    %v3415 = vand.u32 %v159, 4294901760
    %3416 = vmatpush1.msra.mxu0 %v3415
    %3417 = vmatprep.subr.mxu0 0.0
    %v3418 = vand.u32 %v152, 4294901760
    %3419 = vmatpush1.msra.mxu0 %v3418
    %3420 = vmatprep.subr.mxu0 0.0
    %v3421 = vand.u32 %v145, 4294901760
    %3422 = vmatpush1.msra.mxu0 %v3421
    %3423 = vmatprep.subr.mxu0 0.0
    %v3424 = vand.u32 %v138, 4294901760
    %3425 = vmatpush1.msra.mxu0 %v3424
    %3426 = vmatprep.subr.mxu0 0.0
    %v3427 = vand.u32 %v131, 4294901760
    %3428 = vmatpush1.msra.mxu0 %v3427
    %3429 = vmatprep.subr.mxu0 0.0
    %v3430 = vand.u32 %v124, 4294901760
    %3431 = vmatpush1.msra.mxu0 %v3430
    %3432 = vmatprep.subr.mxu0 0.0
    %v3433 = vand.u32 %v117, 4294901760
    %3434 = vmatpush1.msra.mxu0 %v3433
    %3435 = vmatprep.subr.mxu0 0.0
    %v3436 = vand.u32 %v110, 4294901760
    %3437 = vmatpush1.msra.mxu0 %v3436
    %3438 = vmatprep.subr.mxu0 0.0
    %v3439 = vand.u32 %v103, 4294901760
    %3440 = vmatpush1.msra.mxu0 %v3439
    %3441 = vmatprep.subr.mxu0 0.0
    %3442 = vmatpush2.msra.mxu0 0.0
    %3443 = vmatprep.subr.mxu0 0.0
    %3444 = vmatpush2.msra.mxu0 0.0
    %3445 = vmatprep.subr.mxu0 0.0
    %3446 = vmatpush2.msra.mxu0 0.0
    %3447 = vmatprep.subr.mxu0 0.0
    %3448 = vmatpush2.msra.mxu0 0.0
    %3449 = vmatprep.subr.mxu0 0.0
    %3450 = vmatpush2.msra.mxu0 0.0
    %3451 = vmatprep.subr.mxu0 0.0
    %3452 = vmatpush2.msra.mxu0 0.0
    %3453 = vmatprep.subr.mxu0 0.0
    %3454 = vmatpush2.msra.mxu0 0.0
    %3455 = vmatprep.subr.mxu0 0.0
    %3456 = vmatpush2.msra.mxu0 0.0
    %3457 = vmatprep.subr.mxu0 0.0
    %3458 = vmatpush2.msra.mxu0 0.0
    %3459 = vmatprep.subr.mxu0 0.0
    %3460 = vmatpush2.msra.mxu0 0.0
    %3461 = vmatprep.subr.mxu0 0.0
    %3462 = vmatpush2.msra.mxu0 0.0
    %3463 = vmatprep.subr.mxu0 0.0
    %3464 = vmatpush2.msra.mxu0 0.0
    %3465 = vmatprep.subr.mxu0 0.0
    %3466 = vmatpush2.msra.mxu0 0.0
    %3467 = vmatprep.subr.mxu0 0.0
    %3468 = vmatpush2.msra.mxu0 0.0
    %3469 = vmatprep.subr.mxu0 0.0
    %3470 = vmatpush2.msra.mxu0 0.0
    %3471 = vmatprep.subr.mxu0 0.0
    %3472 = vmatpush2.msra.mxu0 0.0
    %3473 = vmatprep.mubr.f32.mxu0 0.0
    %v3474 = vand.u32 %v161, 4294901760
    %3475 = vmatmul.mubr.f32.gmra.mxu0 %v3474
    %v3476 = vpop.f32.mrf.mxu0
    %v3477 = vadd.f32 %v3373, %v3476
    %v3478 = vpop.f32.mrf.mxu0
    %3479 = vmatprep.mubr.f32.mxu0 0.0
    %v3480 = vand.u32 %v164, 4294901760
    %3481 = vmatmul.mubr.f32.gmra.mxu0 %v3480
    %v3482 = vpop.f32.mrf.mxu0
    %v3483 = vadd.f32 %v3379, %v3482
    %v3484 = vpop.f32.mrf.mxu0
    %3485 = vmatprep.mubr.f32.mxu0 0.0
    %v3486 = vand.u32 %v167, 4294901760
    %3487 = vmatmul.mubr.f32.gmra.mxu0 %v3486
    %v3488 = vpop.f32.mrf.mxu0
    %v3489 = vadd.f32 %v3385, %v3488
    %v3490 = vpop.f32.mrf.mxu0
    %3491 = vmatprep.mubr.f32.mxu0 0.0
    %v3492 = vand.u32 %v170, 4294901760
    %3493 = vmatmul.mubr.f32.gmra.mxu0 %v3492
    %v3494 = vpop.f32.mrf.mxu0
    %v3495 = vadd.f32 %v3391, %v3494
    %v3496 = vpop.f32.mrf.mxu0
    %3497 = vmatprep.mubr.f32.mxu0 0.0
    %v3498 = vand.u32 %v173, 4294901760
    %3499 = vmatmul.mubr.f32.gmra.mxu0 %v3498
    %v3500 = vpop.f32.mrf.mxu0
    %v3501 = vadd.f32 %v3397, %v3500
    %v3502 = vpop.f32.mrf.mxu0
    %3503 = vdwg.mxu0
    %v3504 = vadd.f32 %v1012, %v1014
    %v3505 = vadd.f32 %v3504, %v1881
    %v3506 = vadd.f32 %v3505, %v1883
    %v3507 = vadd.f32 %v3506, %v2750
    %v3508 = vadd.f32 %v3507, %v2752
    %vm3509 = vcmask 130048
    %v3510 = vsel %vm3509, %v3477, 0.0
    %v3511 = vadd.f32 %v3508, %v3510
    %3512 = vadd.xlane.f32.xlu0 %v3511
    %v3513 = vpop.xlane.xlu0 %3512
    %v3514 = vadd.f32 %v1019, %v1021
    %v3515 = vadd.f32 %v3514, %v1888
    %v3516 = vadd.f32 %v3515, %v1890
    %v3517 = vadd.f32 %v3516, %v2757
    %v3518 = vadd.f32 %v3517, %v2759
    %v3519 = vsel %vm3509, %v3483, 0.0
    %v3520 = vadd.f32 %v3518, %v3519
    %3521 = vadd.xlane.f32.xlu0 %v3520
    %v3522 = vpop.xlane.xlu0 %3521
    %v3523 = vadd.f32 %v1026, %v1028
    %v3524 = vadd.f32 %v3523, %v1895
    %v3525 = vadd.f32 %v3524, %v1897
    %v3526 = vadd.f32 %v3525, %v2764
    %v3527 = vadd.f32 %v3526, %v2766
    %v3528 = vsel %vm3509, %v3489, 0.0
    %v3529 = vadd.f32 %v3527, %v3528
    %3530 = vadd.xlane.f32.xlu0 %v3529
    %v3531 = vpop.xlane.xlu0 %3530
    %v3532 = vadd.f32 %v1033, %v1035
    %v3533 = vadd.f32 %v3532, %v1902
    %v3534 = vadd.f32 %v3533, %v1904
    %v3535 = vadd.f32 %v3534, %v2771
    %v3536 = vadd.f32 %v3535, %v2773
    %v3537 = vsel %vm3509, %v3495, 0.0
    %v3538 = vadd.f32 %v3536, %v3537
    %3539 = vadd.xlane.f32.xlu0 %v3538
    %v3540 = vpop.xlane.xlu0 %3539
    %v3541 = vadd.f32 %v1040, %v1042
    %v3542 = vadd.f32 %v3541, %v1909
    %v3543 = vadd.f32 %v3542, %v1911
    %v3544 = vadd.f32 %v3543, %v2778
    %v3545 = vadd.f32 %v3544, %v2780
    %v3546 = vsel %vm3509, %v3501, 0.0
    %v3547 = vadd.f32 %v3545, %v3546
    %3548 = vadd.xlane.f32.xlu0 %v3547
    %v3549 = vpop.xlane.xlu0 %3548
    %v3550 = vmul.f32 %v3513, 0.0012755102
    %v3551 = vmul.f32 %v3522, 0.0012755102
    %v3552 = vmul.f32 %v3531, 0.0012755102
    %v3553 = vmul.f32 %v3540, 0.0012755102
    %v3554 = vmul.f32 %v3549, 0.0012755102
    %v3555 = vsub.f32 %v1012, %v3550
    %v3556 = vsub.f32 %v1014, %v3550
    %v3557 = vsub.f32 %v1881, %v3550
    %v3558 = vsub.f32 %v1883, %v3550
    %v3559 = vsub.f32 %v2750, %v3550
    %v3560 = vsub.f32 %v2752, %v3550
    %v3561 = vsub.f32 %v3477, %v3550
    %v3562 = vsub.f32 %v1019, %v3551
    %v3563 = vsub.f32 %v1021, %v3551
    %v3564 = vsub.f32 %v1888, %v3551
    %v3565 = vsub.f32 %v1890, %v3551
    %v3566 = vsub.f32 %v2757, %v3551
    %v3567 = vsub.f32 %v2759, %v3551
    %v3568 = vsub.f32 %v3483, %v3551
    %v3569 = vsub.f32 %v1026, %v3552
    %v3570 = vsub.f32 %v1028, %v3552
    %v3571 = vsub.f32 %v1895, %v3552
    %v3572 = vsub.f32 %v1897, %v3552
    %v3573 = vsub.f32 %v2764, %v3552
    %v3574 = vsub.f32 %v2766, %v3552
    %v3575 = vsub.f32 %v3489, %v3552
    %v3576 = vsub.f32 %v1033, %v3553
    %v3577 = vsub.f32 %v1035, %v3553
    %v3578 = vsub.f32 %v1902, %v3553
    %v3579 = vsub.f32 %v1904, %v3553
    %v3580 = vsub.f32 %v2771, %v3553
    %v3581 = vsub.f32 %v2773, %v3553
    %v3582 = vsub.f32 %v3495, %v3553
    %v3583 = vsub.f32 %v1040, %v3554
    %v3584 = vsub.f32 %v1042, %v3554
    %v3585 = vsub.f32 %v1909, %v3554
    %v3586 = vsub.f32 %v1911, %v3554
    %v3587 = vsub.f32 %v2778, %v3554
    %v3588 = vsub.f32 %v2780, %v3554
    %v3589 = vsub.f32 %v3501, %v3554
    %v3590 = vmul.f32 %v3555, %v3555
    %v3591 = vmul.f32 %v3556, %v3556
    %v3592 = vmul.f32 %v3557, %v3557
    %v3593 = vmul.f32 %v3558, %v3558
    %v3594 = vmul.f32 %v3559, %v3559
    %v3595 = vmul.f32 %v3560, %v3560
    %v3596 = vmul.f32 %v3561, %v3561
    %v3597 = vmul.f32 %v3562, %v3562
    %v3598 = vmul.f32 %v3563, %v3563
    %v3599 = vmul.f32 %v3564, %v3564
    %v3600 = vmul.f32 %v3565, %v3565
    %v3601 = vmul.f32 %v3566, %v3566
    %v3602 = vmul.f32 %v3567, %v3567
    %v3603 = vmul.f32 %v3568, %v3568
    %v3604 = vmul.f32 %v3569, %v3569
    %v3605 = vmul.f32 %v3570, %v3570
    %v3606 = vmul.f32 %v3571, %v3571
    %v3607 = vmul.f32 %v3572, %v3572
    %v3608 = vmul.f32 %v3573, %v3573
    %v3609 = vmul.f32 %v3574, %v3574
    %v3610 = vmul.f32 %v3575, %v3575
    %v3611 = vmul.f32 %v3576, %v3576
    %v3612 = vmul.f32 %v3577, %v3577
    %v3613 = vmul.f32 %v3578, %v3578
    %v3614 = vmul.f32 %v3579, %v3579
    %v3615 = vmul.f32 %v3580, %v3580
    %v3616 = vmul.f32 %v3581, %v3581
    %v3617 = vmul.f32 %v3582, %v3582
    %v3618 = vmul.f32 %v3583, %v3583
    %v3619 = vmul.f32 %v3584, %v3584
    %v3620 = vmul.f32 %v3585, %v3585
    %v3621 = vmul.f32 %v3586, %v3586
    %v3622 = vmul.f32 %v3587, %v3587
    %v3623 = vmul.f32 %v3588, %v3588
    %v3624 = vmul.f32 %v3589, %v3589
    %v3625 = vadd.f32 %v3590, %v3591
    %v3626 = vadd.f32 %v3625, %v3592
    %v3627 = vadd.f32 %v3626, %v3593
    %v3628 = vadd.f32 %v3627, %v3594
    %v3629 = vadd.f32 %v3628, %v3595
    %v3630 = vsel %vm3509, %v3596, 0.0
    %v3631 = vadd.f32 %v3629, %v3630
    %3632 = vadd.xlane.f32.xlu0 %v3631
    %v3633 = vpop.xlane.xlu0 %3632
    %v3634 = vadd.f32 %v3597, %v3598
    %v3635 = vadd.f32 %v3634, %v3599
    %v3636 = vadd.f32 %v3635, %v3600
    %v3637 = vadd.f32 %v3636, %v3601
    %v3638 = vadd.f32 %v3637, %v3602
    %v3639 = vsel %vm3509, %v3603, 0.0
    %v3640 = vadd.f32 %v3638, %v3639
    %3641 = vadd.xlane.f32.xlu0 %v3640
    %v3642 = vpop.xlane.xlu0 %3641
    %v3643 = vadd.f32 %v3604, %v3605
    %v3644 = vadd.f32 %v3643, %v3606
    %v3645 = vadd.f32 %v3644, %v3607
    %v3646 = vadd.f32 %v3645, %v3608
    %v3647 = vadd.f32 %v3646, %v3609
    %v3648 = vsel %vm3509, %v3610, 0.0
    %v3649 = vadd.f32 %v3647, %v3648
    %3650 = vadd.xlane.f32.xlu0 %v3649
    %v3651 = vpop.xlane.xlu0 %3650
    %v3652 = vadd.f32 %v3611, %v3612
    %v3653 = vadd.f32 %v3652, %v3613
    %v3654 = vadd.f32 %v3653, %v3614
    %v3655 = vadd.f32 %v3654, %v3615
    %v3656 = vadd.f32 %v3655, %v3616
    %v3657 = vsel %vm3509, %v3617, 0.0
    %v3658 = vadd.f32 %v3656, %v3657
    %3659 = vadd.xlane.f32.xlu0 %v3658
    %v3660 = vpop.xlane.xlu0 %3659
    %v3661 = vadd.f32 %v3618, %v3619
    %v3662 = vadd.f32 %v3661, %v3620
    %v3663 = vadd.f32 %v3662, %v3621
    %v3664 = vadd.f32 %v3663, %v3622
    %v3665 = vadd.f32 %v3664, %v3623
    %v3666 = vsel %vm3509, %v3624, 0.0
    %v3667 = vadd.f32 %v3665, %v3666
    %3668 = vadd.xlane.f32.xlu0 %v3667
    %v3669 = vpop.xlane.xlu0 %3668
    %v3670 = vmul.f32 %v3633, 0.0012755102
    %v3671 = vmul.f32 %v3642, 0.0012755102
    %v3672 = vmul.f32 %v3651, 0.0012755102
    %v3673 = vmul.f32 %v3660, 0.0012755102
    %v3674 = vmul.f32 %v3669, 0.0012755102
    %v3675 = vld [vmem:[%s5] sm:$0xff]
    %v3676 = vld [vmem:[%s5 + $0x8] sm:$0xff]
    %v3677 = vld [vmem:[%s5 + $0x10] sm:$0xff]
    %v3678 = vld [vmem:[%s5 + $0x18] sm:$0xff]
    %v3679 = vld [vmem:[%s5 + $0x20] sm:$0xff]
    %v3680 = vadd.f32 %v3670, 0.001
    %v3681 = vadd.f32 %v3671, 0.001
    %v3682 = vadd.f32 %v3672, 0.001
    %v3683 = vadd.f32 %v3673, 0.001
    %v3684 = vadd.f32 %v3674, 0.001
    %v3685 = vrsqrt.pop %v3680
    %v3686 = vrsqrt.pop %v3681
    %v3687 = vrsqrt.pop %v3682
    %v3688 = vrsqrt.pop %v3683
    %v3689 = vrsqrt.pop %v3684
    %v3690 = vmul.f32 %v3675, %v3685
    %v3691 = vmul.f32 %v3676, %v3686
    %v3692 = vmul.f32 %v3677, %v3687
    %v3693 = vmul.f32 %v3678, %v3688
    %v3694 = vmul.f32 %v3679, %v3689
    %3696 = vset.pattern.permute.xlu0 0
    %3697 = vperm.xlu0 %3696, %v3690
    %v3698 = vpop.permute.xlu0 %3697
    %3701 = vset.pattern.permute.xlu0 0
    %3702 = vperm.xlu0 %3701, %v3691
    %v3703 = vpop.permute.xlu0 %3702
    %3706 = vset.pattern.permute.xlu0 0
    %3707 = vperm.xlu0 %3706, %v3692
    %v3708 = vpop.permute.xlu0 %3707
    %3711 = vset.pattern.permute.xlu0 0
    %3712 = vperm.xlu0 %3711, %v3693
    %v3713 = vpop.permute.xlu0 %3712
    %3716 = vset.pattern.permute.xlu0 0
    %3717 = vperm.xlu0 %3716, %v3694
    %v3718 = vpop.permute.xlu0 %3717
    %v3720 = vmul.f32 %v3555, %v3698
    %v3721 = vmul.f32 %v3556, %v3698
    %v3722 = vmul.f32 %v3557, %v3698
    %v3723 = vmul.f32 %v3558, %v3698
    %v3724 = vmul.f32 %v3559, %v3698
    %v3725 = vmul.f32 %v3560, %v3698
    %v3726 = vmul.f32 %v3561, %v3698
    %v3727 = vmul.f32 %v3562, %v3703
    %v3728 = vmul.f32 %v3563, %v3703
    %v3729 = vmul.f32 %v3564, %v3703
    %v3730 = vmul.f32 %v3565, %v3703
    %v3731 = vmul.f32 %v3566, %v3703
    %v3732 = vmul.f32 %v3567, %v3703
    %v3733 = vmul.f32 %v3568, %v3703
    %v3734 = vmul.f32 %v3569, %v3708
    %v3735 = vmul.f32 %v3570, %v3708
    %v3736 = vmul.f32 %v3571, %v3708
    %v3737 = vmul.f32 %v3572, %v3708
    %v3738 = vmul.f32 %v3573, %v3708
    %v3739 = vmul.f32 %v3574, %v3708
    %v3740 = vmul.f32 %v3575, %v3708
    %v3741 = vmul.f32 %v3576, %v3713
    %v3742 = vmul.f32 %v3577, %v3713
    %v3743 = vmul.f32 %v3578, %v3713
    %v3744 = vmul.f32 %v3579, %v3713
    %v3745 = vmul.f32 %v3580, %v3713
    %v3746 = vmul.f32 %v3581, %v3713
    %v3747 = vmul.f32 %v3582, %v3713
    %v3748 = vmul.f32 %v3583, %v3718
    %v3749 = vmul.f32 %v3584, %v3718
    %v3750 = vmul.f32 %v3585, %v3718
    %v3751 = vmul.f32 %v3586, %v3718
    %v3752 = vmul.f32 %v3587, %v3718
    %v3753 = vmul.f32 %v3588, %v3718
    %v3754 = vmul.f32 %v3589, %v3718
    %v3755 = vld [vmem:[%s6] sm:$0xff]
    %v3756 = vld [vmem:[%s6 + $0x8] sm:$0xff]
    %v3757 = vld [vmem:[%s6 + $0x10] sm:$0xff]
    %v3758 = vld [vmem:[%s6 + $0x18] sm:$0xff]
    %v3759 = vld [vmem:[%s6 + $0x20] sm:$0xff]
    %3761 = vset.pattern.permute.xlu0 0
    %3762 = vperm.xlu0 %3761, %v3755
    %v3763 = vpop.permute.xlu0 %3762
    %3766 = vset.pattern.permute.xlu0 0
    %3767 = vperm.xlu0 %3766, %v3756
    %v3768 = vpop.permute.xlu0 %3767
    %3771 = vset.pattern.permute.xlu0 0
    %3772 = vperm.xlu0 %3771, %v3757
    %v3773 = vpop.permute.xlu0 %3772
    %3776 = vset.pattern.permute.xlu0 0
    %3777 = vperm.xlu0 %3776, %v3758
    %v3778 = vpop.permute.xlu0 %3777
    %3781 = vset.pattern.permute.xlu0 0
    %3782 = vperm.xlu0 %3781, %v3759
    %v3783 = vpop.permute.xlu0 %3782
    %v3785 = vadd.f32 %v3720, %v3763
    %v3786 = vadd.f32 %v3721, %v3763
    %v3787 = vadd.f32 %v3722, %v3763
    %v3788 = vadd.f32 %v3723, %v3763
    %v3789 = vadd.f32 %v3724, %v3763
    %v3790 = vadd.f32 %v3725, %v3763
    %v3791 = vadd.f32 %v3726, %v3763
    %v3792 = vadd.f32 %v3727, %v3768
    %v3793 = vadd.f32 %v3728, %v3768
    %v3794 = vadd.f32 %v3729, %v3768
    %v3795 = vadd.f32 %v3730, %v3768
    %v3796 = vadd.f32 %v3731, %v3768
    %v3797 = vadd.f32 %v3732, %v3768
    %v3798 = vadd.f32 %v3733, %v3768
    %v3799 = vadd.f32 %v3734, %v3773
    %v3800 = vadd.f32 %v3735, %v3773
    %v3801 = vadd.f32 %v3736, %v3773
    %v3802 = vadd.f32 %v3737, %v3773
    %v3803 = vadd.f32 %v3738, %v3773
    %v3804 = vadd.f32 %v3739, %v3773
    %v3805 = vadd.f32 %v3740, %v3773
    %v3806 = vadd.f32 %v3741, %v3778
    %v3807 = vadd.f32 %v3742, %v3778
    %v3808 = vadd.f32 %v3743, %v3778
    %v3809 = vadd.f32 %v3744, %v3778
    %v3810 = vadd.f32 %v3745, %v3778
    %v3811 = vadd.f32 %v3746, %v3778
    %v3812 = vadd.f32 %v3747, %v3778
    %v3813 = vadd.f32 %v3748, %v3783
    %v3814 = vadd.f32 %v3749, %v3783
    %v3815 = vadd.f32 %v3750, %v3783
    %v3816 = vadd.f32 %v3751, %v3783
    %v3817 = vadd.f32 %v3752, %v3783
    %v3818 = vadd.f32 %v3753, %v3783
    %v3819 = vadd.f32 %v3754, %v3783
    %3820 = vst [vmem:[#allocation5] sm:$0xff] %v3785
    %3821 = vst [vmem:[#allocation5 + $0x8] sm:$0xff] %v3786
    %3822 = vst [vmem:[#allocation5 + $0x10] sm:$0xff] %v3787
    %3823 = vst [vmem:[#allocation5 + $0x18] sm:$0xff] %v3788
    %3824 = vst [vmem:[#allocation5 + $0x20] sm:$0xff] %v3789
    %3825 = vst [vmem:[#allocation5 + $0x28] sm:$0xff] %v3790
    %3826 = vst.msk [vmem:[#allocation5 + $0x30] sm:$0xff] %vm3509, %v3791
    %3827 = vst [vmem:[#allocation5 + $0x38] sm:$0xff] %v3792
    %3828 = vst [vmem:[#allocation5 + $0x40] sm:$0xff] %v3793
    %3829 = vst [vmem:[#allocation5 + $0x48] sm:$0xff] %v3794
    %3830 = vst [vmem:[#allocation5 + $0x50] sm:$0xff] %v3795
    %3831 = vst [vmem:[#allocation5 + $0x58] sm:$0xff] %v3796
    %3832 = vst [vmem:[#allocation5 + $0x60] sm:$0xff] %v3797
    %3833 = vst.msk [vmem:[#allocation5 + $0x68] sm:$0xff] %vm3509, %v3798
    %3834 = vst [vmem:[#allocation5 + $0x70] sm:$0xff] %v3799
    %3835 = vst [vmem:[#allocation5 + $0x78] sm:$0xff] %v3800
    %3836 = vst [vmem:[#allocation5 + $0x80] sm:$0xff] %v3801
    %3837 = vst [vmem:[#allocation5 + $0x88] sm:$0xff] %v3802
    %3838 = vst [vmem:[#allocation5 + $0x90] sm:$0xff] %v3803
    %3839 = vst [vmem:[#allocation5 + $0x98] sm:$0xff] %v3804
    %3840 = vst.msk [vmem:[#allocation5 + $0xa0] sm:$0xff] %vm3509, %v3805
    %3841 = vst [vmem:[#allocation5 + $0xa8] sm:$0xff] %v3806
    %3842 = vst [vmem:[#allocation5 + $0xb0] sm:$0xff] %v3807
    %3843 = vst [vmem:[#allocation5 + $0xb8] sm:$0xff] %v3808
    %3844 = vst [vmem:[#allocation5 + $0xc0] sm:$0xff] %v3809
    %3845 = vst [vmem:[#allocation5 + $0xc8] sm:$0xff] %v3810
    %3846 = vst [vmem:[#allocation5 + $0xd0] sm:$0xff] %v3811
    %3847 = vst.msk [vmem:[#allocation5 + $0xd8] sm:$0xff] %vm3509, %v3812
    %3848 = vst [vmem:[#allocation5 + $0xe0] sm:$0xff] %v3813
    %3849 = vst [vmem:[#allocation5 + $0xe8] sm:$0xff] %v3814
    %3850 = vst [vmem:[#allocation5 + $0xf0] sm:$0xff] %v3815
    %3851 = vst [vmem:[#allocation5 + $0xf8] sm:$0xff] %v3816
    %3852 = vst [vmem:[#allocation5 + $0x100] sm:$0xff] %v3817
    %3853 = vst [vmem:[#allocation5 + $0x108] sm:$0xff] %v3818
    %3854 = vst.msk [vmem:[#allocation5 + $0x110] sm:$0xff] %vm3509, %v3819
    // Predicated region
    $region34: #{tpu_custom_call.1} parent=1 // pred_check
      _
    $region35: #{tpu_custom_call.1} parent=1 // pred_check_branch
      %3856 = sbr.rel (0) target = $region37
    $region36: #{tpu_custom_call.1} parent=1 // pred_region
      %s3858 = ssub.s32 4480, 4480
      %3859 = vsyncadd [#allocation4], %s3858
      %s3860 = sshll.u32 [#allocation5], 4
      %s3861 = int_to_ptr.vmem [resolvable:$true] %s3860
      %3866 = dma.vmem_to_hbm [thread:$0]  %s3861, 4480, %s7, [#allocation4], 896, 896, 56
    $region37: #{tpu_custom_call.1} parent=1 // pred_fallthru
      _
    // Predicated region
    $region38: #{tpu_custom_call.1} parent=1 // pred_check
      _
    $region39: #{tpu_custom_call.1} parent=1 // pred_check_branch
      %3868 = sbr.rel (0) target = $region41
    $region40: #{tpu_custom_call.1} parent=1 // pred_region
      %3869 = dma.done [#allocation4], 4480
    $region41: #{tpu_custom_call.1} parent=1 // pred_fallthru
      _
    %3870 = vsyncpa [#allocation3], 1
    %3871 = vsyncpa [#allocation4], 1

</llo_original>
